<compile_context>
chip_gen: v7x
topology: tpu7x:2x2x1
jax: 0.10.0
libtpu: 0.0.40
codegen_flags: <defaults>
</compile_context>

<pallas_src>
import functools

import jax
import jax.numpy as jnp
from jax.experimental import pallas as pl
from jax.experimental.pallas import tpu as pltpu

MM_DTYPE = jnp.bfloat16   # MXU-native matmul operands on every TPU generation


def ode_block_kernel(x_ref, w1_ref, b1_ref, w2_ref, b2_ref, mask_ref, o_ref,
                     *, n_steps, img_w):
    """One batch element per grid step.  State layout (C_pad, H*W) f32."""
    _, cp, hw = x_ref.shape
    mm_dtype = w1_ref.dtype

    # Hoisted once per program (JAX does not CSE broadcasts/slices in loops).
    w1 = w1_ref[...]                                  # (9, cp, cp) [tap,co,ci]
    w2 = w2_ref[...]
    masks = mask_ref[...]                             # (9, hw) f32
    w1_taps = [w1[t] for t in range(9)]
    w2_taps = [w2[t] for t in range(9)]
    tap_masks = [masks[t:t + 1, :] for t in range(9)]
    b1_full = jnp.broadcast_to(b1_ref[...], (cp, hw))  # accumulator inits
    b2_full = jnp.broadcast_to(b2_ref[...], (cp, hw))

    # Flat-index shift of tap (kh, kw): output p reads input p + d.
    shifts = [(kh - 1) * img_w + (kw - 1) for kh in range(3) for kw in range(3)]

    def conv3x3(u, w_taps, bias_full):
        # u: (cp, hw) f32.  Returns bias + sum_tap W_tap @ shift_tap(u), f32.
        acc = bias_full
        for t, d in enumerate(shifts):
            if d == 0:                      # centre tap: no shift, no mask
                v = u
            else:
                # roll (jnp.roll semantics) brings x[p+d] to lane p; wrapped /
                # out-of-image lanes are zeroed by the per-tap validity mask,
                # which realises the conv's implicit zero padding.
                v = pltpu.roll(u, shift=(-d) % hw, axis=1) * tap_masks[t]
            acc = acc + jnp.dot(w_taps[t], v.astype(mm_dtype),
                                preferred_element_type=jnp.float32)
        return acc

    def euler_step(_, x):
        h1 = conv3x3(jnp.maximum(x, 0.0), w1_taps, b1_full)
        # dt is pre-folded into w2/b2 in the wrapper, so this is x + dt*f(x).
        return x + conv3x3(jnp.maximum(h1, 0.0), w2_taps, b2_full)

    o_ref[0] = jax.lax.fori_loop(0, n_steps, euler_step, x_ref[0], unroll=True)


def ode_block_forward(x_nchw, w1_hwio, b1, w2_hwio, b2,
                      *, t0=0.0, t1=1.0, h=0.25):
    """ODEBlock.forward: x (N, C, H, W) -> out (N, C, H, W)."""
    n_steps = max(1, int(round((t1 - t0) / h)))
    # TODO(synk): if (t1-t0)/h is not an integer dt is adjusted so that
    # n_steps*dt == t1-t0, which diverges from strict fixed-h semantics.
    dt = float(t1 - t0) / n_steps

    N, C, H, W = x_nchw.shape
    HW = H * W
    C_pad = max(8, -(-C // 8) * 8)            # sublane-aligned channel count

    # State layout (N, C_pad, H*W): NCHW flattens into it directly and the
    # lane axis (H*W) is dense.  Padded channels are exactly zero and stay
    # zero through the ODE dynamics (their weights/biases are zero).
    x = jnp.zeros((N, C_pad, HW), jnp.float32)
    x = x.at[:, :C, :].set(x_nchw.reshape(N, C, HW).astype(jnp.float32))

    def prep_w(w_hwio, scale):
        wt = jnp.transpose(w_hwio.reshape(9, C, C), (0, 2, 1))   # [tap,co,ci]
        wp = jnp.zeros((9, C_pad, C_pad), jnp.float32).at[:, :C, :C].set(wt)
        return (scale * wp).astype(MM_DTYPE)

    def prep_b(b, scale):
        bp = jnp.zeros((C_pad,), jnp.float32)
        bp = bp.at[:C].set(jnp.ravel(b).astype(jnp.float32))
        return (scale * bp).reshape(C_pad, 1)                    # f32

    # dt folded into the second conv (exact: the update is linear in w2/b2).
    w1_t, b1_p = prep_w(w1_hwio, 1.0), prep_b(b1, 1.0)
    w2_t, b2_p = prep_w(w2_hwio, dt), prep_b(b2, dt)

    # Per-tap validity masks of the 'same' zero padding over p = h*W + w.
    hh = jnp.arange(H, dtype=jnp.int32).reshape(H, 1)
    ww = jnp.arange(W, dtype=jnp.int32).reshape(1, W)
    rows = []
    for kh in range(3):
        for kw in range(3):
            ok = ((hh + kh - 1 >= 0) & (hh + kh - 1 < H) &
                  (ww + kw - 1 >= 0) & (ww + kw - 1 < W))
            rows.append(ok.reshape(HW))
    masks = jnp.stack(rows).astype(jnp.float32)                  # (9, HW)

    kernel = functools.partial(ode_block_kernel, n_steps=n_steps, img_w=W)

    itemsize = jnp.dtype(MM_DTYPE).itemsize
    blk_bytes = C_pad * HW * 4
    const_bytes = 2 * 9 * C_pad * C_pad * itemsize + 2 * C_pad * 4 + 9 * HW * 4
    flops = int(n_steps * 2 * 9 * 2 * N * HW * C_pad * C_pad)
    cost = pl.CostEstimate(flops=flops, transcendentals=0,
                           bytes_accessed=int(2 * N * blk_bytes + const_bytes))
    # VMEM budget from the actual buffers (double-buffered in/out blocks plus
    # the replicated constants), clamped to v7x's 64 MiB physical VMEM.
    vmem_limit = int(min(max(4 * (2 * 2 * blk_bytes + 2 * const_bytes), 4 << 20),
                         64 << 20))

    grid_spec = pltpu.PrefetchScalarGridSpec(
        num_scalar_prefetch=0,
        grid=(N,),
        in_specs=[
            pl.BlockSpec((1, C_pad, HW), lambda b: (b, 0, 0)),       # state
            pl.BlockSpec((9, C_pad, C_pad), lambda b: (0, 0, 0)),    # w1
            pl.BlockSpec((C_pad, 1), lambda b: (0, 0)),              # b1
            pl.BlockSpec((9, C_pad, C_pad), lambda b: (0, 0, 0)),    # w2*dt
            pl.BlockSpec((C_pad, 1), lambda b: (0, 0)),              # b2*dt
            pl.BlockSpec((9, HW), lambda b: (0, 0)),                 # masks
        ],
        out_specs=pl.BlockSpec((1, C_pad, HW), lambda b: (b, 0, 0)),
    )

    out = pl.pallas_call(
        kernel,
        out_shape=jax.ShapeDtypeStruct((N, C_pad, HW), jnp.float32),
        grid_spec=grid_spec,
        compiler_params=pltpu.CompilerParams(
            dimension_semantics=("parallel",),
            vmem_limit_bytes=vmem_limit),
        cost_estimate=cost,
    )(x, w1_t, b1_p, w2_t, b2_p, masks)

    return out[:, :C, :].reshape(N, C, H, W)


def _reference_forward(x_nchw, w1, b1, w2, b2, *, t0=0.0, t1=1.0, h=0.25):
    """Pure-JAX reference (NHWC lax convs, f32) for correctness checking."""
    n_steps = max(1, int(round((t1 - t0) / h)))
    dt = float(t1 - t0) / n_steps
    v = jnp.transpose(x_nchw, (0, 2, 3, 1)).astype(jnp.float32)

    def conv(u, w, b):
        y = jax.lax.conv_general_dilated(
            u, w, window_strides=(1, 1), padding="SAME",
            dimension_numbers=("NHWC", "HWIO", "NHWC"))
        return y + b.reshape(1, 1, 1, -1)

    def f(u):
        u = jnp.maximum(u, 0.0)
        u = conv(u, w1, b1)
        u = jnp.maximum(u, 0.0)
        return conv(u, w2, b2)

    for _ in range(n_steps):
        v = v + dt * f(v)
    return jnp.transpose(v, (0, 3, 1, 2))


if __name__ == "__main__":
    # Small deterministic shapes implied by the conv-ODE forward: NCHW input.
    N, C, H, W = 2, 4, 16, 16
    key = jax.random.PRNGKey(0)
    kx, k1, k2, kb1, kb2 = jax.random.split(key, 5)

    x = jax.random.normal(kx, (N, C, H, W), dtype=jnp.float32)
    w1 = 0.1 * jax.random.normal(k1, (3, 3, C, C), dtype=jnp.float32)
    w2 = 0.1 * jax.random.normal(k2, (3, 3, C, C), dtype=jnp.float32)
    b1 = 0.1 * jax.random.normal(kb1, (C,), dtype=jnp.float32)
    b2 = 0.1 * jax.random.normal(kb2, (C,), dtype=jnp.float32)

    out = jax.block_until_ready(ode_block_forward(x, w1, b1, w2, b2))
    ref = _reference_forward(x, w1, b1, w2, b2)

    assert out.shape == x.shape and out.dtype == jnp.float32
    # bf16 MXU operands (f32 state/accumulation) vs an all-f32 reference.
    assert jnp.allclose(out, ref, atol=5e-2, rtol=5e-2), "mismatch vs reference"

    print("KERNEL_OK")
</pallas_src>

<mosaic_0001>
module attributes {stable_mosaic.version = 11 : i64} {
  func.func @ode_block_kernel(%arg0: i32, %arg1: memref<1x8x256xf32, #tpu.memory_space<vmem>>, %arg2: memref<9x8x8xbf16, #tpu.memory_space<vmem>>, %arg3: memref<8x1xf32, #tpu.memory_space<vmem>>, %arg4: memref<9x8x8xbf16, #tpu.memory_space<vmem>>, %arg5: memref<8x1xf32, #tpu.memory_space<vmem>>, %arg6: memref<9x256xf32, #tpu.memory_space<vmem>>, %arg7: memref<1x8x256xf32, #tpu.memory_space<vmem>>) attributes {dimension_semantics = [#tpu.dimension_semantics<parallel>], iteration_bounds = array<i64: 2>, scalar_prefetch = 0 : i64, scratch_operands = 0 : i64, tpu.core_type = #tpu.core_type<tc>, window_params = [{transform_indices = @transform_0, window_bounds = array<i64: 1, 8, 256>}, {pipeline_mode = #tpu.pipeline_mode<synchronous>, transform_indices = @transform_1, window_bounds = array<i64: 9, 8, 8>}, {pipeline_mode = #tpu.pipeline_mode<synchronous>, transform_indices = @transform_2, window_bounds = array<i64: 8, 1>}, {pipeline_mode = #tpu.pipeline_mode<synchronous>, transform_indices = @transform_3, window_bounds = array<i64: 9, 8, 8>}, {pipeline_mode = #tpu.pipeline_mode<synchronous>, transform_indices = @transform_4, window_bounds = array<i64: 8, 1>}, {pipeline_mode = #tpu.pipeline_mode<synchronous>, transform_indices = @transform_5, window_bounds = array<i64: 9, 256>}, {transform_indices = @transform_6, window_bounds = array<i64: 1, 8, 256>}]} {
    %c0 = arith.constant 0 : index
    %c0_0 = arith.constant 0 : index
    %c0_1 = arith.constant 0 : index
    %0 = vector.load %arg2[%c0, %c0_0, %c0_1] : memref<9x8x8xbf16, #tpu.memory_space<vmem>>, vector<9x8x8xbf16>
    %c0_2 = arith.constant 0 : index
    %c0_3 = arith.constant 0 : index
    %c0_4 = arith.constant 0 : index
    %1 = vector.load %arg4[%c0_2, %c0_3, %c0_4] : memref<9x8x8xbf16, #tpu.memory_space<vmem>>, vector<9x8x8xbf16>
    %c0_5 = arith.constant 0 : index
    %c0_6 = arith.constant 0 : index
    %2 = vector.load %arg6[%c0_5, %c0_6] : memref<9x256xf32, #tpu.memory_space<vmem>>, vector<9x256xf32>
    %3 = vector.extract_strided_slice %0 {offsets = [0, 0, 0], sizes = [1, 8, 8], strides = [1, 1, 1]} : vector<9x8x8xbf16> to vector<1x8x8xbf16>
    %4 = vector.shape_cast %3 : vector<1x8x8xbf16> to vector<8x8xbf16>
    %5 = vector.extract_strided_slice %0 {offsets = [1, 0, 0], sizes = [1, 8, 8], strides = [1, 1, 1]} : vector<9x8x8xbf16> to vector<1x8x8xbf16>
    %6 = vector.shape_cast %5 : vector<1x8x8xbf16> to vector<8x8xbf16>
    %7 = vector.extract_strided_slice %0 {offsets = [2, 0, 0], sizes = [1, 8, 8], strides = [1, 1, 1]} : vector<9x8x8xbf16> to vector<1x8x8xbf16>
    %8 = vector.shape_cast %7 : vector<1x8x8xbf16> to vector<8x8xbf16>
    %9 = vector.extract_strided_slice %0 {offsets = [3, 0, 0], sizes = [1, 8, 8], strides = [1, 1, 1]} : vector<9x8x8xbf16> to vector<1x8x8xbf16>
    %10 = vector.shape_cast %9 : vector<1x8x8xbf16> to vector<8x8xbf16>
    %11 = vector.extract_strided_slice %0 {offsets = [4, 0, 0], sizes = [1, 8, 8], strides = [1, 1, 1]} : vector<9x8x8xbf16> to vector<1x8x8xbf16>
    %12 = vector.shape_cast %11 : vector<1x8x8xbf16> to vector<8x8xbf16>
    %13 = vector.extract_strided_slice %0 {offsets = [5, 0, 0], sizes = [1, 8, 8], strides = [1, 1, 1]} : vector<9x8x8xbf16> to vector<1x8x8xbf16>
    %14 = vector.shape_cast %13 : vector<1x8x8xbf16> to vector<8x8xbf16>
    %15 = vector.extract_strided_slice %0 {offsets = [6, 0, 0], sizes = [1, 8, 8], strides = [1, 1, 1]} : vector<9x8x8xbf16> to vector<1x8x8xbf16>
    %16 = vector.shape_cast %15 : vector<1x8x8xbf16> to vector<8x8xbf16>
    %17 = vector.extract_strided_slice %0 {offsets = [7, 0, 0], sizes = [1, 8, 8], strides = [1, 1, 1]} : vector<9x8x8xbf16> to vector<1x8x8xbf16>
    %18 = vector.shape_cast %17 : vector<1x8x8xbf16> to vector<8x8xbf16>
    %19 = vector.extract_strided_slice %0 {offsets = [8, 0, 0], sizes = [1, 8, 8], strides = [1, 1, 1]} : vector<9x8x8xbf16> to vector<1x8x8xbf16>
    %20 = vector.shape_cast %19 : vector<1x8x8xbf16> to vector<8x8xbf16>
    %21 = vector.extract_strided_slice %1 {offsets = [0, 0, 0], sizes = [1, 8, 8], strides = [1, 1, 1]} : vector<9x8x8xbf16> to vector<1x8x8xbf16>
    %22 = vector.shape_cast %21 : vector<1x8x8xbf16> to vector<8x8xbf16>
    %23 = vector.extract_strided_slice %1 {offsets = [1, 0, 0], sizes = [1, 8, 8], strides = [1, 1, 1]} : vector<9x8x8xbf16> to vector<1x8x8xbf16>
    %24 = vector.shape_cast %23 : vector<1x8x8xbf16> to vector<8x8xbf16>
    %25 = vector.extract_strided_slice %1 {offsets = [2, 0, 0], sizes = [1, 8, 8], strides = [1, 1, 1]} : vector<9x8x8xbf16> to vector<1x8x8xbf16>
    %26 = vector.shape_cast %25 : vector<1x8x8xbf16> to vector<8x8xbf16>
    %27 = vector.extract_strided_slice %1 {offsets = [3, 0, 0], sizes = [1, 8, 8], strides = [1, 1, 1]} : vector<9x8x8xbf16> to vector<1x8x8xbf16>
    %28 = vector.shape_cast %27 : vector<1x8x8xbf16> to vector<8x8xbf16>
    %29 = vector.extract_strided_slice %1 {offsets = [4, 0, 0], sizes = [1, 8, 8], strides = [1, 1, 1]} : vector<9x8x8xbf16> to vector<1x8x8xbf16>
    %30 = vector.shape_cast %29 : vector<1x8x8xbf16> to vector<8x8xbf16>
    %31 = vector.extract_strided_slice %1 {offsets = [5, 0, 0], sizes = [1, 8, 8], strides = [1, 1, 1]} : vector<9x8x8xbf16> to vector<1x8x8xbf16>
    %32 = vector.shape_cast %31 : vector<1x8x8xbf16> to vector<8x8xbf16>
    %33 = vector.extract_strided_slice %1 {offsets = [6, 0, 0], sizes = [1, 8, 8], strides = [1, 1, 1]} : vector<9x8x8xbf16> to vector<1x8x8xbf16>
    %34 = vector.shape_cast %33 : vector<1x8x8xbf16> to vector<8x8xbf16>
    %35 = vector.extract_strided_slice %1 {offsets = [7, 0, 0], sizes = [1, 8, 8], strides = [1, 1, 1]} : vector<9x8x8xbf16> to vector<1x8x8xbf16>
    %36 = vector.shape_cast %35 : vector<1x8x8xbf16> to vector<8x8xbf16>
    %37 = vector.extract_strided_slice %1 {offsets = [8, 0, 0], sizes = [1, 8, 8], strides = [1, 1, 1]} : vector<9x8x8xbf16> to vector<1x8x8xbf16>
    %38 = vector.shape_cast %37 : vector<1x8x8xbf16> to vector<8x8xbf16>
    %39 = vector.extract_strided_slice %2 {offsets = [0, 0], sizes = [1, 256], strides = [1, 1]} : vector<9x256xf32> to vector<1x256xf32>
    %40 = vector.extract_strided_slice %2 {offsets = [1, 0], sizes = [1, 256], strides = [1, 1]} : vector<9x256xf32> to vector<1x256xf32>
    %41 = vector.extract_strided_slice %2 {offsets = [2, 0], sizes = [1, 256], strides = [1, 1]} : vector<9x256xf32> to vector<1x256xf32>
    %42 = vector.extract_strided_slice %2 {offsets = [3, 0], sizes = [1, 256], strides = [1, 1]} : vector<9x256xf32> to vector<1x256xf32>
    %43 = vector.extract_strided_slice %2 {offsets = [5, 0], sizes = [1, 256], strides = [1, 1]} : vector<9x256xf32> to vector<1x256xf32>
    %44 = vector.extract_strided_slice %2 {offsets = [6, 0], sizes = [1, 256], strides = [1, 1]} : vector<9x256xf32> to vector<1x256xf32>
    %45 = vector.extract_strided_slice %2 {offsets = [7, 0], sizes = [1, 256], strides = [1, 1]} : vector<9x256xf32> to vector<1x256xf32>
    %46 = vector.extract_strided_slice %2 {offsets = [8, 0], sizes = [1, 256], strides = [1, 1]} : vector<9x256xf32> to vector<1x256xf32>
    %c0_7 = arith.constant 0 : index
    %c0_8 = arith.constant 0 : index
    %47 = vector.load %arg3[%c0_7, %c0_8] : memref<8x1xf32, #tpu.memory_space<vmem>>, vector<8x1xf32>
    %48 = vector.shape_cast %47 : vector<8x1xf32> to vector<8x1xf32>
    %49 = vector.broadcast %48 : vector<8x1xf32> to vector<8x256xf32>
    %c0_9 = arith.constant 0 : index
    %c0_10 = arith.constant 0 : index
    %50 = vector.load %arg5[%c0_9, %c0_10] : memref<8x1xf32, #tpu.memory_space<vmem>>, vector<8x1xf32>
    %51 = vector.shape_cast %50 : vector<8x1xf32> to vector<8x1xf32>
    %52 = vector.broadcast %51 : vector<8x1xf32> to vector<8x256xf32>
    %c0_11 = arith.constant 0 : index
    %c0_12 = arith.constant 0 : index
    %c0_13 = arith.constant 0 : index
    %53 = vector.load %arg1[%c0_11, %c0_12, %c0_13] : memref<1x8x256xf32, #tpu.memory_space<vmem>>, vector<1x8x256xf32>
    %54 = vector.shape_cast %53 : vector<1x8x256xf32> to vector<8x256xf32>
    %c0_i32 = arith.constant 0 : i32
    %cst = arith.constant 0.000000e+00 : f32
    %55 = vector.broadcast %cst : f32 to vector<8x256xf32>
    %56 = arith.maximumf %54, %55 : vector<8x256xf32>
    %c17_i32 = arith.constant 17 : i32
    %57 = tpu.dynamic_rotate %56 by %c17_i32 dim 1 : vector<8x256xf32>, i32 -> vector<8x256xf32>
    %58 = vector.broadcast %39 : vector<1x256xf32> to vector<8x256xf32>
    %59 = arith.mulf %57, %58 : vector<8x256xf32>
    %60 = arith.truncf %59 : vector<8x256xf32> to vector<8x256xbf16>
    %cst_14 = arith.constant dense<0.000000e+00> : vector<8x256xf32>
    %61 = tpu.matmul %4, %60, %cst_14 {dimension_numbers = #tpu.dot_dimension_numbers<[1], [0], [0], [1], [0, 0, 1, 1], [], []>} : vector<8x8xbf16>, vector<8x256xbf16>, vector<8x256xf32> -> vector<8x256xf32>
    %62 = arith.addf %49, %61 : vector<8x256xf32>
    %c16_i32 = arith.constant 16 : i32
    %63 = tpu.dynamic_rotate %56 by %c16_i32 dim 1 : vector<8x256xf32>, i32 -> vector<8x256xf32>
    %64 = vector.broadcast %40 : vector<1x256xf32> to vector<8x256xf32>
    %65 = arith.mulf %63, %64 : vector<8x256xf32>
    %66 = arith.truncf %65 : vector<8x256xf32> to vector<8x256xbf16>
    %cst_15 = arith.constant dense<0.000000e+00> : vector<8x256xf32>
    %67 = tpu.matmul %6, %66, %cst_15 {dimension_numbers = #tpu.dot_dimension_numbers<[1], [0], [0], [1], [0, 0, 1, 1], [], []>} : vector<8x8xbf16>, vector<8x256xbf16>, vector<8x256xf32> -> vector<8x256xf32>
    %68 = arith.addf %62, %67 : vector<8x256xf32>
    %c15_i32 = arith.constant 15 : i32
    %69 = tpu.dynamic_rotate %56 by %c15_i32 dim 1 : vector<8x256xf32>, i32 -> vector<8x256xf32>
    %70 = vector.broadcast %41 : vector<1x256xf32> to vector<8x256xf32>
    %71 = arith.mulf %69, %70 : vector<8x256xf32>
    %72 = arith.truncf %71 : vector<8x256xf32> to vector<8x256xbf16>
    %cst_16 = arith.constant dense<0.000000e+00> : vector<8x256xf32>
    %73 = tpu.matmul %8, %72, %cst_16 {dimension_numbers = #tpu.dot_dimension_numbers<[1], [0], [0], [1], [0, 0, 1, 1], [], []>} : vector<8x8xbf16>, vector<8x256xbf16>, vector<8x256xf32> -> vector<8x256xf32>
    %74 = arith.addf %68, %73 : vector<8x256xf32>
    %c1_i32 = arith.constant 1 : i32
    %75 = tpu.dynamic_rotate %56 by %c1_i32 dim 1 : vector<8x256xf32>, i32 -> vector<8x256xf32>
    %76 = vector.broadcast %42 : vector<1x256xf32> to vector<8x256xf32>
    %77 = arith.mulf %75, %76 : vector<8x256xf32>
    %78 = arith.truncf %77 : vector<8x256xf32> to vector<8x256xbf16>
    %cst_17 = arith.constant dense<0.000000e+00> : vector<8x256xf32>
    %79 = tpu.matmul %10, %78, %cst_17 {dimension_numbers = #tpu.dot_dimension_numbers<[1], [0], [0], [1], [0, 0, 1, 1], [], []>} : vector<8x8xbf16>, vector<8x256xbf16>, vector<8x256xf32> -> vector<8x256xf32>
    %80 = arith.addf %74, %79 : vector<8x256xf32>
    %81 = arith.truncf %56 : vector<8x256xf32> to vector<8x256xbf16>
    %cst_18 = arith.constant dense<0.000000e+00> : vector<8x256xf32>
    %82 = tpu.matmul %12, %81, %cst_18 {dimension_numbers = #tpu.dot_dimension_numbers<[1], [0], [0], [1], [0, 0, 1, 1], [], []>} : vector<8x8xbf16>, vector<8x256xbf16>, vector<8x256xf32> -> vector<8x256xf32>
    %83 = arith.addf %80, %82 : vector<8x256xf32>
    %c255_i32 = arith.constant 255 : i32
    %84 = tpu.dynamic_rotate %56 by %c255_i32 dim 1 : vector<8x256xf32>, i32 -> vector<8x256xf32>
    %85 = vector.broadcast %43 : vector<1x256xf32> to vector<8x256xf32>
    %86 = arith.mulf %84, %85 : vector<8x256xf32>
    %87 = arith.truncf %86 : vector<8x256xf32> to vector<8x256xbf16>
    %cst_19 = arith.constant dense<0.000000e+00> : vector<8x256xf32>
    %88 = tpu.matmul %14, %87, %cst_19 {dimension_numbers = #tpu.dot_dimension_numbers<[1], [0], [0], [1], [0, 0, 1, 1], [], []>} : vector<8x8xbf16>, vector<8x256xbf16>, vector<8x256xf32> -> vector<8x256xf32>
    %89 = arith.addf %83, %88 : vector<8x256xf32>
    %c241_i32 = arith.constant 241 : i32
    %90 = tpu.dynamic_rotate %56 by %c241_i32 dim 1 : vector<8x256xf32>, i32 -> vector<8x256xf32>
    %91 = vector.broadcast %44 : vector<1x256xf32> to vector<8x256xf32>
    %92 = arith.mulf %90, %91 : vector<8x256xf32>
    %93 = arith.truncf %92 : vector<8x256xf32> to vector<8x256xbf16>
    %cst_20 = arith.constant dense<0.000000e+00> : vector<8x256xf32>
    %94 = tpu.matmul %16, %93, %cst_20 {dimension_numbers = #tpu.dot_dimension_numbers<[1], [0], [0], [1], [0, 0, 1, 1], [], []>} : vector<8x8xbf16>, vector<8x256xbf16>, vector<8x256xf32> -> vector<8x256xf32>
    %95 = arith.addf %89, %94 : vector<8x256xf32>
    %c240_i32 = arith.constant 240 : i32
    %96 = tpu.dynamic_rotate %56 by %c240_i32 dim 1 : vector<8x256xf32>, i32 -> vector<8x256xf32>
    %97 = vector.broadcast %45 : vector<1x256xf32> to vector<8x256xf32>
    %98 = arith.mulf %96, %97 : vector<8x256xf32>
    %99 = arith.truncf %98 : vector<8x256xf32> to vector<8x256xbf16>
    %cst_21 = arith.constant dense<0.000000e+00> : vector<8x256xf32>
    %100 = tpu.matmul %18, %99, %cst_21 {dimension_numbers = #tpu.dot_dimension_numbers<[1], [0], [0], [1], [0, 0, 1, 1], [], []>} : vector<8x8xbf16>, vector<8x256xbf16>, vector<8x256xf32> -> vector<8x256xf32>
    %101 = arith.addf %95, %100 : vector<8x256xf32>
    %c239_i32 = arith.constant 239 : i32
    %102 = tpu.dynamic_rotate %56 by %c239_i32 dim 1 : vector<8x256xf32>, i32 -> vector<8x256xf32>
    %103 = vector.broadcast %46 : vector<1x256xf32> to vector<8x256xf32>
    %104 = arith.mulf %102, %103 : vector<8x256xf32>
    %105 = arith.truncf %104 : vector<8x256xf32> to vector<8x256xbf16>
    %cst_22 = arith.constant dense<0.000000e+00> : vector<8x256xf32>
    %106 = tpu.matmul %20, %105, %cst_22 {dimension_numbers = #tpu.dot_dimension_numbers<[1], [0], [0], [1], [0, 0, 1, 1], [], []>} : vector<8x8xbf16>, vector<8x256xbf16>, vector<8x256xf32> -> vector<8x256xf32>
    %107 = arith.addf %101, %106 : vector<8x256xf32>
    %cst_23 = arith.constant 0.000000e+00 : f32
    %108 = vector.broadcast %cst_23 : f32 to vector<8x256xf32>
    %109 = arith.maximumf %107, %108 : vector<8x256xf32>
    %c17_i32_24 = arith.constant 17 : i32
    %110 = tpu.dynamic_rotate %109 by %c17_i32_24 dim 1 : vector<8x256xf32>, i32 -> vector<8x256xf32>
    %111 = vector.broadcast %39 : vector<1x256xf32> to vector<8x256xf32>
    %112 = arith.mulf %110, %111 : vector<8x256xf32>
    %113 = arith.truncf %112 : vector<8x256xf32> to vector<8x256xbf16>
    %cst_25 = arith.constant dense<0.000000e+00> : vector<8x256xf32>
    %114 = tpu.matmul %22, %113, %cst_25 {dimension_numbers = #tpu.dot_dimension_numbers<[1], [0], [0], [1], [0, 0, 1, 1], [], []>} : vector<8x8xbf16>, vector<8x256xbf16>, vector<8x256xf32> -> vector<8x256xf32>
    %115 = arith.addf %52, %114 : vector<8x256xf32>
    %c16_i32_26 = arith.constant 16 : i32
    %116 = tpu.dynamic_rotate %109 by %c16_i32_26 dim 1 : vector<8x256xf32>, i32 -> vector<8x256xf32>
    %117 = vector.broadcast %40 : vector<1x256xf32> to vector<8x256xf32>
    %118 = arith.mulf %116, %117 : vector<8x256xf32>
    %119 = arith.truncf %118 : vector<8x256xf32> to vector<8x256xbf16>
    %cst_27 = arith.constant dense<0.000000e+00> : vector<8x256xf32>
    %120 = tpu.matmul %24, %119, %cst_27 {dimension_numbers = #tpu.dot_dimension_numbers<[1], [0], [0], [1], [0, 0, 1, 1], [], []>} : vector<8x8xbf16>, vector<8x256xbf16>, vector<8x256xf32> -> vector<8x256xf32>
    %121 = arith.addf %115, %120 : vector<8x256xf32>
    %c15_i32_28 = arith.constant 15 : i32
    %122 = tpu.dynamic_rotate %109 by %c15_i32_28 dim 1 : vector<8x256xf32>, i32 -> vector<8x256xf32>
    %123 = vector.broadcast %41 : vector<1x256xf32> to vector<8x256xf32>
    %124 = arith.mulf %122, %123 : vector<8x256xf32>
    %125 = arith.truncf %124 : vector<8x256xf32> to vector<8x256xbf16>
    %cst_29 = arith.constant dense<0.000000e+00> : vector<8x256xf32>
    %126 = tpu.matmul %26, %125, %cst_29 {dimension_numbers = #tpu.dot_dimension_numbers<[1], [0], [0], [1], [0, 0, 1, 1], [], []>} : vector<8x8xbf16>, vector<8x256xbf16>, vector<8x256xf32> -> vector<8x256xf32>
    %127 = arith.addf %121, %126 : vector<8x256xf32>
    %c1_i32_30 = arith.constant 1 : i32
    %128 = tpu.dynamic_rotate %109 by %c1_i32_30 dim 1 : vector<8x256xf32>, i32 -> vector<8x256xf32>
    %129 = vector.broadcast %42 : vector<1x256xf32> to vector<8x256xf32>
    %130 = arith.mulf %128, %129 : vector<8x256xf32>
    %131 = arith.truncf %130 : vector<8x256xf32> to vector<8x256xbf16>
    %cst_31 = arith.constant dense<0.000000e+00> : vector<8x256xf32>
    %132 = tpu.matmul %28, %131, %cst_31 {dimension_numbers = #tpu.dot_dimension_numbers<[1], [0], [0], [1], [0, 0, 1, 1], [], []>} : vector<8x8xbf16>, vector<8x256xbf16>, vector<8x256xf32> -> vector<8x256xf32>
    %133 = arith.addf %127, %132 : vector<8x256xf32>
    %134 = arith.truncf %109 : vector<8x256xf32> to vector<8x256xbf16>
    %cst_32 = arith.constant dense<0.000000e+00> : vector<8x256xf32>
    %135 = tpu.matmul %30, %134, %cst_32 {dimension_numbers = #tpu.dot_dimension_numbers<[1], [0], [0], [1], [0, 0, 1, 1], [], []>} : vector<8x8xbf16>, vector<8x256xbf16>, vector<8x256xf32> -> vector<8x256xf32>
    %136 = arith.addf %133, %135 : vector<8x256xf32>
    %c255_i32_33 = arith.constant 255 : i32
    %137 = tpu.dynamic_rotate %109 by %c255_i32_33 dim 1 : vector<8x256xf32>, i32 -> vector<8x256xf32>
    %138 = vector.broadcast %43 : vector<1x256xf32> to vector<8x256xf32>
    %139 = arith.mulf %137, %138 : vector<8x256xf32>
    %140 = arith.truncf %139 : vector<8x256xf32> to vector<8x256xbf16>
    %cst_34 = arith.constant dense<0.000000e+00> : vector<8x256xf32>
    %141 = tpu.matmul %32, %140, %cst_34 {dimension_numbers = #tpu.dot_dimension_numbers<[1], [0], [0], [1], [0, 0, 1, 1], [], []>} : vector<8x8xbf16>, vector<8x256xbf16>, vector<8x256xf32> -> vector<8x256xf32>
    %142 = arith.addf %136, %141 : vector<8x256xf32>
    %c241_i32_35 = arith.constant 241 : i32
    %143 = tpu.dynamic_rotate %109 by %c241_i32_35 dim 1 : vector<8x256xf32>, i32 -> vector<8x256xf32>
    %144 = vector.broadcast %44 : vector<1x256xf32> to vector<8x256xf32>
    %145 = arith.mulf %143, %144 : vector<8x256xf32>
    %146 = arith.truncf %145 : vector<8x256xf32> to vector<8x256xbf16>
    %cst_36 = arith.constant dense<0.000000e+00> : vector<8x256xf32>
    %147 = tpu.matmul %34, %146, %cst_36 {dimension_numbers = #tpu.dot_dimension_numbers<[1], [0], [0], [1], [0, 0, 1, 1], [], []>} : vector<8x8xbf16>, vector<8x256xbf16>, vector<8x256xf32> -> vector<8x256xf32>
    %148 = arith.addf %142, %147 : vector<8x256xf32>
    %c240_i32_37 = arith.constant 240 : i32
    %149 = tpu.dynamic_rotate %109 by %c240_i32_37 dim 1 : vector<8x256xf32>, i32 -> vector<8x256xf32>
    %150 = vector.broadcast %45 : vector<1x256xf32> to vector<8x256xf32>
    %151 = arith.mulf %149, %150 : vector<8x256xf32>
    %152 = arith.truncf %151 : vector<8x256xf32> to vector<8x256xbf16>
    %cst_38 = arith.constant dense<0.000000e+00> : vector<8x256xf32>
    %153 = tpu.matmul %36, %152, %cst_38 {dimension_numbers = #tpu.dot_dimension_numbers<[1], [0], [0], [1], [0, 0, 1, 1], [], []>} : vector<8x8xbf16>, vector<8x256xbf16>, vector<8x256xf32> -> vector<8x256xf32>
    %154 = arith.addf %148, %153 : vector<8x256xf32>
    %c239_i32_39 = arith.constant 239 : i32
    %155 = tpu.dynamic_rotate %109 by %c239_i32_39 dim 1 : vector<8x256xf32>, i32 -> vector<8x256xf32>
    %156 = vector.broadcast %46 : vector<1x256xf32> to vector<8x256xf32>
    %157 = arith.mulf %155, %156 : vector<8x256xf32>
    %158 = arith.truncf %157 : vector<8x256xf32> to vector<8x256xbf16>
    %cst_40 = arith.constant dense<0.000000e+00> : vector<8x256xf32>
    %159 = tpu.matmul %38, %158, %cst_40 {dimension_numbers = #tpu.dot_dimension_numbers<[1], [0], [0], [1], [0, 0, 1, 1], [], []>} : vector<8x8xbf16>, vector<8x256xbf16>, vector<8x256xf32> -> vector<8x256xf32>
    %160 = arith.addf %154, %159 : vector<8x256xf32>
    %161 = arith.addf %54, %160 : vector<8x256xf32>
    %c1_i32_41 = arith.constant 1 : i32
    %cst_42 = arith.constant 0.000000e+00 : f32
    %162 = vector.broadcast %cst_42 : f32 to vector<8x256xf32>
    %163 = arith.maximumf %161, %162 : vector<8x256xf32>
    %c17_i32_43 = arith.constant 17 : i32
    %164 = tpu.dynamic_rotate %163 by %c17_i32_43 dim 1 : vector<8x256xf32>, i32 -> vector<8x256xf32>
    %165 = vector.broadcast %39 : vector<1x256xf32> to vector<8x256xf32>
    %166 = arith.mulf %164, %165 : vector<8x256xf32>
    %167 = arith.truncf %166 : vector<8x256xf32> to vector<8x256xbf16>
    %cst_44 = arith.constant dense<0.000000e+00> : vector<8x256xf32>
    %168 = tpu.matmul %4, %167, %cst_44 {dimension_numbers = #tpu.dot_dimension_numbers<[1], [0], [0], [1], [0, 0, 1, 1], [], []>} : vector<8x8xbf16>, vector<8x256xbf16>, vector<8x256xf32> -> vector<8x256xf32>
    %169 = arith.addf %49, %168 : vector<8x256xf32>
    %c16_i32_45 = arith.constant 16 : i32
    %170 = tpu.dynamic_rotate %163 by %c16_i32_45 dim 1 : vector<8x256xf32>, i32 -> vector<8x256xf32>
    %171 = vector.broadcast %40 : vector<1x256xf32> to vector<8x256xf32>
    %172 = arith.mulf %170, %171 : vector<8x256xf32>
    %173 = arith.truncf %172 : vector<8x256xf32> to vector<8x256xbf16>
    %cst_46 = arith.constant dense<0.000000e+00> : vector<8x256xf32>
    %174 = tpu.matmul %6, %173, %cst_46 {dimension_numbers = #tpu.dot_dimension_numbers<[1], [0], [0], [1], [0, 0, 1, 1], [], []>} : vector<8x8xbf16>, vector<8x256xbf16>, vector<8x256xf32> -> vector<8x256xf32>
    %175 = arith.addf %169, %174 : vector<8x256xf32>
    %c15_i32_47 = arith.constant 15 : i32
    %176 = tpu.dynamic_rotate %163 by %c15_i32_47 dim 1 : vector<8x256xf32>, i32 -> vector<8x256xf32>
    %177 = vector.broadcast %41 : vector<1x256xf32> to vector<8x256xf32>
    %178 = arith.mulf %176, %177 : vector<8x256xf32>
    %179 = arith.truncf %178 : vector<8x256xf32> to vector<8x256xbf16>
    %cst_48 = arith.constant dense<0.000000e+00> : vector<8x256xf32>
    %180 = tpu.matmul %8, %179, %cst_48 {dimension_numbers = #tpu.dot_dimension_numbers<[1], [0], [0], [1], [0, 0, 1, 1], [], []>} : vector<8x8xbf16>, vector<8x256xbf16>, vector<8x256xf32> -> vector<8x256xf32>
    %181 = arith.addf %175, %180 : vector<8x256xf32>
    %c1_i32_49 = arith.constant 1 : i32
    %182 = tpu.dynamic_rotate %163 by %c1_i32_49 dim 1 : vector<8x256xf32>, i32 -> vector<8x256xf32>
    %183 = vector.broadcast %42 : vector<1x256xf32> to vector<8x256xf32>
    %184 = arith.mulf %182, %183 : vector<8x256xf32>
    %185 = arith.truncf %184 : vector<8x256xf32> to vector<8x256xbf16>
    %cst_50 = arith.constant dense<0.000000e+00> : vector<8x256xf32>
    %186 = tpu.matmul %10, %185, %cst_50 {dimension_numbers = #tpu.dot_dimension_numbers<[1], [0], [0], [1], [0, 0, 1, 1], [], []>} : vector<8x8xbf16>, vector<8x256xbf16>, vector<8x256xf32> -> vector<8x256xf32>
    %187 = arith.addf %181, %186 : vector<8x256xf32>
    %188 = arith.truncf %163 : vector<8x256xf32> to vector<8x256xbf16>
    %cst_51 = arith.constant dense<0.000000e+00> : vector<8x256xf32>
    %189 = tpu.matmul %12, %188, %cst_51 {dimension_numbers = #tpu.dot_dimension_numbers<[1], [0], [0], [1], [0, 0, 1, 1], [], []>} : vector<8x8xbf16>, vector<8x256xbf16>, vector<8x256xf32> -> vector<8x256xf32>
    %190 = arith.addf %187, %189 : vector<8x256xf32>
    %c255_i32_52 = arith.constant 255 : i32
    %191 = tpu.dynamic_rotate %163 by %c255_i32_52 dim 1 : vector<8x256xf32>, i32 -> vector<8x256xf32>
    %192 = vector.broadcast %43 : vector<1x256xf32> to vector<8x256xf32>
    %193 = arith.mulf %191, %192 : vector<8x256xf32>
    %194 = arith.truncf %193 : vector<8x256xf32> to vector<8x256xbf16>
    %cst_53 = arith.constant dense<0.000000e+00> : vector<8x256xf32>
    %195 = tpu.matmul %14, %194, %cst_53 {dimension_numbers = #tpu.dot_dimension_numbers<[1], [0], [0], [1], [0, 0, 1, 1], [], []>} : vector<8x8xbf16>, vector<8x256xbf16>, vector<8x256xf32> -> vector<8x256xf32>
    %196 = arith.addf %190, %195 : vector<8x256xf32>
    %c241_i32_54 = arith.constant 241 : i32
    %197 = tpu.dynamic_rotate %163 by %c241_i32_54 dim 1 : vector<8x256xf32>, i32 -> vector<8x256xf32>
    %198 = vector.broadcast %44 : vector<1x256xf32> to vector<8x256xf32>
    %199 = arith.mulf %197, %198 : vector<8x256xf32>
    %200 = arith.truncf %199 : vector<8x256xf32> to vector<8x256xbf16>
    %cst_55 = arith.constant dense<0.000000e+00> : vector<8x256xf32>
    %201 = tpu.matmul %16, %200, %cst_55 {dimension_numbers = #tpu.dot_dimension_numbers<[1], [0], [0], [1], [0, 0, 1, 1], [], []>} : vector<8x8xbf16>, vector<8x256xbf16>, vector<8x256xf32> -> vector<8x256xf32>
    %202 = arith.addf %196, %201 : vector<8x256xf32>
    %c240_i32_56 = arith.constant 240 : i32
    %203 = tpu.dynamic_rotate %163 by %c240_i32_56 dim 1 : vector<8x256xf32>, i32 -> vector<8x256xf32>
    %204 = vector.broadcast %45 : vector<1x256xf32> to vector<8x256xf32>
    %205 = arith.mulf %203, %204 : vector<8x256xf32>
    %206 = arith.truncf %205 : vector<8x256xf32> to vector<8x256xbf16>
    %cst_57 = arith.constant dense<0.000000e+00> : vector<8x256xf32>
    %207 = tpu.matmul %18, %206, %cst_57 {dimension_numbers = #tpu.dot_dimension_numbers<[1], [0], [0], [1], [0, 0, 1, 1], [], []>} : vector<8x8xbf16>, vector<8x256xbf16>, vector<8x256xf32> -> vector<8x256xf32>
    %208 = arith.addf %202, %207 : vector<8x256xf32>
    %c239_i32_58 = arith.constant 239 : i32
    %209 = tpu.dynamic_rotate %163 by %c239_i32_58 dim 1 : vector<8x256xf32>, i32 -> vector<8x256xf32>
    %210 = vector.broadcast %46 : vector<1x256xf32> to vector<8x256xf32>
    %211 = arith.mulf %209, %210 : vector<8x256xf32>
    %212 = arith.truncf %211 : vector<8x256xf32> to vector<8x256xbf16>
    %cst_59 = arith.constant dense<0.000000e+00> : vector<8x256xf32>
    %213 = tpu.matmul %20, %212, %cst_59 {dimension_numbers = #tpu.dot_dimension_numbers<[1], [0], [0], [1], [0, 0, 1, 1], [], []>} : vector<8x8xbf16>, vector<8x256xbf16>, vector<8x256xf32> -> vector<8x256xf32>
    %214 = arith.addf %208, %213 : vector<8x256xf32>
    %cst_60 = arith.constant 0.000000e+00 : f32
    %215 = vector.broadcast %cst_60 : f32 to vector<8x256xf32>
    %216 = arith.maximumf %214, %215 : vector<8x256xf32>
    %c17_i32_61 = arith.constant 17 : i32
    %217 = tpu.dynamic_rotate %216 by %c17_i32_61 dim 1 : vector<8x256xf32>, i32 -> vector<8x256xf32>
    %218 = vector.broadcast %39 : vector<1x256xf32> to vector<8x256xf32>
    %219 = arith.mulf %217, %218 : vector<8x256xf32>
    %220 = arith.truncf %219 : vector<8x256xf32> to vector<8x256xbf16>
    %cst_62 = arith.constant dense<0.000000e+00> : vector<8x256xf32>
    %221 = tpu.matmul %22, %220, %cst_62 {dimension_numbers = #tpu.dot_dimension_numbers<[1], [0], [0], [1], [0, 0, 1, 1], [], []>} : vector<8x8xbf16>, vector<8x256xbf16>, vector<8x256xf32> -> vector<8x256xf32>
    %222 = arith.addf %52, %221 : vector<8x256xf32>
    %c16_i32_63 = arith.constant 16 : i32
    %223 = tpu.dynamic_rotate %216 by %c16_i32_63 dim 1 : vector<8x256xf32>, i32 -> vector<8x256xf32>
    %224 = vector.broadcast %40 : vector<1x256xf32> to vector<8x256xf32>
    %225 = arith.mulf %223, %224 : vector<8x256xf32>
    %226 = arith.truncf %225 : vector<8x256xf32> to vector<8x256xbf16>
    %cst_64 = arith.constant dense<0.000000e+00> : vector<8x256xf32>
    %227 = tpu.matmul %24, %226, %cst_64 {dimension_numbers = #tpu.dot_dimension_numbers<[1], [0], [0], [1], [0, 0, 1, 1], [], []>} : vector<8x8xbf16>, vector<8x256xbf16>, vector<8x256xf32> -> vector<8x256xf32>
    %228 = arith.addf %222, %227 : vector<8x256xf32>
    %c15_i32_65 = arith.constant 15 : i32
    %229 = tpu.dynamic_rotate %216 by %c15_i32_65 dim 1 : vector<8x256xf32>, i32 -> vector<8x256xf32>
    %230 = vector.broadcast %41 : vector<1x256xf32> to vector<8x256xf32>
    %231 = arith.mulf %229, %230 : vector<8x256xf32>
    %232 = arith.truncf %231 : vector<8x256xf32> to vector<8x256xbf16>
    %cst_66 = arith.constant dense<0.000000e+00> : vector<8x256xf32>
    %233 = tpu.matmul %26, %232, %cst_66 {dimension_numbers = #tpu.dot_dimension_numbers<[1], [0], [0], [1], [0, 0, 1, 1], [], []>} : vector<8x8xbf16>, vector<8x256xbf16>, vector<8x256xf32> -> vector<8x256xf32>
    %234 = arith.addf %228, %233 : vector<8x256xf32>
    %c1_i32_67 = arith.constant 1 : i32
    %235 = tpu.dynamic_rotate %216 by %c1_i32_67 dim 1 : vector<8x256xf32>, i32 -> vector<8x256xf32>
    %236 = vector.broadcast %42 : vector<1x256xf32> to vector<8x256xf32>
    %237 = arith.mulf %235, %236 : vector<8x256xf32>
    %238 = arith.truncf %237 : vector<8x256xf32> to vector<8x256xbf16>
    %cst_68 = arith.constant dense<0.000000e+00> : vector<8x256xf32>
    %239 = tpu.matmul %28, %238, %cst_68 {dimension_numbers = #tpu.dot_dimension_numbers<[1], [0], [0], [1], [0, 0, 1, 1], [], []>} : vector<8x8xbf16>, vector<8x256xbf16>, vector<8x256xf32> -> vector<8x256xf32>
    %240 = arith.addf %234, %239 : vector<8x256xf32>
    %241 = arith.truncf %216 : vector<8x256xf32> to vector<8x256xbf16>
    %cst_69 = arith.constant dense<0.000000e+00> : vector<8x256xf32>
    %242 = tpu.matmul %30, %241, %cst_69 {dimension_numbers = #tpu.dot_dimension_numbers<[1], [0], [0], [1], [0, 0, 1, 1], [], []>} : vector<8x8xbf16>, vector<8x256xbf16>, vector<8x256xf32> -> vector<8x256xf32>
    %243 = arith.addf %240, %242 : vector<8x256xf32>
    %c255_i32_70 = arith.constant 255 : i32
    %244 = tpu.dynamic_rotate %216 by %c255_i32_70 dim 1 : vector<8x256xf32>, i32 -> vector<8x256xf32>
    %245 = vector.broadcast %43 : vector<1x256xf32> to vector<8x256xf32>
    %246 = arith.mulf %244, %245 : vector<8x256xf32>
    %247 = arith.truncf %246 : vector<8x256xf32> to vector<8x256xbf16>
    %cst_71 = arith.constant dense<0.000000e+00> : vector<8x256xf32>
    %248 = tpu.matmul %32, %247, %cst_71 {dimension_numbers = #tpu.dot_dimension_numbers<[1], [0], [0], [1], [0, 0, 1, 1], [], []>} : vector<8x8xbf16>, vector<8x256xbf16>, vector<8x256xf32> -> vector<8x256xf32>
    %249 = arith.addf %243, %248 : vector<8x256xf32>
    %c241_i32_72 = arith.constant 241 : i32
    %250 = tpu.dynamic_rotate %216 by %c241_i32_72 dim 1 : vector<8x256xf32>, i32 -> vector<8x256xf32>
    %251 = vector.broadcast %44 : vector<1x256xf32> to vector<8x256xf32>
    %252 = arith.mulf %250, %251 : vector<8x256xf32>
    %253 = arith.truncf %252 : vector<8x256xf32> to vector<8x256xbf16>
    %cst_73 = arith.constant dense<0.000000e+00> : vector<8x256xf32>
    %254 = tpu.matmul %34, %253, %cst_73 {dimension_numbers = #tpu.dot_dimension_numbers<[1], [0], [0], [1], [0, 0, 1, 1], [], []>} : vector<8x8xbf16>, vector<8x256xbf16>, vector<8x256xf32> -> vector<8x256xf32>
    %255 = arith.addf %249, %254 : vector<8x256xf32>
    %c240_i32_74 = arith.constant 240 : i32
    %256 = tpu.dynamic_rotate %216 by %c240_i32_74 dim 1 : vector<8x256xf32>, i32 -> vector<8x256xf32>
    %257 = vector.broadcast %45 : vector<1x256xf32> to vector<8x256xf32>
    %258 = arith.mulf %256, %257 : vector<8x256xf32>
    %259 = arith.truncf %258 : vector<8x256xf32> to vector<8x256xbf16>
    %cst_75 = arith.constant dense<0.000000e+00> : vector<8x256xf32>
    %260 = tpu.matmul %36, %259, %cst_75 {dimension_numbers = #tpu.dot_dimension_numbers<[1], [0], [0], [1], [0, 0, 1, 1], [], []>} : vector<8x8xbf16>, vector<8x256xbf16>, vector<8x256xf32> -> vector<8x256xf32>
    %261 = arith.addf %255, %260 : vector<8x256xf32>
    %c239_i32_76 = arith.constant 239 : i32
    %262 = tpu.dynamic_rotate %216 by %c239_i32_76 dim 1 : vector<8x256xf32>, i32 -> vector<8x256xf32>
    %263 = vector.broadcast %46 : vector<1x256xf32> to vector<8x256xf32>
    %264 = arith.mulf %262, %263 : vector<8x256xf32>
    %265 = arith.truncf %264 : vector<8x256xf32> to vector<8x256xbf16>
    %cst_77 = arith.constant dense<0.000000e+00> : vector<8x256xf32>
    %266 = tpu.matmul %38, %265, %cst_77 {dimension_numbers = #tpu.dot_dimension_numbers<[1], [0], [0], [1], [0, 0, 1, 1], [], []>} : vector<8x8xbf16>, vector<8x256xbf16>, vector<8x256xf32> -> vector<8x256xf32>
    %267 = arith.addf %261, %266 : vector<8x256xf32>
    %268 = arith.addf %161, %267 : vector<8x256xf32>
    %c2_i32 = arith.constant 2 : i32
    %cst_78 = arith.constant 0.000000e+00 : f32
    %269 = vector.broadcast %cst_78 : f32 to vector<8x256xf32>
    %270 = arith.maximumf %268, %269 : vector<8x256xf32>
    %c17_i32_79 = arith.constant 17 : i32
    %271 = tpu.dynamic_rotate %270 by %c17_i32_79 dim 1 : vector<8x256xf32>, i32 -> vector<8x256xf32>
    %272 = vector.broadcast %39 : vector<1x256xf32> to vector<8x256xf32>
    %273 = arith.mulf %271, %272 : vector<8x256xf32>
    %274 = arith.truncf %273 : vector<8x256xf32> to vector<8x256xbf16>
    %cst_80 = arith.constant dense<0.000000e+00> : vector<8x256xf32>
    %275 = tpu.matmul %4, %274, %cst_80 {dimension_numbers = #tpu.dot_dimension_numbers<[1], [0], [0], [1], [0, 0, 1, 1], [], []>} : vector<8x8xbf16>, vector<8x256xbf16>, vector<8x256xf32> -> vector<8x256xf32>
    %276 = arith.addf %49, %275 : vector<8x256xf32>
    %c16_i32_81 = arith.constant 16 : i32
    %277 = tpu.dynamic_rotate %270 by %c16_i32_81 dim 1 : vector<8x256xf32>, i32 -> vector<8x256xf32>
    %278 = vector.broadcast %40 : vector<1x256xf32> to vector<8x256xf32>
    %279 = arith.mulf %277, %278 : vector<8x256xf32>
    %280 = arith.truncf %279 : vector<8x256xf32> to vector<8x256xbf16>
    %cst_82 = arith.constant dense<0.000000e+00> : vector<8x256xf32>
    %281 = tpu.matmul %6, %280, %cst_82 {dimension_numbers = #tpu.dot_dimension_numbers<[1], [0], [0], [1], [0, 0, 1, 1], [], []>} : vector<8x8xbf16>, vector<8x256xbf16>, vector<8x256xf32> -> vector<8x256xf32>
    %282 = arith.addf %276, %281 : vector<8x256xf32>
    %c15_i32_83 = arith.constant 15 : i32
    %283 = tpu.dynamic_rotate %270 by %c15_i32_83 dim 1 : vector<8x256xf32>, i32 -> vector<8x256xf32>
    %284 = vector.broadcast %41 : vector<1x256xf32> to vector<8x256xf32>
    %285 = arith.mulf %283, %284 : vector<8x256xf32>
    %286 = arith.truncf %285 : vector<8x256xf32> to vector<8x256xbf16>
    %cst_84 = arith.constant dense<0.000000e+00> : vector<8x256xf32>
    %287 = tpu.matmul %8, %286, %cst_84 {dimension_numbers = #tpu.dot_dimension_numbers<[1], [0], [0], [1], [0, 0, 1, 1], [], []>} : vector<8x8xbf16>, vector<8x256xbf16>, vector<8x256xf32> -> vector<8x256xf32>
    %288 = arith.addf %282, %287 : vector<8x256xf32>
    %c1_i32_85 = arith.constant 1 : i32
    %289 = tpu.dynamic_rotate %270 by %c1_i32_85 dim 1 : vector<8x256xf32>, i32 -> vector<8x256xf32>
    %290 = vector.broadcast %42 : vector<1x256xf32> to vector<8x256xf32>
    %291 = arith.mulf %289, %290 : vector<8x256xf32>
    %292 = arith.truncf %291 : vector<8x256xf32> to vector<8x256xbf16>
    %cst_86 = arith.constant dense<0.000000e+00> : vector<8x256xf32>
    %293 = tpu.matmul %10, %292, %cst_86 {dimension_numbers = #tpu.dot_dimension_numbers<[1], [0], [0], [1], [0, 0, 1, 1], [], []>} : vector<8x8xbf16>, vector<8x256xbf16>, vector<8x256xf32> -> vector<8x256xf32>
    %294 = arith.addf %288, %293 : vector<8x256xf32>
    %295 = arith.truncf %270 : vector<8x256xf32> to vector<8x256xbf16>
    %cst_87 = arith.constant dense<0.000000e+00> : vector<8x256xf32>
    %296 = tpu.matmul %12, %295, %cst_87 {dimension_numbers = #tpu.dot_dimension_numbers<[1], [0], [0], [1], [0, 0, 1, 1], [], []>} : vector<8x8xbf16>, vector<8x256xbf16>, vector<8x256xf32> -> vector<8x256xf32>
    %297 = arith.addf %294, %296 : vector<8x256xf32>
    %c255_i32_88 = arith.constant 255 : i32
    %298 = tpu.dynamic_rotate %270 by %c255_i32_88 dim 1 : vector<8x256xf32>, i32 -> vector<8x256xf32>
    %299 = vector.broadcast %43 : vector<1x256xf32> to vector<8x256xf32>
    %300 = arith.mulf %298, %299 : vector<8x256xf32>
    %301 = arith.truncf %300 : vector<8x256xf32> to vector<8x256xbf16>
    %cst_89 = arith.constant dense<0.000000e+00> : vector<8x256xf32>
    %302 = tpu.matmul %14, %301, %cst_89 {dimension_numbers = #tpu.dot_dimension_numbers<[1], [0], [0], [1], [0, 0, 1, 1], [], []>} : vector<8x8xbf16>, vector<8x256xbf16>, vector<8x256xf32> -> vector<8x256xf32>
    %303 = arith.addf %297, %302 : vector<8x256xf32>
    %c241_i32_90 = arith.constant 241 : i32
    %304 = tpu.dynamic_rotate %270 by %c241_i32_90 dim 1 : vector<8x256xf32>, i32 -> vector<8x256xf32>
    %305 = vector.broadcast %44 : vector<1x256xf32> to vector<8x256xf32>
    %306 = arith.mulf %304, %305 : vector<8x256xf32>
    %307 = arith.truncf %306 : vector<8x256xf32> to vector<8x256xbf16>
    %cst_91 = arith.constant dense<0.000000e+00> : vector<8x256xf32>
    %308 = tpu.matmul %16, %307, %cst_91 {dimension_numbers = #tpu.dot_dimension_numbers<[1], [0], [0], [1], [0, 0, 1, 1], [], []>} : vector<8x8xbf16>, vector<8x256xbf16>, vector<8x256xf32> -> vector<8x256xf32>
    %309 = arith.addf %303, %308 : vector<8x256xf32>
    %c240_i32_92 = arith.constant 240 : i32
    %310 = tpu.dynamic_rotate %270 by %c240_i32_92 dim 1 : vector<8x256xf32>, i32 -> vector<8x256xf32>
    %311 = vector.broadcast %45 : vector<1x256xf32> to vector<8x256xf32>
    %312 = arith.mulf %310, %311 : vector<8x256xf32>
    %313 = arith.truncf %312 : vector<8x256xf32> to vector<8x256xbf16>
    %cst_93 = arith.constant dense<0.000000e+00> : vector<8x256xf32>
    %314 = tpu.matmul %18, %313, %cst_93 {dimension_numbers = #tpu.dot_dimension_numbers<[1], [0], [0], [1], [0, 0, 1, 1], [], []>} : vector<8x8xbf16>, vector<8x256xbf16>, vector<8x256xf32> -> vector<8x256xf32>
    %315 = arith.addf %309, %314 : vector<8x256xf32>
    %c239_i32_94 = arith.constant 239 : i32
    %316 = tpu.dynamic_rotate %270 by %c239_i32_94 dim 1 : vector<8x256xf32>, i32 -> vector<8x256xf32>
    %317 = vector.broadcast %46 : vector<1x256xf32> to vector<8x256xf32>
    %318 = arith.mulf %316, %317 : vector<8x256xf32>
    %319 = arith.truncf %318 : vector<8x256xf32> to vector<8x256xbf16>
    %cst_95 = arith.constant dense<0.000000e+00> : vector<8x256xf32>
    %320 = tpu.matmul %20, %319, %cst_95 {dimension_numbers = #tpu.dot_dimension_numbers<[1], [0], [0], [1], [0, 0, 1, 1], [], []>} : vector<8x8xbf16>, vector<8x256xbf16>, vector<8x256xf32> -> vector<8x256xf32>
    %321 = arith.addf %315, %320 : vector<8x256xf32>
    %cst_96 = arith.constant 0.000000e+00 : f32
    %322 = vector.broadcast %cst_96 : f32 to vector<8x256xf32>
    %323 = arith.maximumf %321, %322 : vector<8x256xf32>
    %c17_i32_97 = arith.constant 17 : i32
    %324 = tpu.dynamic_rotate %323 by %c17_i32_97 dim 1 : vector<8x256xf32>, i32 -> vector<8x256xf32>
    %325 = vector.broadcast %39 : vector<1x256xf32> to vector<8x256xf32>
    %326 = arith.mulf %324, %325 : vector<8x256xf32>
    %327 = arith.truncf %326 : vector<8x256xf32> to vector<8x256xbf16>
    %cst_98 = arith.constant dense<0.000000e+00> : vector<8x256xf32>
    %328 = tpu.matmul %22, %327, %cst_98 {dimension_numbers = #tpu.dot_dimension_numbers<[1], [0], [0], [1], [0, 0, 1, 1], [], []>} : vector<8x8xbf16>, vector<8x256xbf16>, vector<8x256xf32> -> vector<8x256xf32>
    %329 = arith.addf %52, %328 : vector<8x256xf32>
    %c16_i32_99 = arith.constant 16 : i32
    %330 = tpu.dynamic_rotate %323 by %c16_i32_99 dim 1 : vector<8x256xf32>, i32 -> vector<8x256xf32>
    %331 = vector.broadcast %40 : vector<1x256xf32> to vector<8x256xf32>
    %332 = arith.mulf %330, %331 : vector<8x256xf32>
    %333 = arith.truncf %332 : vector<8x256xf32> to vector<8x256xbf16>
    %cst_100 = arith.constant dense<0.000000e+00> : vector<8x256xf32>
    %334 = tpu.matmul %24, %333, %cst_100 {dimension_numbers = #tpu.dot_dimension_numbers<[1], [0], [0], [1], [0, 0, 1, 1], [], []>} : vector<8x8xbf16>, vector<8x256xbf16>, vector<8x256xf32> -> vector<8x256xf32>
    %335 = arith.addf %329, %334 : vector<8x256xf32>
    %c15_i32_101 = arith.constant 15 : i32
    %336 = tpu.dynamic_rotate %323 by %c15_i32_101 dim 1 : vector<8x256xf32>, i32 -> vector<8x256xf32>
    %337 = vector.broadcast %41 : vector<1x256xf32> to vector<8x256xf32>
    %338 = arith.mulf %336, %337 : vector<8x256xf32>
    %339 = arith.truncf %338 : vector<8x256xf32> to vector<8x256xbf16>
    %cst_102 = arith.constant dense<0.000000e+00> : vector<8x256xf32>
    %340 = tpu.matmul %26, %339, %cst_102 {dimension_numbers = #tpu.dot_dimension_numbers<[1], [0], [0], [1], [0, 0, 1, 1], [], []>} : vector<8x8xbf16>, vector<8x256xbf16>, vector<8x256xf32> -> vector<8x256xf32>
    %341 = arith.addf %335, %340 : vector<8x256xf32>
    %c1_i32_103 = arith.constant 1 : i32
    %342 = tpu.dynamic_rotate %323 by %c1_i32_103 dim 1 : vector<8x256xf32>, i32 -> vector<8x256xf32>
    %343 = vector.broadcast %42 : vector<1x256xf32> to vector<8x256xf32>
    %344 = arith.mulf %342, %343 : vector<8x256xf32>
    %345 = arith.truncf %344 : vector<8x256xf32> to vector<8x256xbf16>
    %cst_104 = arith.constant dense<0.000000e+00> : vector<8x256xf32>
    %346 = tpu.matmul %28, %345, %cst_104 {dimension_numbers = #tpu.dot_dimension_numbers<[1], [0], [0], [1], [0, 0, 1, 1], [], []>} : vector<8x8xbf16>, vector<8x256xbf16>, vector<8x256xf32> -> vector<8x256xf32>
    %347 = arith.addf %341, %346 : vector<8x256xf32>
    %348 = arith.truncf %323 : vector<8x256xf32> to vector<8x256xbf16>
    %cst_105 = arith.constant dense<0.000000e+00> : vector<8x256xf32>
    %349 = tpu.matmul %30, %348, %cst_105 {dimension_numbers = #tpu.dot_dimension_numbers<[1], [0], [0], [1], [0, 0, 1, 1], [], []>} : vector<8x8xbf16>, vector<8x256xbf16>, vector<8x256xf32> -> vector<8x256xf32>
    %350 = arith.addf %347, %349 : vector<8x256xf32>
    %c255_i32_106 = arith.constant 255 : i32
    %351 = tpu.dynamic_rotate %323 by %c255_i32_106 dim 1 : vector<8x256xf32>, i32 -> vector<8x256xf32>
    %352 = vector.broadcast %43 : vector<1x256xf32> to vector<8x256xf32>
    %353 = arith.mulf %351, %352 : vector<8x256xf32>
    %354 = arith.truncf %353 : vector<8x256xf32> to vector<8x256xbf16>
    %cst_107 = arith.constant dense<0.000000e+00> : vector<8x256xf32>
    %355 = tpu.matmul %32, %354, %cst_107 {dimension_numbers = #tpu.dot_dimension_numbers<[1], [0], [0], [1], [0, 0, 1, 1], [], []>} : vector<8x8xbf16>, vector<8x256xbf16>, vector<8x256xf32> -> vector<8x256xf32>
    %356 = arith.addf %350, %355 : vector<8x256xf32>
    %c241_i32_108 = arith.constant 241 : i32
    %357 = tpu.dynamic_rotate %323 by %c241_i32_108 dim 1 : vector<8x256xf32>, i32 -> vector<8x256xf32>
    %358 = vector.broadcast %44 : vector<1x256xf32> to vector<8x256xf32>
    %359 = arith.mulf %357, %358 : vector<8x256xf32>
    %360 = arith.truncf %359 : vector<8x256xf32> to vector<8x256xbf16>
    %cst_109 = arith.constant dense<0.000000e+00> : vector<8x256xf32>
    %361 = tpu.matmul %34, %360, %cst_109 {dimension_numbers = #tpu.dot_dimension_numbers<[1], [0], [0], [1], [0, 0, 1, 1], [], []>} : vector<8x8xbf16>, vector<8x256xbf16>, vector<8x256xf32> -> vector<8x256xf32>
    %362 = arith.addf %356, %361 : vector<8x256xf32>
    %c240_i32_110 = arith.constant 240 : i32
    %363 = tpu.dynamic_rotate %323 by %c240_i32_110 dim 1 : vector<8x256xf32>, i32 -> vector<8x256xf32>
    %364 = vector.broadcast %45 : vector<1x256xf32> to vector<8x256xf32>
    %365 = arith.mulf %363, %364 : vector<8x256xf32>
    %366 = arith.truncf %365 : vector<8x256xf32> to vector<8x256xbf16>
    %cst_111 = arith.constant dense<0.000000e+00> : vector<8x256xf32>
    %367 = tpu.matmul %36, %366, %cst_111 {dimension_numbers = #tpu.dot_dimension_numbers<[1], [0], [0], [1], [0, 0, 1, 1], [], []>} : vector<8x8xbf16>, vector<8x256xbf16>, vector<8x256xf32> -> vector<8x256xf32>
    %368 = arith.addf %362, %367 : vector<8x256xf32>
    %c239_i32_112 = arith.constant 239 : i32
    %369 = tpu.dynamic_rotate %323 by %c239_i32_112 dim 1 : vector<8x256xf32>, i32 -> vector<8x256xf32>
    %370 = vector.broadcast %46 : vector<1x256xf32> to vector<8x256xf32>
    %371 = arith.mulf %369, %370 : vector<8x256xf32>
    %372 = arith.truncf %371 : vector<8x256xf32> to vector<8x256xbf16>
    %cst_113 = arith.constant dense<0.000000e+00> : vector<8x256xf32>
    %373 = tpu.matmul %38, %372, %cst_113 {dimension_numbers = #tpu.dot_dimension_numbers<[1], [0], [0], [1], [0, 0, 1, 1], [], []>} : vector<8x8xbf16>, vector<8x256xbf16>, vector<8x256xf32> -> vector<8x256xf32>
    %374 = arith.addf %368, %373 : vector<8x256xf32>
    %375 = arith.addf %268, %374 : vector<8x256xf32>
    %c3_i32 = arith.constant 3 : i32
    %cst_114 = arith.constant 0.000000e+00 : f32
    %376 = vector.broadcast %cst_114 : f32 to vector<8x256xf32>
    %377 = arith.maximumf %375, %376 : vector<8x256xf32>
    %c17_i32_115 = arith.constant 17 : i32
    %378 = tpu.dynamic_rotate %377 by %c17_i32_115 dim 1 : vector<8x256xf32>, i32 -> vector<8x256xf32>
    %379 = vector.broadcast %39 : vector<1x256xf32> to vector<8x256xf32>
    %380 = arith.mulf %378, %379 : vector<8x256xf32>
    %381 = arith.truncf %380 : vector<8x256xf32> to vector<8x256xbf16>
    %cst_116 = arith.constant dense<0.000000e+00> : vector<8x256xf32>
    %382 = tpu.matmul %4, %381, %cst_116 {dimension_numbers = #tpu.dot_dimension_numbers<[1], [0], [0], [1], [0, 0, 1, 1], [], []>} : vector<8x8xbf16>, vector<8x256xbf16>, vector<8x256xf32> -> vector<8x256xf32>
    %383 = arith.addf %49, %382 : vector<8x256xf32>
    %c16_i32_117 = arith.constant 16 : i32
    %384 = tpu.dynamic_rotate %377 by %c16_i32_117 dim 1 : vector<8x256xf32>, i32 -> vector<8x256xf32>
    %385 = vector.broadcast %40 : vector<1x256xf32> to vector<8x256xf32>
    %386 = arith.mulf %384, %385 : vector<8x256xf32>
    %387 = arith.truncf %386 : vector<8x256xf32> to vector<8x256xbf16>
    %cst_118 = arith.constant dense<0.000000e+00> : vector<8x256xf32>
    %388 = tpu.matmul %6, %387, %cst_118 {dimension_numbers = #tpu.dot_dimension_numbers<[1], [0], [0], [1], [0, 0, 1, 1], [], []>} : vector<8x8xbf16>, vector<8x256xbf16>, vector<8x256xf32> -> vector<8x256xf32>
    %389 = arith.addf %383, %388 : vector<8x256xf32>
    %c15_i32_119 = arith.constant 15 : i32
    %390 = tpu.dynamic_rotate %377 by %c15_i32_119 dim 1 : vector<8x256xf32>, i32 -> vector<8x256xf32>
    %391 = vector.broadcast %41 : vector<1x256xf32> to vector<8x256xf32>
    %392 = arith.mulf %390, %391 : vector<8x256xf32>
    %393 = arith.truncf %392 : vector<8x256xf32> to vector<8x256xbf16>
    %cst_120 = arith.constant dense<0.000000e+00> : vector<8x256xf32>
    %394 = tpu.matmul %8, %393, %cst_120 {dimension_numbers = #tpu.dot_dimension_numbers<[1], [0], [0], [1], [0, 0, 1, 1], [], []>} : vector<8x8xbf16>, vector<8x256xbf16>, vector<8x256xf32> -> vector<8x256xf32>
    %395 = arith.addf %389, %394 : vector<8x256xf32>
    %c1_i32_121 = arith.constant 1 : i32
    %396 = tpu.dynamic_rotate %377 by %c1_i32_121 dim 1 : vector<8x256xf32>, i32 -> vector<8x256xf32>
    %397 = vector.broadcast %42 : vector<1x256xf32> to vector<8x256xf32>
    %398 = arith.mulf %396, %397 : vector<8x256xf32>
    %399 = arith.truncf %398 : vector<8x256xf32> to vector<8x256xbf16>
    %cst_122 = arith.constant dense<0.000000e+00> : vector<8x256xf32>
    %400 = tpu.matmul %10, %399, %cst_122 {dimension_numbers = #tpu.dot_dimension_numbers<[1], [0], [0], [1], [0, 0, 1, 1], [], []>} : vector<8x8xbf16>, vector<8x256xbf16>, vector<8x256xf32> -> vector<8x256xf32>
    %401 = arith.addf %395, %400 : vector<8x256xf32>
    %402 = arith.truncf %377 : vector<8x256xf32> to vector<8x256xbf16>
    %cst_123 = arith.constant dense<0.000000e+00> : vector<8x256xf32>
    %403 = tpu.matmul %12, %402, %cst_123 {dimension_numbers = #tpu.dot_dimension_numbers<[1], [0], [0], [1], [0, 0, 1, 1], [], []>} : vector<8x8xbf16>, vector<8x256xbf16>, vector<8x256xf32> -> vector<8x256xf32>
    %404 = arith.addf %401, %403 : vector<8x256xf32>
    %c255_i32_124 = arith.constant 255 : i32
    %405 = tpu.dynamic_rotate %377 by %c255_i32_124 dim 1 : vector<8x256xf32>, i32 -> vector<8x256xf32>
    %406 = vector.broadcast %43 : vector<1x256xf32> to vector<8x256xf32>
    %407 = arith.mulf %405, %406 : vector<8x256xf32>
    %408 = arith.truncf %407 : vector<8x256xf32> to vector<8x256xbf16>
    %cst_125 = arith.constant dense<0.000000e+00> : vector<8x256xf32>
    %409 = tpu.matmul %14, %408, %cst_125 {dimension_numbers = #tpu.dot_dimension_numbers<[1], [0], [0], [1], [0, 0, 1, 1], [], []>} : vector<8x8xbf16>, vector<8x256xbf16>, vector<8x256xf32> -> vector<8x256xf32>
    %410 = arith.addf %404, %409 : vector<8x256xf32>
    %c241_i32_126 = arith.constant 241 : i32
    %411 = tpu.dynamic_rotate %377 by %c241_i32_126 dim 1 : vector<8x256xf32>, i32 -> vector<8x256xf32>
    %412 = vector.broadcast %44 : vector<1x256xf32> to vector<8x256xf32>
    %413 = arith.mulf %411, %412 : vector<8x256xf32>
    %414 = arith.truncf %413 : vector<8x256xf32> to vector<8x256xbf16>
    %cst_127 = arith.constant dense<0.000000e+00> : vector<8x256xf32>
    %415 = tpu.matmul %16, %414, %cst_127 {dimension_numbers = #tpu.dot_dimension_numbers<[1], [0], [0], [1], [0, 0, 1, 1], [], []>} : vector<8x8xbf16>, vector<8x256xbf16>, vector<8x256xf32> -> vector<8x256xf32>
    %416 = arith.addf %410, %415 : vector<8x256xf32>
    %c240_i32_128 = arith.constant 240 : i32
    %417 = tpu.dynamic_rotate %377 by %c240_i32_128 dim 1 : vector<8x256xf32>, i32 -> vector<8x256xf32>
    %418 = vector.broadcast %45 : vector<1x256xf32> to vector<8x256xf32>
    %419 = arith.mulf %417, %418 : vector<8x256xf32>
    %420 = arith.truncf %419 : vector<8x256xf32> to vector<8x256xbf16>
    %cst_129 = arith.constant dense<0.000000e+00> : vector<8x256xf32>
    %421 = tpu.matmul %18, %420, %cst_129 {dimension_numbers = #tpu.dot_dimension_numbers<[1], [0], [0], [1], [0, 0, 1, 1], [], []>} : vector<8x8xbf16>, vector<8x256xbf16>, vector<8x256xf32> -> vector<8x256xf32>
    %422 = arith.addf %416, %421 : vector<8x256xf32>
    %c239_i32_130 = arith.constant 239 : i32
    %423 = tpu.dynamic_rotate %377 by %c239_i32_130 dim 1 : vector<8x256xf32>, i32 -> vector<8x256xf32>
    %424 = vector.broadcast %46 : vector<1x256xf32> to vector<8x256xf32>
    %425 = arith.mulf %423, %424 : vector<8x256xf32>
    %426 = arith.truncf %425 : vector<8x256xf32> to vector<8x256xbf16>
    %cst_131 = arith.constant dense<0.000000e+00> : vector<8x256xf32>
    %427 = tpu.matmul %20, %426, %cst_131 {dimension_numbers = #tpu.dot_dimension_numbers<[1], [0], [0], [1], [0, 0, 1, 1], [], []>} : vector<8x8xbf16>, vector<8x256xbf16>, vector<8x256xf32> -> vector<8x256xf32>
    %428 = arith.addf %422, %427 : vector<8x256xf32>
    %cst_132 = arith.constant 0.000000e+00 : f32
    %429 = vector.broadcast %cst_132 : f32 to vector<8x256xf32>
    %430 = arith.maximumf %428, %429 : vector<8x256xf32>
    %c17_i32_133 = arith.constant 17 : i32
    %431 = tpu.dynamic_rotate %430 by %c17_i32_133 dim 1 : vector<8x256xf32>, i32 -> vector<8x256xf32>
    %432 = vector.broadcast %39 : vector<1x256xf32> to vector<8x256xf32>
    %433 = arith.mulf %431, %432 : vector<8x256xf32>
    %434 = arith.truncf %433 : vector<8x256xf32> to vector<8x256xbf16>
    %cst_134 = arith.constant dense<0.000000e+00> : vector<8x256xf32>
    %435 = tpu.matmul %22, %434, %cst_134 {dimension_numbers = #tpu.dot_dimension_numbers<[1], [0], [0], [1], [0, 0, 1, 1], [], []>} : vector<8x8xbf16>, vector<8x256xbf16>, vector<8x256xf32> -> vector<8x256xf32>
    %436 = arith.addf %52, %435 : vector<8x256xf32>
    %c16_i32_135 = arith.constant 16 : i32
    %437 = tpu.dynamic_rotate %430 by %c16_i32_135 dim 1 : vector<8x256xf32>, i32 -> vector<8x256xf32>
    %438 = vector.broadcast %40 : vector<1x256xf32> to vector<8x256xf32>
    %439 = arith.mulf %437, %438 : vector<8x256xf32>
    %440 = arith.truncf %439 : vector<8x256xf32> to vector<8x256xbf16>
    %cst_136 = arith.constant dense<0.000000e+00> : vector<8x256xf32>
    %441 = tpu.matmul %24, %440, %cst_136 {dimension_numbers = #tpu.dot_dimension_numbers<[1], [0], [0], [1], [0, 0, 1, 1], [], []>} : vector<8x8xbf16>, vector<8x256xbf16>, vector<8x256xf32> -> vector<8x256xf32>
    %442 = arith.addf %436, %441 : vector<8x256xf32>
    %c15_i32_137 = arith.constant 15 : i32
    %443 = tpu.dynamic_rotate %430 by %c15_i32_137 dim 1 : vector<8x256xf32>, i32 -> vector<8x256xf32>
    %444 = vector.broadcast %41 : vector<1x256xf32> to vector<8x256xf32>
    %445 = arith.mulf %443, %444 : vector<8x256xf32>
    %446 = arith.truncf %445 : vector<8x256xf32> to vector<8x256xbf16>
    %cst_138 = arith.constant dense<0.000000e+00> : vector<8x256xf32>
    %447 = tpu.matmul %26, %446, %cst_138 {dimension_numbers = #tpu.dot_dimension_numbers<[1], [0], [0], [1], [0, 0, 1, 1], [], []>} : vector<8x8xbf16>, vector<8x256xbf16>, vector<8x256xf32> -> vector<8x256xf32>
    %448 = arith.addf %442, %447 : vector<8x256xf32>
    %c1_i32_139 = arith.constant 1 : i32
    %449 = tpu.dynamic_rotate %430 by %c1_i32_139 dim 1 : vector<8x256xf32>, i32 -> vector<8x256xf32>
    %450 = vector.broadcast %42 : vector<1x256xf32> to vector<8x256xf32>
    %451 = arith.mulf %449, %450 : vector<8x256xf32>
    %452 = arith.truncf %451 : vector<8x256xf32> to vector<8x256xbf16>
    %cst_140 = arith.constant dense<0.000000e+00> : vector<8x256xf32>
    %453 = tpu.matmul %28, %452, %cst_140 {dimension_numbers = #tpu.dot_dimension_numbers<[1], [0], [0], [1], [0, 0, 1, 1], [], []>} : vector<8x8xbf16>, vector<8x256xbf16>, vector<8x256xf32> -> vector<8x256xf32>
    %454 = arith.addf %448, %453 : vector<8x256xf32>
    %455 = arith.truncf %430 : vector<8x256xf32> to vector<8x256xbf16>
    %cst_141 = arith.constant dense<0.000000e+00> : vector<8x256xf32>
    %456 = tpu.matmul %30, %455, %cst_141 {dimension_numbers = #tpu.dot_dimension_numbers<[1], [0], [0], [1], [0, 0, 1, 1], [], []>} : vector<8x8xbf16>, vector<8x256xbf16>, vector<8x256xf32> -> vector<8x256xf32>
    %457 = arith.addf %454, %456 : vector<8x256xf32>
    %c255_i32_142 = arith.constant 255 : i32
    %458 = tpu.dynamic_rotate %430 by %c255_i32_142 dim 1 : vector<8x256xf32>, i32 -> vector<8x256xf32>
    %459 = vector.broadcast %43 : vector<1x256xf32> to vector<8x256xf32>
    %460 = arith.mulf %458, %459 : vector<8x256xf32>
    %461 = arith.truncf %460 : vector<8x256xf32> to vector<8x256xbf16>
    %cst_143 = arith.constant dense<0.000000e+00> : vector<8x256xf32>
    %462 = tpu.matmul %32, %461, %cst_143 {dimension_numbers = #tpu.dot_dimension_numbers<[1], [0], [0], [1], [0, 0, 1, 1], [], []>} : vector<8x8xbf16>, vector<8x256xbf16>, vector<8x256xf32> -> vector<8x256xf32>
    %463 = arith.addf %457, %462 : vector<8x256xf32>
    %c241_i32_144 = arith.constant 241 : i32
    %464 = tpu.dynamic_rotate %430 by %c241_i32_144 dim 1 : vector<8x256xf32>, i32 -> vector<8x256xf32>
    %465 = vector.broadcast %44 : vector<1x256xf32> to vector<8x256xf32>
    %466 = arith.mulf %464, %465 : vector<8x256xf32>
    %467 = arith.truncf %466 : vector<8x256xf32> to vector<8x256xbf16>
    %cst_145 = arith.constant dense<0.000000e+00> : vector<8x256xf32>
    %468 = tpu.matmul %34, %467, %cst_145 {dimension_numbers = #tpu.dot_dimension_numbers<[1], [0], [0], [1], [0, 0, 1, 1], [], []>} : vector<8x8xbf16>, vector<8x256xbf16>, vector<8x256xf32> -> vector<8x256xf32>
    %469 = arith.addf %463, %468 : vector<8x256xf32>
    %c240_i32_146 = arith.constant 240 : i32
    %470 = tpu.dynamic_rotate %430 by %c240_i32_146 dim 1 : vector<8x256xf32>, i32 -> vector<8x256xf32>
    %471 = vector.broadcast %45 : vector<1x256xf32> to vector<8x256xf32>
    %472 = arith.mulf %470, %471 : vector<8x256xf32>
    %473 = arith.truncf %472 : vector<8x256xf32> to vector<8x256xbf16>
    %cst_147 = arith.constant dense<0.000000e+00> : vector<8x256xf32>
    %474 = tpu.matmul %36, %473, %cst_147 {dimension_numbers = #tpu.dot_dimension_numbers<[1], [0], [0], [1], [0, 0, 1, 1], [], []>} : vector<8x8xbf16>, vector<8x256xbf16>, vector<8x256xf32> -> vector<8x256xf32>
    %475 = arith.addf %469, %474 : vector<8x256xf32>
    %c239_i32_148 = arith.constant 239 : i32
    %476 = tpu.dynamic_rotate %430 by %c239_i32_148 dim 1 : vector<8x256xf32>, i32 -> vector<8x256xf32>
    %477 = vector.broadcast %46 : vector<1x256xf32> to vector<8x256xf32>
    %478 = arith.mulf %476, %477 : vector<8x256xf32>
    %479 = arith.truncf %478 : vector<8x256xf32> to vector<8x256xbf16>
    %cst_149 = arith.constant dense<0.000000e+00> : vector<8x256xf32>
    %480 = tpu.matmul %38, %479, %cst_149 {dimension_numbers = #tpu.dot_dimension_numbers<[1], [0], [0], [1], [0, 0, 1, 1], [], []>} : vector<8x8xbf16>, vector<8x256xbf16>, vector<8x256xf32> -> vector<8x256xf32>
    %481 = arith.addf %475, %480 : vector<8x256xf32>
    %482 = arith.addf %375, %481 : vector<8x256xf32>
    %c0_150 = arith.constant 0 : index
    %c0_151 = arith.constant 0 : index
    %c0_152 = arith.constant 0 : index
    %483 = vector.load %arg7[%c0_150, %c0_151, %c0_152] : memref<1x8x256xf32, #tpu.memory_space<vmem>>, vector<1x8x256xf32>
    %484 = vector.shape_cast %483 : vector<1x8x256xf32> to vector<8x256xf32>
    %485 = vector.shape_cast %482 : vector<8x256xf32> to vector<1x8x256xf32>
    tpu.vector_store %arg7[%c0_150, %c0_151, %c0_152], %485 {strides = array<i32>} : memref<1x8x256xf32, #tpu.memory_space<vmem>>, vector<1x8x256xf32>,
    return
  }
  func.func @transform_0(%arg0: i32) -> (i32, i32, i32) {
    %c0_i32 = arith.constant 0 : i32
    %c0_i32_0 = arith.constant 0 : i32
    %c0_i32_1 = arith.constant 0 : i32
    return %arg0, %c0_i32, %c0_i32_0 : i32, i32, i32
  }
  func.func @transform_1(%arg0: i32) -> (i32, i32, i32) {
    %c0_i32 = arith.constant 0 : i32
    %c0_i32_0 = arith.constant 0 : i32
    %c0_i32_1 = arith.constant 0 : i32
    %c0_i32_2 = arith.constant 0 : i32
    return %c0_i32, %c0_i32_0, %c0_i32_1 : i32, i32, i32
  }
  func.func @transform_2(%arg0: i32) -> (i32, i32) {
    %c0_i32 = arith.constant 0 : i32
    %c0_i32_0 = arith.constant 0 : i32
    %c0_i32_1 = arith.constant 0 : i32
    return %c0_i32, %c0_i32_0 : i32, i32
  }
  func.func @transform_3(%arg0: i32) -> (i32, i32, i32) {
    %c0_i32 = arith.constant 0 : i32
    %c0_i32_0 = arith.constant 0 : i32
    %c0_i32_1 = arith.constant 0 : i32
    %c0_i32_2 = arith.constant 0 : i32
    return %c0_i32, %c0_i32_0, %c0_i32_1 : i32, i32, i32
  }
  func.func @transform_4(%arg0: i32) -> (i32, i32) {
    %c0_i32 = arith.constant 0 : i32
    %c0_i32_0 = arith.constant 0 : i32
    %c0_i32_1 = arith.constant 0 : i32
    return %c0_i32, %c0_i32_0 : i32, i32
  }
  func.func @transform_5(%arg0: i32) -> (i32, i32) {
    %c0_i32 = arith.constant 0 : i32
    %c0_i32_0 = arith.constant 0 : i32
    %c0_i32_1 = arith.constant 0 : i32
    return %c0_i32, %c0_i32_0 : i32, i32
  }
  func.func @transform_6(%arg0: i32) -> (i32, i32, i32) {
    %c0_i32 = arith.constant 0 : i32
    %c0_i32_0 = arith.constant 0 : i32
    %c0_i32_1 = arith.constant 0 : i32
    return %arg0, %c0_i32, %c0_i32_0 : i32, i32, i32
  }
}

</mosaic_0001>

<llo_original>
// kernel: tpu_custom_call.1
$region0: #{tpu_custom_call.1}
  #allocation0 [shape = 'u32[]', space=smem, size = 0x4, offset = 0x4, fixed_abs, tag = 'smem constant byte address 0x4 - core index']
  #allocation1 [shape = 'u32[144,128]{1,0:T(1,128)}', space=vmem, size = 0x12000, scoped, tag = 'internal scratch']
  %s0 = inlined_call_operand.vmem [shape: f32[2,8,256], index: 0, kind: input, shape index: {}]
  %s1 = inlined_call_operand.vmem [shape: bf16[9,8,8], index: 1, kind: input, shape index: {}]
  %s2 = inlined_call_operand.vmem [shape: f32[8,1], index: 2, kind: input, shape index: {}]
  %s3 = inlined_call_operand.vmem [shape: bf16[9,8,8], index: 3, kind: input, shape index: {}]
  %s4 = inlined_call_operand.vmem [shape: f32[8,1], index: 4, kind: input, shape index: {}]
  %s5 = inlined_call_operand.vmem [shape: f32[9,256], index: 5, kind: input, shape index: {}]
  %s6 = inlined_call_operand.hbm [shape: f32[2,8,256], index: 6, kind: output, shape index: {}]
  %s7 = sld [smem:[#allocation0]]
  $region57: #{tpu_custom_call.1} parent=0
    _
  %s9 = ssub.s32 1, %s7
  %s10 = scalar_select 0, %s9, %s7
  $region1: #{tpu_custom_call.1} parent=0
    #allocation2 [shape = 'u8[16384]{0}', space=vmem, size = 0x4000, scoped, tag = 'output window, operand 0']
    #allocation3 [shape = 's32[2]{0}', space=sflag, size = 0x8, scoped, tag = 'scoped memory for tpu_custom_call.1']
    %11 = vsyncpa [#allocation3], 0
    %s12 = scalar_lea.sflag [#allocation3], 1
    %13 = vsyncpa %s12, 0
    loop: start=0, step=1, limit=4
    $region2: #{tpu_custom_call.1} parent=1 // loop_pre_header
      _
    $region3: #{tpu_custom_call.1} parent=1 // loop_header
      %s15 = sphi 0, %s19
      %p16 = scmp.ge.s32.totalorder %s15, 4
      %s25 = sphi 0, %s27
      %s28 = sphi 0, %s25
      %s29 = sphi 0, %s28
      %s45 = sphi 0, %s29
      %s49 = sphi 0, %s49
      %s51 = sphi 0, %s49
      %s52 = sphi 0, %s51
      %s66 = sphi 0, %s52
      %s70 = sphi 0, %s70
      %s72 = sphi 0, %s70
      %s73 = sphi 0, %s72
      %s87 = sphi 0, %s73
      %s91 = sphi 0, %s91
      %s93 = sphi 0, %s91
      %s94 = sphi 0, %s93
      %s108 = sphi 0, %s94
      %s112 = sphi 0, %s112
      %s114 = sphi 0, %s112
      %s115 = sphi 0, %s114
      %s129 = sphi 0, %s115
      %s133 = sphi 0, %s133
      %s135 = sphi 0, %s133
      %s136 = sphi 0, %s135
      %s150 = sphi 0, %s136
      %s156 = sphi 0, %s158
      %s159 = sphi 0, %s156
      %s160 = sphi 0, %s159
      %s176 = sphi 0, %s160
    $region4: #{tpu_custom_call.1} parent=1 // loop_header_branch
      %18 = sbr.rel (%p16) target = $region8
    $region5: #{tpu_custom_call.1} parent=1 // loop_body
      %s20 = ssub.s32 %s15, 1
      %s21 = ssub.s32 %s15, 2
      %s22 = sadd.s32 %s15, 1
      %s23 = ssub.s32 %s15, %s22
      %p24 = scmp.eq.s32.totalorder %s23, 0
      %s26 = sadd.s32 %s25, 1
      %s27 = scalar_select %p24, %s25, %s26
      %p30 = pneg %p24
      %p31 = scmp.eq.s32.totalorder %s15, 1
      %p32 = por %p30, %p31
      %p33 = scmp.ne.s32.totalorder %s25, %s28
      %p34 = scmp.eq.s32.totalorder %s15, 0
      %p35 = por %p33, %p34
      %p36 = scmp.ne.s32.totalorder %s25, %s28
      %p37 = scmp.eq.s32.totalorder %s20, 1
      %p38 = por %p36, %p37
      %p39 = scmp.ne.s32.totalorder %s28, %s29
      %p40 = scmp.eq.s32.totalorder %s20, 0
      %p41 = por %p39, %p40
      %p42 = scmp.ne.s32.totalorder %s28, %s29
      %p43 = scmp.eq.s32.totalorder %s21, 1
      %p44 = por %p42, %p43
      %p46 = scmp.ne.s32.totalorder %s29, %s45
      %p47 = scmp.eq.s32.totalorder %s21, 0
      %p48 = por %p46, %p47
      %s50 = sadd.s32 %s49, 1
      %p53 = scmp.eq.s32.totalorder %s15, 1
      %p54 = scmp.ne.s32.totalorder %s49, %s51
      %p55 = scmp.eq.s32.totalorder %s15, 0
      %p56 = por %p54, %p55
      %p57 = scmp.ne.s32.totalorder %s49, %s51
      %p58 = scmp.eq.s32.totalorder %s20, 1
      %p59 = por %p57, %p58
      %p60 = scmp.ne.s32.totalorder %s51, %s52
      %p61 = scmp.eq.s32.totalorder %s20, 0
      %p62 = por %p60, %p61
      %p63 = scmp.ne.s32.totalorder %s51, %s52
      %p64 = scmp.eq.s32.totalorder %s21, 1
      %p65 = por %p63, %p64
      %p67 = scmp.ne.s32.totalorder %s52, %s66
      %p68 = scmp.eq.s32.totalorder %s21, 0
      %p69 = por %p67, %p68
      %s71 = sadd.s32 %s70, 1
      %p74 = scmp.eq.s32.totalorder %s15, 1
      %p75 = scmp.ne.s32.totalorder %s70, %s72
      %p76 = scmp.eq.s32.totalorder %s15, 0
      %p77 = por %p75, %p76
      %p78 = scmp.ne.s32.totalorder %s70, %s72
      %p79 = scmp.eq.s32.totalorder %s20, 1
      %p80 = por %p78, %p79
      %p81 = scmp.ne.s32.totalorder %s72, %s73
      %p82 = scmp.eq.s32.totalorder %s20, 0
      %p83 = por %p81, %p82
      %p84 = scmp.ne.s32.totalorder %s72, %s73
      %p85 = scmp.eq.s32.totalorder %s21, 1
      %p86 = por %p84, %p85
      %p88 = scmp.ne.s32.totalorder %s73, %s87
      %p89 = scmp.eq.s32.totalorder %s21, 0
      %p90 = por %p88, %p89
      %s92 = sadd.s32 %s91, 1
      %p95 = scmp.eq.s32.totalorder %s15, 1
      %p96 = scmp.ne.s32.totalorder %s91, %s93
      %p97 = scmp.eq.s32.totalorder %s15, 0
      %p98 = por %p96, %p97
      %p99 = scmp.ne.s32.totalorder %s91, %s93
      %p100 = scmp.eq.s32.totalorder %s20, 1
      %p101 = por %p99, %p100
      %p102 = scmp.ne.s32.totalorder %s93, %s94
      %p103 = scmp.eq.s32.totalorder %s20, 0
      %p104 = por %p102, %p103
      %p105 = scmp.ne.s32.totalorder %s93, %s94
      %p106 = scmp.eq.s32.totalorder %s21, 1
      %p107 = por %p105, %p106
      %p109 = scmp.ne.s32.totalorder %s94, %s108
      %p110 = scmp.eq.s32.totalorder %s21, 0
      %p111 = por %p109, %p110
      %s113 = sadd.s32 %s112, 1
      %p116 = scmp.eq.s32.totalorder %s15, 1
      %p117 = scmp.ne.s32.totalorder %s112, %s114
      %p118 = scmp.eq.s32.totalorder %s15, 0
      %p119 = por %p117, %p118
      %p120 = scmp.ne.s32.totalorder %s112, %s114
      %p121 = scmp.eq.s32.totalorder %s20, 1
      %p122 = por %p120, %p121
      %p123 = scmp.ne.s32.totalorder %s114, %s115
      %p124 = scmp.eq.s32.totalorder %s20, 0
      %p125 = por %p123, %p124
      %p126 = scmp.ne.s32.totalorder %s114, %s115
      %p127 = scmp.eq.s32.totalorder %s21, 1
      %p128 = por %p126, %p127
      %p130 = scmp.ne.s32.totalorder %s115, %s129
      %p131 = scmp.eq.s32.totalorder %s21, 0
      %p132 = por %p130, %p131
      %s134 = sadd.s32 %s133, 1
      %p137 = scmp.eq.s32.totalorder %s15, 1
      %p138 = scmp.ne.s32.totalorder %s133, %s135
      %p139 = scmp.eq.s32.totalorder %s15, 0
      %p140 = por %p138, %p139
      %p141 = scmp.ne.s32.totalorder %s133, %s135
      %p142 = scmp.eq.s32.totalorder %s20, 1
      %p143 = por %p141, %p142
      %p144 = scmp.ne.s32.totalorder %s135, %s136
      %p145 = scmp.eq.s32.totalorder %s20, 0
      %p146 = por %p144, %p145
      %p147 = scmp.ne.s32.totalorder %s135, %s136
      %p148 = scmp.eq.s32.totalorder %s21, 1
      %p149 = por %p147, %p148
      %p151 = scmp.ne.s32.totalorder %s136, %s150
      %p152 = scmp.eq.s32.totalorder %s21, 0
      %p153 = por %p151, %p152
      %s154 = ssub.s32 %s15, %s22
      %p155 = scmp.eq.s32.totalorder %s154, 0
      %s157 = sadd.s32 %s156, 1
      %s158 = scalar_select %p155, %s156, %s157
      %p161 = pneg %p155
      %p162 = scmp.eq.s32.totalorder %s15, 1
      %p163 = por %p161, %p162
      %p164 = scmp.ne.s32.totalorder %s156, %s159
      %p165 = scmp.eq.s32.totalorder %s15, 0
      %p166 = por %p164, %p165
      %p167 = scmp.ne.s32.totalorder %s156, %s159
      %p168 = scmp.eq.s32.totalorder %s20, 1
      %p169 = por %p167, %p168
      %p170 = scmp.ne.s32.totalorder %s159, %s160
      %p171 = scmp.eq.s32.totalorder %s20, 0
      %p172 = por %p170, %p171
      %p173 = scmp.ne.s32.totalorder %s159, %s160
      %p174 = scmp.eq.s32.totalorder %s21, 1
      %p175 = por %p173, %p174
      %p177 = scmp.ne.s32.totalorder %s160, %s176
      %p178 = scmp.eq.s32.totalorder %s21, 0
      %p179 = por %p177, %p178
      %p180 = scmp.le.s32.totalorder 1, %s15
      %p181 = scmp.lt.s32.totalorder %s15, 3
      %p182 = pnand %p180, %p181
      %p183 = pneg %p182
      // Predicated region
      $region9: #{tpu_custom_call.1} parent=5 // pred_check
        _
      $region10: #{tpu_custom_call.1} parent=5 // pred_check_branch
        %185 = sbr.rel (%p182) target = $region12
      $region11: #{tpu_custom_call.1} parent=5 // pred_region
        %s186 = ssub.s32 %s15, 1
        // Predicated region
        $region13: #{tpu_custom_call.1} parent=11 // pred_check
          %p187 = pneg %p62
        $region14: #{tpu_custom_call.1} parent=11 // pred_check_branch
          %189 = sbr.rel (%p187) target = $region16
        $region15: #{tpu_custom_call.1} parent=11 // pred_region
          _
        $region16: #{tpu_custom_call.1} parent=11 // pred_fallthru
          _
        // Predicated region
        $region17: #{tpu_custom_call.1} parent=11 // pred_check
          %p190 = pneg %p83
        $region18: #{tpu_custom_call.1} parent=11 // pred_check_branch
          %192 = sbr.rel (%p190) target = $region20
        $region19: #{tpu_custom_call.1} parent=11 // pred_region
          _
        $region20: #{tpu_custom_call.1} parent=11 // pred_fallthru
          _
        // Predicated region
        $region21: #{tpu_custom_call.1} parent=11 // pred_check
          %p193 = pneg %p104
        $region22: #{tpu_custom_call.1} parent=11 // pred_check_branch
          %195 = sbr.rel (%p193) target = $region24
        $region23: #{tpu_custom_call.1} parent=11 // pred_region
          _
        $region24: #{tpu_custom_call.1} parent=11 // pred_fallthru
          _
        // Predicated region
        $region25: #{tpu_custom_call.1} parent=11 // pred_check
          %p196 = pneg %p125
        $region26: #{tpu_custom_call.1} parent=11 // pred_check_branch
          %198 = sbr.rel (%p196) target = $region28
        $region27: #{tpu_custom_call.1} parent=11 // pred_region
          _
        $region28: #{tpu_custom_call.1} parent=11 // pred_fallthru
          _
        // Predicated region
        $region29: #{tpu_custom_call.1} parent=11 // pred_check
          %p199 = pneg %p146
        $region30: #{tpu_custom_call.1} parent=11 // pred_check_branch
          %201 = sbr.rel (%p199) target = $region32
        $region31: #{tpu_custom_call.1} parent=11 // pred_region
          _
        $region32: #{tpu_custom_call.1} parent=11 // pred_fallthru
          _
      $region12: #{tpu_custom_call.1} parent=5 // pred_fallthru
        _
      %p202 = scmp.lt.s32.totalorder %s15, 2
      // Predicated region
      $region33: #{tpu_custom_call.1} parent=5 // pred_check
        %p203 = pneg %p202
      $region34: #{tpu_custom_call.1} parent=5 // pred_check_branch
        %205 = sbr.rel (%p203) target = $region36
      $region35: #{tpu_custom_call.1} parent=5 // pred_region
        // Predicated region
        $region37: #{tpu_custom_call.1} parent=35 // pred_check
          %p206 = pneg %p35
        $region38: #{tpu_custom_call.1} parent=35 // pred_check_branch
          %208 = sbr.rel (%p206) target = $region40
        $region39: #{tpu_custom_call.1} parent=35 // pred_region
          %p209 = scmp.lt.s32.totalorder %s15, 1
          %s210 = scalar_select %p209, %s15, 1
          %s211 = smul.addr %s210, 2
          %s212 = smul.addr %s211, 8
          %s213 = scalar_lea.vmem %s0, %s212
        $region40: #{tpu_custom_call.1} parent=35 // pred_fallthru
          _
      $region36: #{tpu_custom_call.1} parent=5 // pred_fallthru
        _
      %p214 = scmp.le.s32.totalorder 1, %s15
      %p215 = scmp.lt.s32.totalorder %s15, 3
      %p216 = pnand %p214, %p215
      %p217 = pneg %p216
      // Predicated region
      $region41: #{tpu_custom_call.1} parent=5 // pred_check
        _
      $region42: #{tpu_custom_call.1} parent=5 // pred_check_branch
        %219 = sbr.rel (%p216) target = $region44
      $region43: #{tpu_custom_call.1} parent=5 // pred_region
        %s220 = ssub.s32 %s15, 1
        %p221 = scmp.lt.s32.totalorder %s20, 1
        %s222 = scalar_select %p221, %s20, 1
        %s223 = smul.addr %s222, 2
        %s224 = smul.addr %s223, 8
        %s225 = scalar_lea.vmem %s0, %s224
        %p226 = pneg %p41
        %p227 = pneg %p38
        %p228 = pneg %p62
        %p229 = pneg %p59
        %p230 = pneg %p83
        %p231 = pneg %p80
        %p232 = pneg %p104
        %p233 = pneg %p101
        %p234 = pneg %p125
        %p235 = pneg %p122
        %p236 = pneg %p146
        %p237 = pneg %p143
        %p238 = pneg %p172
        %p239 = pneg %p169
        %s240 = sand.u32 %s159, 1
        %s241 = scalar_lea.sflag [#allocation3], %s240
        %s242 = sand.u32 %s159, 1
        %s243 = smul.addr %s242, 16
        %s244 = scalar_lea.vmem [#allocation2], %s243
        %p245 = scmp.lt.s32.totalorder %s20, 1
        %s246 = scalar_select %p245, %s20, 1
        %s247 = smul.addr %s246, 2
        %s248 = smul.addr %s247, 8
        %s249 = scalar_lea.vmem %s0, %s248
        %v251 = vld [vmem:[%s1] sm:$0xf]
        %v252 = vld [vmem:[%s1 + $0x4] sm:$0xf]
        %v253 = vld [vmem:[%s1 + $0x8] sm:$0xf]
        %v254 = vld [vmem:[%s1 + $0xc] sm:$0xf]
        %v255 = vld [vmem:[%s1 + $0x10] sm:$0xf]
        %v256 = vld [vmem:[%s1 + $0x14] sm:$0xf]
        %v257 = vld [vmem:[%s1 + $0x18] sm:$0xf]
        %v258 = vld [vmem:[%s1 + $0x1c] sm:$0xf]
        %v259 = vld [vmem:[%s1 + $0x20] sm:$0xf]
        %v260 = vld [vmem:[%s3] sm:$0xf]
        %v261 = vld [vmem:[%s3 + $0x4] sm:$0xf]
        %v262 = vld [vmem:[%s3 + $0x8] sm:$0xf]
        %v263 = vld [vmem:[%s3 + $0xc] sm:$0xf]
        %v264 = vld [vmem:[%s3 + $0x10] sm:$0xf]
        %v265 = vld [vmem:[%s3 + $0x14] sm:$0xf]
        %v266 = vld [vmem:[%s3 + $0x18] sm:$0xf]
        %v267 = vld [vmem:[%s3 + $0x1c] sm:$0xf]
        %v268 = vld [vmem:[%s3 + $0x20] sm:$0xf]
        %v269 = vld [vmem:[%s5] sm:$0xff]
        %v270 = vld [vmem:[%s5 + $0x8] sm:$0xff]
        %v271 = vld [vmem:[%s5 + $0x10] sm:$0x1]
        %v272 = vld [vmem:[%s5 + $0x18] sm:$0x1]
        %v273 = vld [vmem:[%s2] sm:$0xff]
        %275 = vset.pattern.permute.xlu0 0
        %276 = vperm.xlu0 %275, %v273
        %v277 = vpop.permute.xlu0 %276
        %v279 = vld [vmem:[%s4] sm:$0xff]
        %281 = vset.pattern.permute.xlu0 0
        %282 = vperm.xlu0 %281, %v279
        %v283 = vpop.permute.xlu0 %282
        %v285 = vld [vmem:[%s249] sm:$0xff]
        %v286 = vld [vmem:[%s249 + $0x8] sm:$0xff]
        %v287 = vmax.f32 %v285, 0.0
        %v288 = vmax.f32 %v286, 0.0
        %289 = vrot.lane.b32.xlu0 %v287, 17
        %v290 = vpop.permute.xlu0 %289
        %291 = vrot.lane.b32.xlu0 %v288, 17
        %v292 = vpop.permute.xlu0 %291
        %v293 = vlaneseq
        %v294 = vand.u32 %v293, 127
        %vm295 = vcmp.lt.s32.totalorder %v294, 17
        %v296 = vsel %vm295, %v290, %v292
        %v297 = vsel %vm295, %v292, %v290
        %v298 = vlaneseq
        %v299 = vshrl.u32 %v298, 7
        %v300 = vsub.s32 0, %v299
        %v301 = vrot.slane %v269, %v300
        %v302 = vlaneseq
        %v303 = vshrl.u32 %v302, 7
        %v304 = vsub.s32 0, %v303
        %v305 = vrot.slane %v270, %v304
        %v306 = vmul.f32 %v297, %v301
        %v307 = vmul.f32 %v296, %v305
        %v308 = vpack.c.bf16 %v306, %v306
        %v309 = vpack.c.bf16 %v307, %v307
        %vm310 = vcmask 64512
        %v312 = vsel %vm310, %v251, 0
        %vm314 = vcmask 1043456
        %v316 = vsel %vm314, %v308, 0
        %v319 = vsel %vm314, %v309, 0
        %321 = vmatprep.subr.bf16.mxu0 %v319
        %322 = vmatpush1.bf16.msra.mxu0 %v316
        %323 = vmatprep.subr.bf16.mxu0 0
        %324 = vmatpush1.bf16.msra.mxu0 0
        %325 = vmatprep.subr.bf16.mxu0 0
        %326 = vmatpush1.bf16.msra.mxu0 0
        %327 = vmatprep.subr.bf16.mxu0 0
        %328 = vmatpush1.bf16.msra.mxu0 0
        %329 = vmatprep.subr.bf16.mxu0 0
        %330 = vmatpush1.bf16.msra.mxu0 0
        %331 = vmatprep.subr.bf16.mxu0 0
        %332 = vmatpush1.bf16.msra.mxu0 0
        %333 = vmatprep.subr.bf16.mxu0 0
        %334 = vmatpush1.bf16.msra.mxu0 0
        %335 = vmatprep.subr.bf16.mxu0 0
        %336 = vmatpush1.bf16.msra.mxu0 0
        %337 = vmatprep.subr.bf16.mxu0 0
        %338 = vmatpush1.bf16.msra.mxu0 0
        %339 = vmatprep.subr.bf16.mxu0 0
        %340 = vmatpush1.bf16.msra.mxu0 0
        %341 = vmatprep.subr.bf16.mxu0 0
        %342 = vmatpush1.bf16.msra.mxu0 0
        %343 = vmatprep.subr.bf16.mxu0 0
        %344 = vmatpush1.bf16.msra.mxu0 0
        %345 = vmatprep.subr.bf16.mxu0 0
        %346 = vmatpush1.bf16.msra.mxu0 0
        %347 = vmatprep.subr.bf16.mxu0 0
        %348 = vmatpush1.bf16.msra.mxu0 0
        %349 = vmatprep.subr.bf16.mxu0 0
        %350 = vmatpush1.bf16.msra.mxu0 0
        %351 = vmatprep.subr.bf16.mxu0 0
        %352 = vmatpush1.bf16.msra.mxu0 0
        %353 = vmatprep.mubr.bf16.mxu0 0
        %354 = vmatmul.mubr.bf16.gmra.mrb[0].mxu0 %v312
        %v355 = vpop.f32.mrb[0].mxu0
        %v356 = vadd.f32 0.0, %v355
        %v357 = vpop.f32.mrb[0].mxu0
        %v358 = vadd.f32 0.0, %v357
        %v359 = vpop.f32.mrb[0].mxu0
        %v360 = vpop.f32.mrb[0].mxu0
        %361 = vdwg.mxu0
        %v362 = vadd.f32 %v277, %v356
        %v363 = vadd.f32 %v277, %v358
        %364 = vrot.lane.b32.xlu0 %v287, 16
        %v365 = vpop.permute.xlu0 %364
        %366 = vrot.lane.b32.xlu0 %v288, 16
        %v367 = vpop.permute.xlu0 %366
        %vm368 = vcmp.lt.s32.totalorder %v294, 16
        %v369 = vsel %vm368, %v365, %v367
        %v370 = vsel %vm368, %v367, %v365
        %v371 = vlaneseq
        %v372 = vshrl.u32 %v371, 7
        %v373 = vsub.s32 1, %v372
        %v374 = vrot.slane %v269, %v373
        %v375 = vlaneseq
        %v376 = vshrl.u32 %v375, 7
        %v377 = vsub.s32 1, %v376
        %v378 = vrot.slane %v270, %v377
        %v379 = vmul.f32 %v370, %v374
        %v380 = vmul.f32 %v369, %v378
        %v381 = vpack.c.bf16 %v379, %v379
        %v382 = vpack.c.bf16 %v380, %v380
        %v384 = vsel %vm310, %v252, 0
        %v387 = vsel %vm314, %v381, 0
        %v390 = vsel %vm314, %v382, 0
        %392 = vmatprep.subr.bf16.mxu0 %v390
        %393 = vmatpush1.bf16.msra.mxu0 %v387
        %394 = vmatprep.subr.bf16.mxu0 0
        %395 = vmatpush1.bf16.msra.mxu0 0
        %396 = vmatprep.subr.bf16.mxu0 0
        %397 = vmatpush1.bf16.msra.mxu0 0
        %398 = vmatprep.subr.bf16.mxu0 0
        %399 = vmatpush1.bf16.msra.mxu0 0
        %400 = vmatprep.subr.bf16.mxu0 0
        %401 = vmatpush1.bf16.msra.mxu0 0
        %402 = vmatprep.subr.bf16.mxu0 0
        %403 = vmatpush1.bf16.msra.mxu0 0
        %404 = vmatprep.subr.bf16.mxu0 0
        %405 = vmatpush1.bf16.msra.mxu0 0
        %406 = vmatprep.subr.bf16.mxu0 0
        %407 = vmatpush1.bf16.msra.mxu0 0
        %408 = vmatprep.subr.bf16.mxu0 0
        %409 = vmatpush1.bf16.msra.mxu0 0
        %410 = vmatprep.subr.bf16.mxu0 0
        %411 = vmatpush1.bf16.msra.mxu0 0
        %412 = vmatprep.subr.bf16.mxu0 0
        %413 = vmatpush1.bf16.msra.mxu0 0
        %414 = vmatprep.subr.bf16.mxu0 0
        %415 = vmatpush1.bf16.msra.mxu0 0
        %416 = vmatprep.subr.bf16.mxu0 0
        %417 = vmatpush1.bf16.msra.mxu0 0
        %418 = vmatprep.subr.bf16.mxu0 0
        %419 = vmatpush1.bf16.msra.mxu0 0
        %420 = vmatprep.subr.bf16.mxu0 0
        %421 = vmatpush1.bf16.msra.mxu0 0
        %422 = vmatprep.subr.bf16.mxu0 0
        %423 = vmatpush1.bf16.msra.mxu0 0
        %424 = vmatprep.mubr.bf16.mxu0 0
        %425 = vmatmul.mubr.bf16.gmra.mrb[0].mxu0 %v384
        %v426 = vpop.f32.mrb[0].mxu0
        %v427 = vadd.f32 0.0, %v426
        %v428 = vpop.f32.mrb[0].mxu0
        %v429 = vadd.f32 0.0, %v428
        %v430 = vpop.f32.mrb[0].mxu0
        %v431 = vpop.f32.mrb[0].mxu0
        %432 = vdwg.mxu0
        %v433 = vadd.f32 %v362, %v427
        %v434 = vadd.f32 %v363, %v429
        %435 = vrot.lane.b32.xlu0 %v287, 15
        %v436 = vpop.permute.xlu0 %435
        %437 = vrot.lane.b32.xlu0 %v288, 15
        %v438 = vpop.permute.xlu0 %437
        %vm439 = vcmp.lt.s32.totalorder %v294, 15
        %v440 = vsel %vm439, %v436, %v438
        %v441 = vsel %vm439, %v438, %v436
        %v442 = vlaneseq
        %v443 = vshrl.u32 %v442, 7
        %v444 = vsub.s32 2, %v443
        %v445 = vrot.slane %v269, %v444
        %v446 = vlaneseq
        %v447 = vshrl.u32 %v446, 7
        %v448 = vsub.s32 2, %v447
        %v449 = vrot.slane %v270, %v448
        %v450 = vmul.f32 %v441, %v445
        %v451 = vmul.f32 %v440, %v449
        %v452 = vpack.c.bf16 %v450, %v450
        %v453 = vpack.c.bf16 %v451, %v451
        %v455 = vsel %vm310, %v253, 0
        %v458 = vsel %vm314, %v452, 0
        %v461 = vsel %vm314, %v453, 0
        %463 = vmatprep.subr.bf16.mxu0 %v461
        %464 = vmatpush1.bf16.msra.mxu0 %v458
        %465 = vmatprep.subr.bf16.mxu0 0
        %466 = vmatpush1.bf16.msra.mxu0 0
        %467 = vmatprep.subr.bf16.mxu0 0
        %468 = vmatpush1.bf16.msra.mxu0 0
        %469 = vmatprep.subr.bf16.mxu0 0
        %470 = vmatpush1.bf16.msra.mxu0 0
        %471 = vmatprep.subr.bf16.mxu0 0
        %472 = vmatpush1.bf16.msra.mxu0 0
        %473 = vmatprep.subr.bf16.mxu0 0
        %474 = vmatpush1.bf16.msra.mxu0 0
        %475 = vmatprep.subr.bf16.mxu0 0
        %476 = vmatpush1.bf16.msra.mxu0 0
        %477 = vmatprep.subr.bf16.mxu0 0
        %478 = vmatpush1.bf16.msra.mxu0 0
        %479 = vmatprep.subr.bf16.mxu0 0
        %480 = vmatpush1.bf16.msra.mxu0 0
        %481 = vmatprep.subr.bf16.mxu0 0
        %482 = vmatpush1.bf16.msra.mxu0 0
        %483 = vmatprep.subr.bf16.mxu0 0
        %484 = vmatpush1.bf16.msra.mxu0 0
        %485 = vmatprep.subr.bf16.mxu0 0
        %486 = vmatpush1.bf16.msra.mxu0 0
        %487 = vmatprep.subr.bf16.mxu0 0
        %488 = vmatpush1.bf16.msra.mxu0 0
        %489 = vmatprep.subr.bf16.mxu0 0
        %490 = vmatpush1.bf16.msra.mxu0 0
        %491 = vmatprep.subr.bf16.mxu0 0
        %492 = vmatpush1.bf16.msra.mxu0 0
        %493 = vmatprep.subr.bf16.mxu0 0
        %494 = vmatpush1.bf16.msra.mxu0 0
        %495 = vmatprep.mubr.bf16.mxu0 0
        %496 = vmatmul.mubr.bf16.gmra.mrb[0].mxu0 %v455
        %v497 = vpop.f32.mrb[0].mxu0
        %v498 = vadd.f32 0.0, %v497
        %v499 = vpop.f32.mrb[0].mxu0
        %v500 = vadd.f32 0.0, %v499
        %v501 = vpop.f32.mrb[0].mxu0
        %v502 = vpop.f32.mrb[0].mxu0
        %503 = vdwg.mxu0
        %v504 = vadd.f32 %v433, %v498
        %v505 = vadd.f32 %v434, %v500
        %506 = vrot.lane.b32.xlu0 %v287, 1
        %v507 = vpop.permute.xlu0 %506
        %508 = vrot.lane.b32.xlu0 %v288, 1
        %v509 = vpop.permute.xlu0 %508
        %vm510 = vcmp.lt.s32.totalorder %v294, 1
        %v511 = vsel %vm510, %v507, %v509
        %v512 = vsel %vm510, %v509, %v507
        %v513 = vlaneseq
        %v514 = vshrl.u32 %v513, 7
        %v515 = vsub.s32 3, %v514
        %v516 = vrot.slane %v269, %v515
        %v517 = vlaneseq
        %v518 = vshrl.u32 %v517, 7
        %v519 = vsub.s32 3, %v518
        %v520 = vrot.slane %v270, %v519
        %v521 = vmul.f32 %v512, %v516
        %v522 = vmul.f32 %v511, %v520
        %v523 = vpack.c.bf16 %v521, %v521
        %v524 = vpack.c.bf16 %v522, %v522
        %v526 = vsel %vm310, %v254, 0
        %v529 = vsel %vm314, %v523, 0
        %v532 = vsel %vm314, %v524, 0
        %534 = vmatprep.subr.bf16.mxu0 %v532
        %535 = vmatpush1.bf16.msra.mxu0 %v529
        %536 = vmatprep.subr.bf16.mxu0 0
        %537 = vmatpush1.bf16.msra.mxu0 0
        %538 = vmatprep.subr.bf16.mxu0 0
        %539 = vmatpush1.bf16.msra.mxu0 0
        %540 = vmatprep.subr.bf16.mxu0 0
        %541 = vmatpush1.bf16.msra.mxu0 0
        %542 = vmatprep.subr.bf16.mxu0 0
        %543 = vmatpush1.bf16.msra.mxu0 0
        %544 = vmatprep.subr.bf16.mxu0 0
        %545 = vmatpush1.bf16.msra.mxu0 0
        %546 = vmatprep.subr.bf16.mxu0 0
        %547 = vmatpush1.bf16.msra.mxu0 0
        %548 = vmatprep.subr.bf16.mxu0 0
        %549 = vmatpush1.bf16.msra.mxu0 0
        %550 = vmatprep.subr.bf16.mxu0 0
        %551 = vmatpush1.bf16.msra.mxu0 0
        %552 = vmatprep.subr.bf16.mxu0 0
        %553 = vmatpush1.bf16.msra.mxu0 0
        %554 = vmatprep.subr.bf16.mxu0 0
        %555 = vmatpush1.bf16.msra.mxu0 0
        %556 = vmatprep.subr.bf16.mxu0 0
        %557 = vmatpush1.bf16.msra.mxu0 0
        %558 = vmatprep.subr.bf16.mxu0 0
        %559 = vmatpush1.bf16.msra.mxu0 0
        %560 = vmatprep.subr.bf16.mxu0 0
        %561 = vmatpush1.bf16.msra.mxu0 0
        %562 = vmatprep.subr.bf16.mxu0 0
        %563 = vmatpush1.bf16.msra.mxu0 0
        %564 = vmatprep.subr.bf16.mxu0 0
        %565 = vmatpush1.bf16.msra.mxu0 0
        %566 = vmatprep.mubr.bf16.mxu0 0
        %567 = vmatmul.mubr.bf16.gmra.mrb[0].mxu0 %v526
        %v568 = vpop.f32.mrb[0].mxu0
        %v569 = vadd.f32 0.0, %v568
        %v570 = vpop.f32.mrb[0].mxu0
        %v571 = vadd.f32 0.0, %v570
        %v572 = vpop.f32.mrb[0].mxu0
        %v573 = vpop.f32.mrb[0].mxu0
        %574 = vdwg.mxu0
        %v575 = vadd.f32 %v504, %v569
        %v576 = vadd.f32 %v505, %v571
        %v577 = vpack.c.bf16 %v287, %v287
        %v578 = vpack.c.bf16 %v288, %v288
        %v580 = vsel %vm310, %v255, 0
        %v583 = vsel %vm314, %v577, 0
        %v586 = vsel %vm314, %v578, 0
        %588 = vmatprep.subr.bf16.mxu0 %v586
        %589 = vmatpush1.bf16.msra.mxu0 %v583
        %590 = vmatprep.subr.bf16.mxu0 0
        %591 = vmatpush1.bf16.msra.mxu0 0
        %592 = vmatprep.subr.bf16.mxu0 0
        %593 = vmatpush1.bf16.msra.mxu0 0
        %594 = vmatprep.subr.bf16.mxu0 0
        %595 = vmatpush1.bf16.msra.mxu0 0
        %596 = vmatprep.subr.bf16.mxu0 0
        %597 = vmatpush1.bf16.msra.mxu0 0
        %598 = vmatprep.subr.bf16.mxu0 0
        %599 = vmatpush1.bf16.msra.mxu0 0
        %600 = vmatprep.subr.bf16.mxu0 0
        %601 = vmatpush1.bf16.msra.mxu0 0
        %602 = vmatprep.subr.bf16.mxu0 0
        %603 = vmatpush1.bf16.msra.mxu0 0
        %604 = vmatprep.subr.bf16.mxu0 0
        %605 = vmatpush1.bf16.msra.mxu0 0
        %606 = vmatprep.subr.bf16.mxu0 0
        %607 = vmatpush1.bf16.msra.mxu0 0
        %608 = vmatprep.subr.bf16.mxu0 0
        %609 = vmatpush1.bf16.msra.mxu0 0
        %610 = vmatprep.subr.bf16.mxu0 0
        %611 = vmatpush1.bf16.msra.mxu0 0
        %612 = vmatprep.subr.bf16.mxu0 0
        %613 = vmatpush1.bf16.msra.mxu0 0
        %614 = vmatprep.subr.bf16.mxu0 0
        %615 = vmatpush1.bf16.msra.mxu0 0
        %616 = vmatprep.subr.bf16.mxu0 0
        %617 = vmatpush1.bf16.msra.mxu0 0
        %618 = vmatprep.subr.bf16.mxu0 0
        %619 = vmatpush1.bf16.msra.mxu0 0
        %620 = vmatprep.mubr.bf16.mxu0 0
        %621 = vmatmul.mubr.bf16.gmra.mrb[0].mxu0 %v580
        %v622 = vpop.f32.mrb[0].mxu0
        %v623 = vadd.f32 0.0, %v622
        %v624 = vpop.f32.mrb[0].mxu0
        %v625 = vadd.f32 0.0, %v624
        %v626 = vpop.f32.mrb[0].mxu0
        %v627 = vpop.f32.mrb[0].mxu0
        %628 = vdwg.mxu0
        %v629 = vadd.f32 %v575, %v623
        %v630 = vadd.f32 %v576, %v625
        %631 = vrot.lane.b32.xlu0 %v287, 127
        %v632 = vpop.permute.xlu0 %631
        %633 = vrot.lane.b32.xlu0 %v288, 127
        %v634 = vpop.permute.xlu0 %633
        %vm635 = vcmp.lt.s32.totalorder %v294, 127
        %v636 = vsel %vm635, %v632, %v634
        %v637 = vsel %vm635, %v634, %v632
        %v638 = vlaneseq
        %v639 = vshrl.u32 %v638, 7
        %v640 = vsub.s32 5, %v639
        %v641 = vrot.slane %v269, %v640
        %v642 = vlaneseq
        %v643 = vshrl.u32 %v642, 7
        %v644 = vsub.s32 5, %v643
        %v645 = vrot.slane %v270, %v644
        %v646 = vmul.f32 %v636, %v641
        %v647 = vmul.f32 %v637, %v645
        %v648 = vpack.c.bf16 %v646, %v646
        %v649 = vpack.c.bf16 %v647, %v647
        %v651 = vsel %vm310, %v256, 0
        %v654 = vsel %vm314, %v648, 0
        %v657 = vsel %vm314, %v649, 0
        %659 = vmatprep.subr.bf16.mxu0 %v657
        %660 = vmatpush1.bf16.msra.mxu0 %v654
        %661 = vmatprep.subr.bf16.mxu0 0
        %662 = vmatpush1.bf16.msra.mxu0 0
        %663 = vmatprep.subr.bf16.mxu0 0
        %664 = vmatpush1.bf16.msra.mxu0 0
        %665 = vmatprep.subr.bf16.mxu0 0
        %666 = vmatpush1.bf16.msra.mxu0 0
        %667 = vmatprep.subr.bf16.mxu0 0
        %668 = vmatpush1.bf16.msra.mxu0 0
        %669 = vmatprep.subr.bf16.mxu0 0
        %670 = vmatpush1.bf16.msra.mxu0 0
        %671 = vmatprep.subr.bf16.mxu0 0
        %672 = vmatpush1.bf16.msra.mxu0 0
        %673 = vmatprep.subr.bf16.mxu0 0
        %674 = vmatpush1.bf16.msra.mxu0 0
        %675 = vmatprep.subr.bf16.mxu0 0
        %676 = vmatpush1.bf16.msra.mxu0 0
        %677 = vmatprep.subr.bf16.mxu0 0
        %678 = vmatpush1.bf16.msra.mxu0 0
        %679 = vmatprep.subr.bf16.mxu0 0
        %680 = vmatpush1.bf16.msra.mxu0 0
        %681 = vmatprep.subr.bf16.mxu0 0
        %682 = vmatpush1.bf16.msra.mxu0 0
        %683 = vmatprep.subr.bf16.mxu0 0
        %684 = vmatpush1.bf16.msra.mxu0 0
        %685 = vmatprep.subr.bf16.mxu0 0
        %686 = vmatpush1.bf16.msra.mxu0 0
        %687 = vmatprep.subr.bf16.mxu0 0
        %688 = vmatpush1.bf16.msra.mxu0 0
        %689 = vmatprep.subr.bf16.mxu0 0
        %690 = vmatpush1.bf16.msra.mxu0 0
        %691 = vmatprep.mubr.bf16.mxu0 0
        %692 = vmatmul.mubr.bf16.gmra.mrb[0].mxu0 %v651
        %v693 = vpop.f32.mrb[0].mxu0
        %v694 = vadd.f32 0.0, %v693
        %v695 = vpop.f32.mrb[0].mxu0
        %v696 = vadd.f32 0.0, %v695
        %v697 = vpop.f32.mrb[0].mxu0
        %v698 = vpop.f32.mrb[0].mxu0
        %699 = vdwg.mxu0
        %v700 = vadd.f32 %v629, %v694
        %v701 = vadd.f32 %v630, %v696
        %702 = vrot.lane.b32.xlu0 %v287, 113
        %v703 = vpop.permute.xlu0 %702
        %704 = vrot.lane.b32.xlu0 %v288, 113
        %v705 = vpop.permute.xlu0 %704
        %vm706 = vcmp.lt.s32.totalorder %v294, 113
        %v707 = vsel %vm706, %v703, %v705
        %v708 = vsel %vm706, %v705, %v703
        %v709 = vlaneseq
        %v710 = vshrl.u32 %v709, 7
        %v711 = vsub.s32 6, %v710
        %v712 = vrot.slane %v269, %v711
        %v713 = vlaneseq
        %v714 = vshrl.u32 %v713, 7
        %v715 = vsub.s32 6, %v714
        %v716 = vrot.slane %v270, %v715
        %v717 = vmul.f32 %v707, %v712
        %v718 = vmul.f32 %v708, %v716
        %v719 = vpack.c.bf16 %v717, %v717
        %v720 = vpack.c.bf16 %v718, %v718
        %v722 = vsel %vm310, %v257, 0
        %v725 = vsel %vm314, %v719, 0
        %v728 = vsel %vm314, %v720, 0
        %730 = vmatprep.subr.bf16.mxu0 %v728
        %731 = vmatpush1.bf16.msra.mxu0 %v725
        %732 = vmatprep.subr.bf16.mxu0 0
        %733 = vmatpush1.bf16.msra.mxu0 0
        %734 = vmatprep.subr.bf16.mxu0 0
        %735 = vmatpush1.bf16.msra.mxu0 0
        %736 = vmatprep.subr.bf16.mxu0 0
        %737 = vmatpush1.bf16.msra.mxu0 0
        %738 = vmatprep.subr.bf16.mxu0 0
        %739 = vmatpush1.bf16.msra.mxu0 0
        %740 = vmatprep.subr.bf16.mxu0 0
        %741 = vmatpush1.bf16.msra.mxu0 0
        %742 = vmatprep.subr.bf16.mxu0 0
        %743 = vmatpush1.bf16.msra.mxu0 0
        %744 = vmatprep.subr.bf16.mxu0 0
        %745 = vmatpush1.bf16.msra.mxu0 0
        %746 = vmatprep.subr.bf16.mxu0 0
        %747 = vmatpush1.bf16.msra.mxu0 0
        %748 = vmatprep.subr.bf16.mxu0 0
        %749 = vmatpush1.bf16.msra.mxu0 0
        %750 = vmatprep.subr.bf16.mxu0 0
        %751 = vmatpush1.bf16.msra.mxu0 0
        %752 = vmatprep.subr.bf16.mxu0 0
        %753 = vmatpush1.bf16.msra.mxu0 0
        %754 = vmatprep.subr.bf16.mxu0 0
        %755 = vmatpush1.bf16.msra.mxu0 0
        %756 = vmatprep.subr.bf16.mxu0 0
        %757 = vmatpush1.bf16.msra.mxu0 0
        %758 = vmatprep.subr.bf16.mxu0 0
        %759 = vmatpush1.bf16.msra.mxu0 0
        %760 = vmatprep.subr.bf16.mxu0 0
        %761 = vmatpush1.bf16.msra.mxu0 0
        %762 = vmatprep.mubr.bf16.mxu0 0
        %763 = vmatmul.mubr.bf16.gmra.mrb[0].mxu0 %v722
        %v764 = vpop.f32.mrb[0].mxu0
        %v765 = vadd.f32 0.0, %v764
        %v766 = vpop.f32.mrb[0].mxu0
        %v767 = vadd.f32 0.0, %v766
        %v768 = vpop.f32.mrb[0].mxu0
        %v769 = vpop.f32.mrb[0].mxu0
        %770 = vdwg.mxu0
        %v771 = vadd.f32 %v700, %v765
        %v772 = vadd.f32 %v701, %v767
        %773 = vrot.lane.b32.xlu0 %v287, 112
        %v774 = vpop.permute.xlu0 %773
        %775 = vrot.lane.b32.xlu0 %v288, 112
        %v776 = vpop.permute.xlu0 %775
        %vm777 = vcmp.lt.s32.totalorder %v294, 112
        %v778 = vsel %vm777, %v774, %v776
        %v779 = vsel %vm777, %v776, %v774
        %v780 = vlaneseq
        %v781 = vshrl.u32 %v780, 7
        %v782 = vsub.s32 7, %v781
        %v783 = vrot.slane %v269, %v782
        %v784 = vlaneseq
        %v785 = vshrl.u32 %v784, 7
        %v786 = vsub.s32 7, %v785
        %v787 = vrot.slane %v270, %v786
        %v788 = vmul.f32 %v778, %v783
        %v789 = vmul.f32 %v779, %v787
        %v790 = vpack.c.bf16 %v788, %v788
        %v791 = vpack.c.bf16 %v789, %v789
        %v793 = vsel %vm310, %v258, 0
        %v796 = vsel %vm314, %v790, 0
        %v799 = vsel %vm314, %v791, 0
        %801 = vmatprep.subr.bf16.mxu0 %v799
        %802 = vmatpush1.bf16.msra.mxu0 %v796
        %803 = vmatprep.subr.bf16.mxu0 0
        %804 = vmatpush1.bf16.msra.mxu0 0
        %805 = vmatprep.subr.bf16.mxu0 0
        %806 = vmatpush1.bf16.msra.mxu0 0
        %807 = vmatprep.subr.bf16.mxu0 0
        %808 = vmatpush1.bf16.msra.mxu0 0
        %809 = vmatprep.subr.bf16.mxu0 0
        %810 = vmatpush1.bf16.msra.mxu0 0
        %811 = vmatprep.subr.bf16.mxu0 0
        %812 = vmatpush1.bf16.msra.mxu0 0
        %813 = vmatprep.subr.bf16.mxu0 0
        %814 = vmatpush1.bf16.msra.mxu0 0
        %815 = vmatprep.subr.bf16.mxu0 0
        %816 = vmatpush1.bf16.msra.mxu0 0
        %817 = vmatprep.subr.bf16.mxu0 0
        %818 = vmatpush1.bf16.msra.mxu0 0
        %819 = vmatprep.subr.bf16.mxu0 0
        %820 = vmatpush1.bf16.msra.mxu0 0
        %821 = vmatprep.subr.bf16.mxu0 0
        %822 = vmatpush1.bf16.msra.mxu0 0
        %823 = vmatprep.subr.bf16.mxu0 0
        %824 = vmatpush1.bf16.msra.mxu0 0
        %825 = vmatprep.subr.bf16.mxu0 0
        %826 = vmatpush1.bf16.msra.mxu0 0
        %827 = vmatprep.subr.bf16.mxu0 0
        %828 = vmatpush1.bf16.msra.mxu0 0
        %829 = vmatprep.subr.bf16.mxu0 0
        %830 = vmatpush1.bf16.msra.mxu0 0
        %831 = vmatprep.subr.bf16.mxu0 0
        %832 = vmatpush1.bf16.msra.mxu0 0
        %833 = vmatprep.mubr.bf16.mxu0 0
        %834 = vmatmul.mubr.bf16.gmra.mrb[0].mxu0 %v793
        %v835 = vpop.f32.mrb[0].mxu0
        %v836 = vadd.f32 0.0, %v835
        %v837 = vpop.f32.mrb[0].mxu0
        %v838 = vadd.f32 0.0, %v837
        %v839 = vpop.f32.mrb[0].mxu0
        %v840 = vpop.f32.mrb[0].mxu0
        %841 = vdwg.mxu0
        %v842 = vadd.f32 %v771, %v836
        %v843 = vadd.f32 %v772, %v838
        %844 = vrot.lane.b32.xlu0 %v287, 111
        %v845 = vpop.permute.xlu0 %844
        %846 = vrot.lane.b32.xlu0 %v288, 111
        %v847 = vpop.permute.xlu0 %846
        %vm848 = vcmp.lt.s32.totalorder %v294, 111
        %v849 = vsel %vm848, %v845, %v847
        %v850 = vsel %vm848, %v847, %v845
        %v851 = vlaneseq
        %v852 = vshrl.u32 %v851, 7
        %v853 = vsub.s32 0, %v852
        %v854 = vrot.slane %v271, %v853
        %v855 = vlaneseq
        %v856 = vshrl.u32 %v855, 7
        %v857 = vsub.s32 0, %v856
        %v858 = vrot.slane %v272, %v857
        %v859 = vmul.f32 %v849, %v854
        %v860 = vmul.f32 %v850, %v858
        %v861 = vpack.c.bf16 %v859, %v859
        %v862 = vpack.c.bf16 %v860, %v860
        %v864 = vsel %vm310, %v259, 0
        %v867 = vsel %vm314, %v861, 0
        %v870 = vsel %vm314, %v862, 0
        %872 = vmatprep.subr.bf16.mxu0 %v870
        %873 = vmatpush1.bf16.msra.mxu0 %v867
        %874 = vmatprep.subr.bf16.mxu0 0
        %875 = vmatpush1.bf16.msra.mxu0 0
        %876 = vmatprep.subr.bf16.mxu0 0
        %877 = vmatpush1.bf16.msra.mxu0 0
        %878 = vmatprep.subr.bf16.mxu0 0
        %879 = vmatpush1.bf16.msra.mxu0 0
        %880 = vmatprep.subr.bf16.mxu0 0
        %881 = vmatpush1.bf16.msra.mxu0 0
        %882 = vmatprep.subr.bf16.mxu0 0
        %883 = vmatpush1.bf16.msra.mxu0 0
        %884 = vmatprep.subr.bf16.mxu0 0
        %885 = vmatpush1.bf16.msra.mxu0 0
        %886 = vmatprep.subr.bf16.mxu0 0
        %887 = vmatpush1.bf16.msra.mxu0 0
        %888 = vmatprep.subr.bf16.mxu0 0
        %889 = vmatpush1.bf16.msra.mxu0 0
        %890 = vmatprep.subr.bf16.mxu0 0
        %891 = vmatpush1.bf16.msra.mxu0 0
        %892 = vmatprep.subr.bf16.mxu0 0
        %893 = vmatpush1.bf16.msra.mxu0 0
        %894 = vmatprep.subr.bf16.mxu0 0
        %895 = vmatpush1.bf16.msra.mxu0 0
        %896 = vmatprep.subr.bf16.mxu0 0
        %897 = vmatpush1.bf16.msra.mxu0 0
        %898 = vmatprep.subr.bf16.mxu0 0
        %899 = vmatpush1.bf16.msra.mxu0 0
        %900 = vmatprep.subr.bf16.mxu0 0
        %901 = vmatpush1.bf16.msra.mxu0 0
        %902 = vmatprep.subr.bf16.mxu0 0
        %903 = vmatpush1.bf16.msra.mxu0 0
        %904 = vmatprep.mubr.bf16.mxu0 0
        %905 = vmatmul.mubr.bf16.gmra.mrb[0].mxu0 %v864
        %v906 = vpop.f32.mrb[0].mxu0
        %v907 = vadd.f32 0.0, %v906
        %v908 = vpop.f32.mrb[0].mxu0
        %v909 = vadd.f32 0.0, %v908
        %v910 = vpop.f32.mrb[0].mxu0
        %v911 = vpop.f32.mrb[0].mxu0
        %912 = vdwg.mxu0
        %v913 = vadd.f32 %v842, %v907
        %v914 = vadd.f32 %v843, %v909
        %v915 = vmax.f32 %v913, 0.0
        %v916 = vmax.f32 %v914, 0.0
        %917 = vrot.lane.b32.xlu0 %v915, 17
        %v918 = vpop.permute.xlu0 %917
        %919 = vrot.lane.b32.xlu0 %v916, 17
        %v920 = vpop.permute.xlu0 %919
        %v921 = vsel %vm295, %v918, %v920
        %v922 = vsel %vm295, %v920, %v918
        %v923 = vmul.f32 %v922, %v301
        %v924 = vmul.f32 %v921, %v305
        %v925 = vpack.c.bf16 %v923, %v923
        %v926 = vpack.c.bf16 %v924, %v924
        %v928 = vsel %vm310, %v260, 0
        %v931 = vsel %vm314, %v925, 0
        %v934 = vsel %vm314, %v926, 0
        %936 = vmatprep.subr.bf16.mxu0 %v934
        %937 = vmatpush1.bf16.msra.mxu0 %v931
        %938 = vmatprep.subr.bf16.mxu0 0
        %939 = vmatpush1.bf16.msra.mxu0 0
        %940 = vmatprep.subr.bf16.mxu0 0
        %941 = vmatpush1.bf16.msra.mxu0 0
        %942 = vmatprep.subr.bf16.mxu0 0
        %943 = vmatpush1.bf16.msra.mxu0 0
        %944 = vmatprep.subr.bf16.mxu0 0
        %945 = vmatpush1.bf16.msra.mxu0 0
        %946 = vmatprep.subr.bf16.mxu0 0
        %947 = vmatpush1.bf16.msra.mxu0 0
        %948 = vmatprep.subr.bf16.mxu0 0
        %949 = vmatpush1.bf16.msra.mxu0 0
        %950 = vmatprep.subr.bf16.mxu0 0
        %951 = vmatpush1.bf16.msra.mxu0 0
        %952 = vmatprep.subr.bf16.mxu0 0
        %953 = vmatpush1.bf16.msra.mxu0 0
        %954 = vmatprep.subr.bf16.mxu0 0
        %955 = vmatpush1.bf16.msra.mxu0 0
        %956 = vmatprep.subr.bf16.mxu0 0
        %957 = vmatpush1.bf16.msra.mxu0 0
        %958 = vmatprep.subr.bf16.mxu0 0
        %959 = vmatpush1.bf16.msra.mxu0 0
        %960 = vmatprep.subr.bf16.mxu0 0
        %961 = vmatpush1.bf16.msra.mxu0 0
        %962 = vmatprep.subr.bf16.mxu0 0
        %963 = vmatpush1.bf16.msra.mxu0 0
        %964 = vmatprep.subr.bf16.mxu0 0
        %965 = vmatpush1.bf16.msra.mxu0 0
        %966 = vmatprep.subr.bf16.mxu0 0
        %967 = vmatpush1.bf16.msra.mxu0 0
        %968 = vmatprep.mubr.bf16.mxu0 0
        %969 = vmatmul.mubr.bf16.gmra.mrb[0].mxu0 %v928
        %v970 = vpop.f32.mrb[0].mxu0
        %v971 = vadd.f32 0.0, %v970
        %v972 = vpop.f32.mrb[0].mxu0
        %v973 = vadd.f32 0.0, %v972
        %v974 = vpop.f32.mrb[0].mxu0
        %v975 = vpop.f32.mrb[0].mxu0
        %976 = vdwg.mxu0
        %v977 = vadd.f32 %v283, %v971
        %v978 = vadd.f32 %v283, %v973
        %979 = vrot.lane.b32.xlu0 %v915, 16
        %v980 = vpop.permute.xlu0 %979
        %981 = vrot.lane.b32.xlu0 %v916, 16
        %v982 = vpop.permute.xlu0 %981
        %v983 = vsel %vm368, %v980, %v982
        %v984 = vsel %vm368, %v982, %v980
        %v985 = vmul.f32 %v984, %v374
        %v986 = vmul.f32 %v983, %v378
        %v987 = vpack.c.bf16 %v985, %v985
        %v988 = vpack.c.bf16 %v986, %v986
        %v990 = vsel %vm310, %v261, 0
        %v993 = vsel %vm314, %v987, 0
        %v996 = vsel %vm314, %v988, 0
        %998 = vmatprep.subr.bf16.mxu0 %v996
        %999 = vmatpush1.bf16.msra.mxu0 %v993
        %1000 = vmatprep.subr.bf16.mxu0 0
        %1001 = vmatpush1.bf16.msra.mxu0 0
        %1002 = vmatprep.subr.bf16.mxu0 0
        %1003 = vmatpush1.bf16.msra.mxu0 0
        %1004 = vmatprep.subr.bf16.mxu0 0
        %1005 = vmatpush1.bf16.msra.mxu0 0
        %1006 = vmatprep.subr.bf16.mxu0 0
        %1007 = vmatpush1.bf16.msra.mxu0 0
        %1008 = vmatprep.subr.bf16.mxu0 0
        %1009 = vmatpush1.bf16.msra.mxu0 0
        %1010 = vmatprep.subr.bf16.mxu0 0
        %1011 = vmatpush1.bf16.msra.mxu0 0
        %1012 = vmatprep.subr.bf16.mxu0 0
        %1013 = vmatpush1.bf16.msra.mxu0 0
        %1014 = vmatprep.subr.bf16.mxu0 0
        %1015 = vmatpush1.bf16.msra.mxu0 0
        %1016 = vmatprep.subr.bf16.mxu0 0
        %1017 = vmatpush1.bf16.msra.mxu0 0
        %1018 = vmatprep.subr.bf16.mxu0 0
        %1019 = vmatpush1.bf16.msra.mxu0 0
        %1020 = vmatprep.subr.bf16.mxu0 0
        %1021 = vmatpush1.bf16.msra.mxu0 0
        %1022 = vmatprep.subr.bf16.mxu0 0
        %1023 = vmatpush1.bf16.msra.mxu0 0
        %1024 = vmatprep.subr.bf16.mxu0 0
        %1025 = vmatpush1.bf16.msra.mxu0 0
        %1026 = vmatprep.subr.bf16.mxu0 0
        %1027 = vmatpush1.bf16.msra.mxu0 0
        %1028 = vmatprep.subr.bf16.mxu0 0
        %1029 = vmatpush1.bf16.msra.mxu0 0
        %1030 = vmatprep.mubr.bf16.mxu0 0
        %1031 = vmatmul.mubr.bf16.gmra.mrb[0].mxu0 %v990
        %v1032 = vpop.f32.mrb[0].mxu0
        %v1033 = vadd.f32 0.0, %v1032
        %v1034 = vpop.f32.mrb[0].mxu0
        %v1035 = vadd.f32 0.0, %v1034
        %v1036 = vpop.f32.mrb[0].mxu0
        %v1037 = vpop.f32.mrb[0].mxu0
        %1038 = vdwg.mxu0
        %v1039 = vadd.f32 %v977, %v1033
        %v1040 = vadd.f32 %v978, %v1035
        %1041 = vrot.lane.b32.xlu0 %v915, 15
        %v1042 = vpop.permute.xlu0 %1041
        %1043 = vrot.lane.b32.xlu0 %v916, 15
        %v1044 = vpop.permute.xlu0 %1043
        %v1045 = vsel %vm439, %v1042, %v1044
        %v1046 = vsel %vm439, %v1044, %v1042
        %v1047 = vmul.f32 %v1046, %v445
        %v1048 = vmul.f32 %v1045, %v449
        %v1049 = vpack.c.bf16 %v1047, %v1047
        %v1050 = vpack.c.bf16 %v1048, %v1048
        %v1052 = vsel %vm310, %v262, 0
        %v1055 = vsel %vm314, %v1049, 0
        %v1058 = vsel %vm314, %v1050, 0
        %1060 = vmatprep.subr.bf16.mxu0 %v1058
        %1061 = vmatpush1.bf16.msra.mxu0 %v1055
        %1062 = vmatprep.subr.bf16.mxu0 0
        %1063 = vmatpush1.bf16.msra.mxu0 0
        %1064 = vmatprep.subr.bf16.mxu0 0
        %1065 = vmatpush1.bf16.msra.mxu0 0
        %1066 = vmatprep.subr.bf16.mxu0 0
        %1067 = vmatpush1.bf16.msra.mxu0 0
        %1068 = vmatprep.subr.bf16.mxu0 0
        %1069 = vmatpush1.bf16.msra.mxu0 0
        %1070 = vmatprep.subr.bf16.mxu0 0
        %1071 = vmatpush1.bf16.msra.mxu0 0
        %1072 = vmatprep.subr.bf16.mxu0 0
        %1073 = vmatpush1.bf16.msra.mxu0 0
        %1074 = vmatprep.subr.bf16.mxu0 0
        %1075 = vmatpush1.bf16.msra.mxu0 0
        %1076 = vmatprep.subr.bf16.mxu0 0
        %1077 = vmatpush1.bf16.msra.mxu0 0
        %1078 = vmatprep.subr.bf16.mxu0 0
        %1079 = vmatpush1.bf16.msra.mxu0 0
        %1080 = vmatprep.subr.bf16.mxu0 0
        %1081 = vmatpush1.bf16.msra.mxu0 0
        %1082 = vmatprep.subr.bf16.mxu0 0
        %1083 = vmatpush1.bf16.msra.mxu0 0
        %1084 = vmatprep.subr.bf16.mxu0 0
        %1085 = vmatpush1.bf16.msra.mxu0 0
        %1086 = vmatprep.subr.bf16.mxu0 0
        %1087 = vmatpush1.bf16.msra.mxu0 0
        %1088 = vmatprep.subr.bf16.mxu0 0
        %1089 = vmatpush1.bf16.msra.mxu0 0
        %1090 = vmatprep.subr.bf16.mxu0 0
        %1091 = vmatpush1.bf16.msra.mxu0 0
        %1092 = vmatprep.mubr.bf16.mxu0 0
        %1093 = vmatmul.mubr.bf16.gmra.mrb[0].mxu0 %v1052
        %v1094 = vpop.f32.mrb[0].mxu0
        %v1095 = vadd.f32 0.0, %v1094
        %v1096 = vpop.f32.mrb[0].mxu0
        %v1097 = vadd.f32 0.0, %v1096
        %v1098 = vpop.f32.mrb[0].mxu0
        %v1099 = vpop.f32.mrb[0].mxu0
        %1100 = vdwg.mxu0
        %v1101 = vadd.f32 %v1039, %v1095
        %v1102 = vadd.f32 %v1040, %v1097
        %1103 = vrot.lane.b32.xlu0 %v915, 1
        %v1104 = vpop.permute.xlu0 %1103
        %1105 = vrot.lane.b32.xlu0 %v916, 1
        %v1106 = vpop.permute.xlu0 %1105
        %v1107 = vsel %vm510, %v1104, %v1106
        %v1108 = vsel %vm510, %v1106, %v1104
        %v1109 = vmul.f32 %v1108, %v516
        %v1110 = vmul.f32 %v1107, %v520
        %v1111 = vpack.c.bf16 %v1109, %v1109
        %v1112 = vpack.c.bf16 %v1110, %v1110
        %v1114 = vsel %vm310, %v263, 0
        %v1117 = vsel %vm314, %v1111, 0
        %v1120 = vsel %vm314, %v1112, 0
        %1122 = vmatprep.subr.bf16.mxu0 %v1120
        %1123 = vmatpush1.bf16.msra.mxu0 %v1117
        %1124 = vmatprep.subr.bf16.mxu0 0
        %1125 = vmatpush1.bf16.msra.mxu0 0
        %1126 = vmatprep.subr.bf16.mxu0 0
        %1127 = vmatpush1.bf16.msra.mxu0 0
        %1128 = vmatprep.subr.bf16.mxu0 0
        %1129 = vmatpush1.bf16.msra.mxu0 0
        %1130 = vmatprep.subr.bf16.mxu0 0
        %1131 = vmatpush1.bf16.msra.mxu0 0
        %1132 = vmatprep.subr.bf16.mxu0 0
        %1133 = vmatpush1.bf16.msra.mxu0 0
        %1134 = vmatprep.subr.bf16.mxu0 0
        %1135 = vmatpush1.bf16.msra.mxu0 0
        %1136 = vmatprep.subr.bf16.mxu0 0
        %1137 = vmatpush1.bf16.msra.mxu0 0
        %1138 = vmatprep.subr.bf16.mxu0 0
        %1139 = vmatpush1.bf16.msra.mxu0 0
        %1140 = vmatprep.subr.bf16.mxu0 0
        %1141 = vmatpush1.bf16.msra.mxu0 0
        %1142 = vmatprep.subr.bf16.mxu0 0
        %1143 = vmatpush1.bf16.msra.mxu0 0
        %1144 = vmatprep.subr.bf16.mxu0 0
        %1145 = vmatpush1.bf16.msra.mxu0 0
        %1146 = vmatprep.subr.bf16.mxu0 0
        %1147 = vmatpush1.bf16.msra.mxu0 0
        %1148 = vmatprep.subr.bf16.mxu0 0
        %1149 = vmatpush1.bf16.msra.mxu0 0
        %1150 = vmatprep.subr.bf16.mxu0 0
        %1151 = vmatpush1.bf16.msra.mxu0 0
        %1152 = vmatprep.subr.bf16.mxu0 0
        %1153 = vmatpush1.bf16.msra.mxu0 0
        %1154 = vmatprep.mubr.bf16.mxu0 0
        %1155 = vmatmul.mubr.bf16.gmra.mrb[0].mxu0 %v1114
        %v1156 = vpop.f32.mrb[0].mxu0
        %v1157 = vadd.f32 0.0, %v1156
        %v1158 = vpop.f32.mrb[0].mxu0
        %v1159 = vadd.f32 0.0, %v1158
        %v1160 = vpop.f32.mrb[0].mxu0
        %v1161 = vpop.f32.mrb[0].mxu0
        %1162 = vdwg.mxu0
        %v1163 = vadd.f32 %v1101, %v1157
        %v1164 = vadd.f32 %v1102, %v1159
        %v1165 = vpack.c.bf16 %v915, %v915
        %v1166 = vpack.c.bf16 %v916, %v916
        %v1168 = vsel %vm310, %v264, 0
        %v1171 = vsel %vm314, %v1165, 0
        %v1174 = vsel %vm314, %v1166, 0
        %1176 = vmatprep.subr.bf16.mxu0 %v1174
        %1177 = vmatpush1.bf16.msra.mxu0 %v1171
        %1178 = vmatprep.subr.bf16.mxu0 0
        %1179 = vmatpush1.bf16.msra.mxu0 0
        %1180 = vmatprep.subr.bf16.mxu0 0
        %1181 = vmatpush1.bf16.msra.mxu0 0
        %1182 = vmatprep.subr.bf16.mxu0 0
        %1183 = vmatpush1.bf16.msra.mxu0 0
        %1184 = vmatprep.subr.bf16.mxu0 0
        %1185 = vmatpush1.bf16.msra.mxu0 0
        %1186 = vmatprep.subr.bf16.mxu0 0
        %1187 = vmatpush1.bf16.msra.mxu0 0
        %1188 = vmatprep.subr.bf16.mxu0 0
        %1189 = vmatpush1.bf16.msra.mxu0 0
        %1190 = vmatprep.subr.bf16.mxu0 0
        %1191 = vmatpush1.bf16.msra.mxu0 0
        %1192 = vmatprep.subr.bf16.mxu0 0
        %1193 = vmatpush1.bf16.msra.mxu0 0
        %1194 = vmatprep.subr.bf16.mxu0 0
        %1195 = vmatpush1.bf16.msra.mxu0 0
        %1196 = vmatprep.subr.bf16.mxu0 0
        %1197 = vmatpush1.bf16.msra.mxu0 0
        %1198 = vmatprep.subr.bf16.mxu0 0
        %1199 = vmatpush1.bf16.msra.mxu0 0
        %1200 = vmatprep.subr.bf16.mxu0 0
        %1201 = vmatpush1.bf16.msra.mxu0 0
        %1202 = vmatprep.subr.bf16.mxu0 0
        %1203 = vmatpush1.bf16.msra.mxu0 0
        %1204 = vmatprep.subr.bf16.mxu0 0
        %1205 = vmatpush1.bf16.msra.mxu0 0
        %1206 = vmatprep.subr.bf16.mxu0 0
        %1207 = vmatpush1.bf16.msra.mxu0 0
        %1208 = vmatprep.mubr.bf16.mxu0 0
        %1209 = vmatmul.mubr.bf16.gmra.mrb[0].mxu0 %v1168
        %v1210 = vpop.f32.mrb[0].mxu0
        %v1211 = vadd.f32 0.0, %v1210
        %v1212 = vpop.f32.mrb[0].mxu0
        %v1213 = vadd.f32 0.0, %v1212
        %v1214 = vpop.f32.mrb[0].mxu0
        %v1215 = vpop.f32.mrb[0].mxu0
        %1216 = vdwg.mxu0
        %v1217 = vadd.f32 %v1163, %v1211
        %v1218 = vadd.f32 %v1164, %v1213
        %1219 = vrot.lane.b32.xlu0 %v915, 127
        %v1220 = vpop.permute.xlu0 %1219
        %1221 = vrot.lane.b32.xlu0 %v916, 127
        %v1222 = vpop.permute.xlu0 %1221
        %v1223 = vsel %vm635, %v1220, %v1222
        %v1224 = vsel %vm635, %v1222, %v1220
        %v1225 = vmul.f32 %v1223, %v641
        %v1226 = vmul.f32 %v1224, %v645
        %v1227 = vpack.c.bf16 %v1225, %v1225
        %v1228 = vpack.c.bf16 %v1226, %v1226
        %v1230 = vsel %vm310, %v265, 0
        %v1233 = vsel %vm314, %v1227, 0
        %v1236 = vsel %vm314, %v1228, 0
        %1238 = vmatprep.subr.bf16.mxu0 %v1236
        %1239 = vmatpush1.bf16.msra.mxu0 %v1233
        %1240 = vmatprep.subr.bf16.mxu0 0
        %1241 = vmatpush1.bf16.msra.mxu0 0
        %1242 = vmatprep.subr.bf16.mxu0 0
        %1243 = vmatpush1.bf16.msra.mxu0 0
        %1244 = vmatprep.subr.bf16.mxu0 0
        %1245 = vmatpush1.bf16.msra.mxu0 0
        %1246 = vmatprep.subr.bf16.mxu0 0
        %1247 = vmatpush1.bf16.msra.mxu0 0
        %1248 = vmatprep.subr.bf16.mxu0 0
        %1249 = vmatpush1.bf16.msra.mxu0 0
        %1250 = vmatprep.subr.bf16.mxu0 0
        %1251 = vmatpush1.bf16.msra.mxu0 0
        %1252 = vmatprep.subr.bf16.mxu0 0
        %1253 = vmatpush1.bf16.msra.mxu0 0
        %1254 = vmatprep.subr.bf16.mxu0 0
        %1255 = vmatpush1.bf16.msra.mxu0 0
        %1256 = vmatprep.subr.bf16.mxu0 0
        %1257 = vmatpush1.bf16.msra.mxu0 0
        %1258 = vmatprep.subr.bf16.mxu0 0
        %1259 = vmatpush1.bf16.msra.mxu0 0
        %1260 = vmatprep.subr.bf16.mxu0 0
        %1261 = vmatpush1.bf16.msra.mxu0 0
        %1262 = vmatprep.subr.bf16.mxu0 0
        %1263 = vmatpush1.bf16.msra.mxu0 0
        %1264 = vmatprep.subr.bf16.mxu0 0
        %1265 = vmatpush1.bf16.msra.mxu0 0
        %1266 = vmatprep.subr.bf16.mxu0 0
        %1267 = vmatpush1.bf16.msra.mxu0 0
        %1268 = vmatprep.subr.bf16.mxu0 0
        %1269 = vmatpush1.bf16.msra.mxu0 0
        %1270 = vmatprep.mubr.bf16.mxu0 0
        %1271 = vmatmul.mubr.bf16.gmra.mrb[0].mxu0 %v1230
        %v1272 = vpop.f32.mrb[0].mxu0
        %v1273 = vadd.f32 0.0, %v1272
        %v1274 = vpop.f32.mrb[0].mxu0
        %v1275 = vadd.f32 0.0, %v1274
        %v1276 = vpop.f32.mrb[0].mxu0
        %v1277 = vpop.f32.mrb[0].mxu0
        %1278 = vdwg.mxu0
        %v1279 = vadd.f32 %v1217, %v1273
        %v1280 = vadd.f32 %v1218, %v1275
        %1281 = vrot.lane.b32.xlu0 %v915, 113
        %v1282 = vpop.permute.xlu0 %1281
        %1283 = vrot.lane.b32.xlu0 %v916, 113
        %v1284 = vpop.permute.xlu0 %1283
        %v1285 = vsel %vm706, %v1282, %v1284
        %v1286 = vsel %vm706, %v1284, %v1282
        %v1287 = vmul.f32 %v1285, %v712
        %v1288 = vmul.f32 %v1286, %v716
        %v1289 = vpack.c.bf16 %v1287, %v1287
        %v1290 = vpack.c.bf16 %v1288, %v1288
        %v1292 = vsel %vm310, %v266, 0
        %v1295 = vsel %vm314, %v1289, 0
        %v1298 = vsel %vm314, %v1290, 0
        %1300 = vmatprep.subr.bf16.mxu0 %v1298
        %1301 = vmatpush1.bf16.msra.mxu0 %v1295
        %1302 = vmatprep.subr.bf16.mxu0 0
        %1303 = vmatpush1.bf16.msra.mxu0 0
        %1304 = vmatprep.subr.bf16.mxu0 0
        %1305 = vmatpush1.bf16.msra.mxu0 0
        %1306 = vmatprep.subr.bf16.mxu0 0
        %1307 = vmatpush1.bf16.msra.mxu0 0
        %1308 = vmatprep.subr.bf16.mxu0 0
        %1309 = vmatpush1.bf16.msra.mxu0 0
        %1310 = vmatprep.subr.bf16.mxu0 0
        %1311 = vmatpush1.bf16.msra.mxu0 0
        %1312 = vmatprep.subr.bf16.mxu0 0
        %1313 = vmatpush1.bf16.msra.mxu0 0
        %1314 = vmatprep.subr.bf16.mxu0 0
        %1315 = vmatpush1.bf16.msra.mxu0 0
        %1316 = vmatprep.subr.bf16.mxu0 0
        %1317 = vmatpush1.bf16.msra.mxu0 0
        %1318 = vmatprep.subr.bf16.mxu0 0
        %1319 = vmatpush1.bf16.msra.mxu0 0
        %1320 = vmatprep.subr.bf16.mxu0 0
        %1321 = vmatpush1.bf16.msra.mxu0 0
        %1322 = vmatprep.subr.bf16.mxu0 0
        %1323 = vmatpush1.bf16.msra.mxu0 0
        %1324 = vmatprep.subr.bf16.mxu0 0
        %1325 = vmatpush1.bf16.msra.mxu0 0
        %1326 = vmatprep.subr.bf16.mxu0 0
        %1327 = vmatpush1.bf16.msra.mxu0 0
        %1328 = vmatprep.subr.bf16.mxu0 0
        %1329 = vmatpush1.bf16.msra.mxu0 0
        %1330 = vmatprep.subr.bf16.mxu0 0
        %1331 = vmatpush1.bf16.msra.mxu0 0
        %1332 = vmatprep.mubr.bf16.mxu0 0
        %1333 = vmatmul.mubr.bf16.gmra.mrb[0].mxu0 %v1292
        %v1334 = vpop.f32.mrb[0].mxu0
        %v1335 = vadd.f32 0.0, %v1334
        %v1336 = vpop.f32.mrb[0].mxu0
        %v1337 = vadd.f32 0.0, %v1336
        %v1338 = vpop.f32.mrb[0].mxu0
        %v1339 = vpop.f32.mrb[0].mxu0
        %1340 = vdwg.mxu0
        %v1341 = vadd.f32 %v1279, %v1335
        %v1342 = vadd.f32 %v1280, %v1337
        %1343 = vrot.lane.b32.xlu0 %v915, 112
        %v1344 = vpop.permute.xlu0 %1343
        %1345 = vrot.lane.b32.xlu0 %v916, 112
        %v1346 = vpop.permute.xlu0 %1345
        %v1347 = vsel %vm777, %v1344, %v1346
        %v1348 = vsel %vm777, %v1346, %v1344
        %v1349 = vmul.f32 %v1347, %v783
        %v1350 = vmul.f32 %v1348, %v787
        %v1351 = vpack.c.bf16 %v1349, %v1349
        %v1352 = vpack.c.bf16 %v1350, %v1350
        %v1354 = vsel %vm310, %v267, 0
        %v1357 = vsel %vm314, %v1351, 0
        %v1360 = vsel %vm314, %v1352, 0
        %1362 = vmatprep.subr.bf16.mxu0 %v1360
        %1363 = vmatpush1.bf16.msra.mxu0 %v1357
        %1364 = vmatprep.subr.bf16.mxu0 0
        %1365 = vmatpush1.bf16.msra.mxu0 0
        %1366 = vmatprep.subr.bf16.mxu0 0
        %1367 = vmatpush1.bf16.msra.mxu0 0
        %1368 = vmatprep.subr.bf16.mxu0 0
        %1369 = vmatpush1.bf16.msra.mxu0 0
        %1370 = vmatprep.subr.bf16.mxu0 0
        %1371 = vmatpush1.bf16.msra.mxu0 0
        %1372 = vmatprep.subr.bf16.mxu0 0
        %1373 = vmatpush1.bf16.msra.mxu0 0
        %1374 = vmatprep.subr.bf16.mxu0 0
        %1375 = vmatpush1.bf16.msra.mxu0 0
        %1376 = vmatprep.subr.bf16.mxu0 0
        %1377 = vmatpush1.bf16.msra.mxu0 0
        %1378 = vmatprep.subr.bf16.mxu0 0
        %1379 = vmatpush1.bf16.msra.mxu0 0
        %1380 = vmatprep.subr.bf16.mxu0 0
        %1381 = vmatpush1.bf16.msra.mxu0 0
        %1382 = vmatprep.subr.bf16.mxu0 0
        %1383 = vmatpush1.bf16.msra.mxu0 0
        %1384 = vmatprep.subr.bf16.mxu0 0
        %1385 = vmatpush1.bf16.msra.mxu0 0
        %1386 = vmatprep.subr.bf16.mxu0 0
        %1387 = vmatpush1.bf16.msra.mxu0 0
        %1388 = vmatprep.subr.bf16.mxu0 0
        %1389 = vmatpush1.bf16.msra.mxu0 0
        %1390 = vmatprep.subr.bf16.mxu0 0
        %1391 = vmatpush1.bf16.msra.mxu0 0
        %1392 = vmatprep.subr.bf16.mxu0 0
        %1393 = vmatpush1.bf16.msra.mxu0 0
        %1394 = vmatprep.mubr.bf16.mxu0 0
        %1395 = vmatmul.mubr.bf16.gmra.mrb[0].mxu0 %v1354
        %v1396 = vpop.f32.mrb[0].mxu0
        %v1397 = vadd.f32 0.0, %v1396
        %v1398 = vpop.f32.mrb[0].mxu0
        %v1399 = vadd.f32 0.0, %v1398
        %v1400 = vpop.f32.mrb[0].mxu0
        %v1401 = vpop.f32.mrb[0].mxu0
        %1402 = vdwg.mxu0
        %v1403 = vadd.f32 %v1341, %v1397
        %v1404 = vadd.f32 %v1342, %v1399
        %1405 = vrot.lane.b32.xlu0 %v915, 111
        %v1406 = vpop.permute.xlu0 %1405
        %1407 = vrot.lane.b32.xlu0 %v916, 111
        %v1408 = vpop.permute.xlu0 %1407
        %v1409 = vsel %vm848, %v1406, %v1408
        %v1410 = vsel %vm848, %v1408, %v1406
        %v1411 = vmul.f32 %v1409, %v854
        %v1412 = vmul.f32 %v1410, %v858
        %v1413 = vpack.c.bf16 %v1411, %v1411
        %v1414 = vpack.c.bf16 %v1412, %v1412
        %v1416 = vsel %vm310, %v268, 0
        %v1419 = vsel %vm314, %v1413, 0
        %v1422 = vsel %vm314, %v1414, 0
        %1424 = vmatprep.subr.bf16.mxu0 %v1422
        %1425 = vmatpush1.bf16.msra.mxu0 %v1419
        %1426 = vmatprep.subr.bf16.mxu0 0
        %1427 = vmatpush1.bf16.msra.mxu0 0
        %1428 = vmatprep.subr.bf16.mxu0 0
        %1429 = vmatpush1.bf16.msra.mxu0 0
        %1430 = vmatprep.subr.bf16.mxu0 0
        %1431 = vmatpush1.bf16.msra.mxu0 0
        %1432 = vmatprep.subr.bf16.mxu0 0
        %1433 = vmatpush1.bf16.msra.mxu0 0
        %1434 = vmatprep.subr.bf16.mxu0 0
        %1435 = vmatpush1.bf16.msra.mxu0 0
        %1436 = vmatprep.subr.bf16.mxu0 0
        %1437 = vmatpush1.bf16.msra.mxu0 0
        %1438 = vmatprep.subr.bf16.mxu0 0
        %1439 = vmatpush1.bf16.msra.mxu0 0
        %1440 = vmatprep.subr.bf16.mxu0 0
        %1441 = vmatpush1.bf16.msra.mxu0 0
        %1442 = vmatprep.subr.bf16.mxu0 0
        %1443 = vmatpush1.bf16.msra.mxu0 0
        %1444 = vmatprep.subr.bf16.mxu0 0
        %1445 = vmatpush1.bf16.msra.mxu0 0
        %1446 = vmatprep.subr.bf16.mxu0 0
        %1447 = vmatpush1.bf16.msra.mxu0 0
        %1448 = vmatprep.subr.bf16.mxu0 0
        %1449 = vmatpush1.bf16.msra.mxu0 0
        %1450 = vmatprep.subr.bf16.mxu0 0
        %1451 = vmatpush1.bf16.msra.mxu0 0
        %1452 = vmatprep.subr.bf16.mxu0 0
        %1453 = vmatpush1.bf16.msra.mxu0 0
        %1454 = vmatprep.subr.bf16.mxu0 0
        %1455 = vmatpush1.bf16.msra.mxu0 0
        %1456 = vmatprep.mubr.bf16.mxu0 0
        %1457 = vmatmul.mubr.bf16.gmra.mrb[0].mxu0 %v1416
        %v1458 = vpop.f32.mrb[0].mxu0
        %v1459 = vadd.f32 0.0, %v1458
        %v1460 = vpop.f32.mrb[0].mxu0
        %v1461 = vadd.f32 0.0, %v1460
        %v1462 = vpop.f32.mrb[0].mxu0
        %v1463 = vpop.f32.mrb[0].mxu0
        %1464 = vdwg.mxu0
        %v1465 = vadd.f32 %v1403, %v1459
        %v1466 = vadd.f32 %v1404, %v1461
        %v1467 = vadd.f32 %v285, %v1465
        %v1468 = vadd.f32 %v286, %v1466
        %v1469 = vmax.f32 %v1467, 0.0
        %v1470 = vmax.f32 %v1468, 0.0
        %1471 = vrot.lane.b32.xlu0 %v1469, 17
        %v1472 = vpop.permute.xlu0 %1471
        %1473 = vrot.lane.b32.xlu0 %v1470, 17
        %v1474 = vpop.permute.xlu0 %1473
        %v1475 = vsel %vm295, %v1472, %v1474
        %v1476 = vsel %vm295, %v1474, %v1472
        %v1477 = vmul.f32 %v1476, %v301
        %v1478 = vmul.f32 %v1475, %v305
        %v1479 = vpack.c.bf16 %v1477, %v1477
        %v1480 = vpack.c.bf16 %v1478, %v1478
        %v1482 = vsel %vm314, %v1479, 0
        %v1485 = vsel %vm314, %v1480, 0
        %1487 = vmatprep.subr.bf16.mxu0 %v1485
        %1488 = vmatpush1.bf16.msra.mxu0 %v1482
        %1489 = vmatprep.subr.bf16.mxu0 0
        %1490 = vmatpush1.bf16.msra.mxu0 0
        %1491 = vmatprep.subr.bf16.mxu0 0
        %1492 = vmatpush1.bf16.msra.mxu0 0
        %1493 = vmatprep.subr.bf16.mxu0 0
        %1494 = vmatpush1.bf16.msra.mxu0 0
        %1495 = vmatprep.subr.bf16.mxu0 0
        %1496 = vmatpush1.bf16.msra.mxu0 0
        %1497 = vmatprep.subr.bf16.mxu0 0
        %1498 = vmatpush1.bf16.msra.mxu0 0
        %1499 = vmatprep.subr.bf16.mxu0 0
        %1500 = vmatpush1.bf16.msra.mxu0 0
        %1501 = vmatprep.subr.bf16.mxu0 0
        %1502 = vmatpush1.bf16.msra.mxu0 0
        %1503 = vmatprep.subr.bf16.mxu0 0
        %1504 = vmatpush1.bf16.msra.mxu0 0
        %1505 = vmatprep.subr.bf16.mxu0 0
        %1506 = vmatpush1.bf16.msra.mxu0 0
        %1507 = vmatprep.subr.bf16.mxu0 0
        %1508 = vmatpush1.bf16.msra.mxu0 0
        %1509 = vmatprep.subr.bf16.mxu0 0
        %1510 = vmatpush1.bf16.msra.mxu0 0
        %1511 = vmatprep.subr.bf16.mxu0 0
        %1512 = vmatpush1.bf16.msra.mxu0 0
        %1513 = vmatprep.subr.bf16.mxu0 0
        %1514 = vmatpush1.bf16.msra.mxu0 0
        %1515 = vmatprep.subr.bf16.mxu0 0
        %1516 = vmatpush1.bf16.msra.mxu0 0
        %1517 = vmatprep.subr.bf16.mxu0 0
        %1518 = vmatpush1.bf16.msra.mxu0 0
        %1519 = vmatprep.mubr.bf16.mxu0 0
        %1520 = vmatmul.mubr.bf16.gmra.mrb[0].mxu0 %v312
        %v1521 = vpop.f32.mrb[0].mxu0
        %v1522 = vadd.f32 0.0, %v1521
        %v1523 = vpop.f32.mrb[0].mxu0
        %v1524 = vadd.f32 0.0, %v1523
        %v1525 = vpop.f32.mrb[0].mxu0
        %v1526 = vpop.f32.mrb[0].mxu0
        %1527 = vdwg.mxu0
        %v1528 = vadd.f32 %v277, %v1522
        %v1529 = vadd.f32 %v277, %v1524
        %1530 = vrot.lane.b32.xlu0 %v1469, 16
        %v1531 = vpop.permute.xlu0 %1530
        %1532 = vrot.lane.b32.xlu0 %v1470, 16
        %v1533 = vpop.permute.xlu0 %1532
        %v1534 = vsel %vm368, %v1531, %v1533
        %v1535 = vsel %vm368, %v1533, %v1531
        %v1536 = vmul.f32 %v1535, %v374
        %v1537 = vmul.f32 %v1534, %v378
        %v1538 = vpack.c.bf16 %v1536, %v1536
        %v1539 = vpack.c.bf16 %v1537, %v1537
        %v1541 = vsel %vm314, %v1538, 0
        %v1544 = vsel %vm314, %v1539, 0
        %1546 = vmatprep.subr.bf16.mxu0 %v1544
        %1547 = vmatpush1.bf16.msra.mxu0 %v1541
        %1548 = vmatprep.subr.bf16.mxu0 0
        %1549 = vmatpush1.bf16.msra.mxu0 0
        %1550 = vmatprep.subr.bf16.mxu0 0
        %1551 = vmatpush1.bf16.msra.mxu0 0
        %1552 = vmatprep.subr.bf16.mxu0 0
        %1553 = vmatpush1.bf16.msra.mxu0 0
        %1554 = vmatprep.subr.bf16.mxu0 0
        %1555 = vmatpush1.bf16.msra.mxu0 0
        %1556 = vmatprep.subr.bf16.mxu0 0
        %1557 = vmatpush1.bf16.msra.mxu0 0
        %1558 = vmatprep.subr.bf16.mxu0 0
        %1559 = vmatpush1.bf16.msra.mxu0 0
        %1560 = vmatprep.subr.bf16.mxu0 0
        %1561 = vmatpush1.bf16.msra.mxu0 0
        %1562 = vmatprep.subr.bf16.mxu0 0
        %1563 = vmatpush1.bf16.msra.mxu0 0
        %1564 = vmatprep.subr.bf16.mxu0 0
        %1565 = vmatpush1.bf16.msra.mxu0 0
        %1566 = vmatprep.subr.bf16.mxu0 0
        %1567 = vmatpush1.bf16.msra.mxu0 0
        %1568 = vmatprep.subr.bf16.mxu0 0
        %1569 = vmatpush1.bf16.msra.mxu0 0
        %1570 = vmatprep.subr.bf16.mxu0 0
        %1571 = vmatpush1.bf16.msra.mxu0 0
        %1572 = vmatprep.subr.bf16.mxu0 0
        %1573 = vmatpush1.bf16.msra.mxu0 0
        %1574 = vmatprep.subr.bf16.mxu0 0
        %1575 = vmatpush1.bf16.msra.mxu0 0
        %1576 = vmatprep.subr.bf16.mxu0 0
        %1577 = vmatpush1.bf16.msra.mxu0 0
        %1578 = vmatprep.mubr.bf16.mxu0 0
        %1579 = vmatmul.mubr.bf16.gmra.mrb[0].mxu0 %v384
        %v1580 = vpop.f32.mrb[0].mxu0
        %v1581 = vadd.f32 0.0, %v1580
        %v1582 = vpop.f32.mrb[0].mxu0
        %v1583 = vadd.f32 0.0, %v1582
        %v1584 = vpop.f32.mrb[0].mxu0
        %v1585 = vpop.f32.mrb[0].mxu0
        %1586 = vdwg.mxu0
        %v1587 = vadd.f32 %v1528, %v1581
        %v1588 = vadd.f32 %v1529, %v1583
        %1589 = vrot.lane.b32.xlu0 %v1469, 15
        %v1590 = vpop.permute.xlu0 %1589
        %1591 = vrot.lane.b32.xlu0 %v1470, 15
        %v1592 = vpop.permute.xlu0 %1591
        %v1593 = vsel %vm439, %v1590, %v1592
        %v1594 = vsel %vm439, %v1592, %v1590
        %v1595 = vmul.f32 %v1594, %v445
        %v1596 = vmul.f32 %v1593, %v449
        %v1597 = vpack.c.bf16 %v1595, %v1595
        %v1598 = vpack.c.bf16 %v1596, %v1596
        %v1600 = vsel %vm314, %v1597, 0
        %v1603 = vsel %vm314, %v1598, 0
        %1605 = vmatprep.subr.bf16.mxu0 %v1603
        %1606 = vmatpush1.bf16.msra.mxu0 %v1600
        %1607 = vmatprep.subr.bf16.mxu0 0
        %1608 = vmatpush1.bf16.msra.mxu0 0
        %1609 = vmatprep.subr.bf16.mxu0 0
        %1610 = vmatpush1.bf16.msra.mxu0 0
        %1611 = vmatprep.subr.bf16.mxu0 0
        %1612 = vmatpush1.bf16.msra.mxu0 0
        %1613 = vmatprep.subr.bf16.mxu0 0
        %1614 = vmatpush1.bf16.msra.mxu0 0
        %1615 = vmatprep.subr.bf16.mxu0 0
        %1616 = vmatpush1.bf16.msra.mxu0 0
        %1617 = vmatprep.subr.bf16.mxu0 0
        %1618 = vmatpush1.bf16.msra.mxu0 0
        %1619 = vmatprep.subr.bf16.mxu0 0
        %1620 = vmatpush1.bf16.msra.mxu0 0
        %1621 = vmatprep.subr.bf16.mxu0 0
        %1622 = vmatpush1.bf16.msra.mxu0 0
        %1623 = vmatprep.subr.bf16.mxu0 0
        %1624 = vmatpush1.bf16.msra.mxu0 0
        %1625 = vmatprep.subr.bf16.mxu0 0
        %1626 = vmatpush1.bf16.msra.mxu0 0
        %1627 = vmatprep.subr.bf16.mxu0 0
        %1628 = vmatpush1.bf16.msra.mxu0 0
        %1629 = vmatprep.subr.bf16.mxu0 0
        %1630 = vmatpush1.bf16.msra.mxu0 0
        %1631 = vmatprep.subr.bf16.mxu0 0
        %1632 = vmatpush1.bf16.msra.mxu0 0
        %1633 = vmatprep.subr.bf16.mxu0 0
        %1634 = vmatpush1.bf16.msra.mxu0 0
        %1635 = vmatprep.subr.bf16.mxu0 0
        %1636 = vmatpush1.bf16.msra.mxu0 0
        %1637 = vmatprep.mubr.bf16.mxu0 0
        %1638 = vmatmul.mubr.bf16.gmra.mrb[0].mxu0 %v455
        %v1639 = vpop.f32.mrb[0].mxu0
        %v1640 = vadd.f32 0.0, %v1639
        %v1641 = vpop.f32.mrb[0].mxu0
        %v1642 = vadd.f32 0.0, %v1641
        %v1643 = vpop.f32.mrb[0].mxu0
        %v1644 = vpop.f32.mrb[0].mxu0
        %1645 = vdwg.mxu0
        %v1646 = vadd.f32 %v1587, %v1640
        %v1647 = vadd.f32 %v1588, %v1642
        %1648 = vrot.lane.b32.xlu0 %v1469, 1
        %v1649 = vpop.permute.xlu0 %1648
        %1650 = vrot.lane.b32.xlu0 %v1470, 1
        %v1651 = vpop.permute.xlu0 %1650
        %v1652 = vsel %vm510, %v1649, %v1651
        %v1653 = vsel %vm510, %v1651, %v1649
        %v1654 = vmul.f32 %v1653, %v516
        %v1655 = vmul.f32 %v1652, %v520
        %v1656 = vpack.c.bf16 %v1654, %v1654
        %v1657 = vpack.c.bf16 %v1655, %v1655
        %v1659 = vsel %vm314, %v1656, 0
        %v1662 = vsel %vm314, %v1657, 0
        %1664 = vmatprep.subr.bf16.mxu0 %v1662
        %1665 = vmatpush1.bf16.msra.mxu0 %v1659
        %1666 = vmatprep.subr.bf16.mxu0 0
        %1667 = vmatpush1.bf16.msra.mxu0 0
        %1668 = vmatprep.subr.bf16.mxu0 0
        %1669 = vmatpush1.bf16.msra.mxu0 0
        %1670 = vmatprep.subr.bf16.mxu0 0
        %1671 = vmatpush1.bf16.msra.mxu0 0
        %1672 = vmatprep.subr.bf16.mxu0 0
        %1673 = vmatpush1.bf16.msra.mxu0 0
        %1674 = vmatprep.subr.bf16.mxu0 0
        %1675 = vmatpush1.bf16.msra.mxu0 0
        %1676 = vmatprep.subr.bf16.mxu0 0
        %1677 = vmatpush1.bf16.msra.mxu0 0
        %1678 = vmatprep.subr.bf16.mxu0 0
        %1679 = vmatpush1.bf16.msra.mxu0 0
        %1680 = vmatprep.subr.bf16.mxu0 0
        %1681 = vmatpush1.bf16.msra.mxu0 0
        %1682 = vmatprep.subr.bf16.mxu0 0
        %1683 = vmatpush1.bf16.msra.mxu0 0
        %1684 = vmatprep.subr.bf16.mxu0 0
        %1685 = vmatpush1.bf16.msra.mxu0 0
        %1686 = vmatprep.subr.bf16.mxu0 0
        %1687 = vmatpush1.bf16.msra.mxu0 0
        %1688 = vmatprep.subr.bf16.mxu0 0
        %1689 = vmatpush1.bf16.msra.mxu0 0
        %1690 = vmatprep.subr.bf16.mxu0 0
        %1691 = vmatpush1.bf16.msra.mxu0 0
        %1692 = vmatprep.subr.bf16.mxu0 0
        %1693 = vmatpush1.bf16.msra.mxu0 0
        %1694 = vmatprep.subr.bf16.mxu0 0
        %1695 = vmatpush1.bf16.msra.mxu0 0
        %1696 = vmatprep.mubr.bf16.mxu0 0
        %1697 = vmatmul.mubr.bf16.gmra.mrb[0].mxu0 %v526
        %v1698 = vpop.f32.mrb[0].mxu0
        %v1699 = vadd.f32 0.0, %v1698
        %v1700 = vpop.f32.mrb[0].mxu0
        %v1701 = vadd.f32 0.0, %v1700
        %v1702 = vpop.f32.mrb[0].mxu0
        %v1703 = vpop.f32.mrb[0].mxu0
        %1704 = vdwg.mxu0
        %v1705 = vadd.f32 %v1646, %v1699
        %v1706 = vadd.f32 %v1647, %v1701
        %v1707 = vpack.c.bf16 %v1469, %v1469
        %v1708 = vpack.c.bf16 %v1470, %v1470
        %v1710 = vsel %vm314, %v1707, 0
        %v1713 = vsel %vm314, %v1708, 0
        %1715 = vmatprep.subr.bf16.mxu0 %v1713
        %1716 = vmatpush1.bf16.msra.mxu0 %v1710
        %1717 = vmatprep.subr.bf16.mxu0 0
        %1718 = vmatpush1.bf16.msra.mxu0 0
        %1719 = vmatprep.subr.bf16.mxu0 0
        %1720 = vmatpush1.bf16.msra.mxu0 0
        %1721 = vmatprep.subr.bf16.mxu0 0
        %1722 = vmatpush1.bf16.msra.mxu0 0
        %1723 = vmatprep.subr.bf16.mxu0 0
        %1724 = vmatpush1.bf16.msra.mxu0 0
        %1725 = vmatprep.subr.bf16.mxu0 0
        %1726 = vmatpush1.bf16.msra.mxu0 0
        %1727 = vmatprep.subr.bf16.mxu0 0
        %1728 = vmatpush1.bf16.msra.mxu0 0
        %1729 = vmatprep.subr.bf16.mxu0 0
        %1730 = vmatpush1.bf16.msra.mxu0 0
        %1731 = vmatprep.subr.bf16.mxu0 0
        %1732 = vmatpush1.bf16.msra.mxu0 0
        %1733 = vmatprep.subr.bf16.mxu0 0
        %1734 = vmatpush1.bf16.msra.mxu0 0
        %1735 = vmatprep.subr.bf16.mxu0 0
        %1736 = vmatpush1.bf16.msra.mxu0 0
        %1737 = vmatprep.subr.bf16.mxu0 0
        %1738 = vmatpush1.bf16.msra.mxu0 0
        %1739 = vmatprep.subr.bf16.mxu0 0
        %1740 = vmatpush1.bf16.msra.mxu0 0
        %1741 = vmatprep.subr.bf16.mxu0 0
        %1742 = vmatpush1.bf16.msra.mxu0 0
        %1743 = vmatprep.subr.bf16.mxu0 0
        %1744 = vmatpush1.bf16.msra.mxu0 0
        %1745 = vmatprep.subr.bf16.mxu0 0
        %1746 = vmatpush1.bf16.msra.mxu0 0
        %1747 = vmatprep.mubr.bf16.mxu0 0
        %1748 = vmatmul.mubr.bf16.gmra.mrb[0].mxu0 %v580
        %v1749 = vpop.f32.mrb[0].mxu0
        %v1750 = vadd.f32 0.0, %v1749
        %v1751 = vpop.f32.mrb[0].mxu0
        %v1752 = vadd.f32 0.0, %v1751
        %v1753 = vpop.f32.mrb[0].mxu0
        %v1754 = vpop.f32.mrb[0].mxu0
        %1755 = vdwg.mxu0
        %v1756 = vadd.f32 %v1705, %v1750
        %v1757 = vadd.f32 %v1706, %v1752
        %1758 = vrot.lane.b32.xlu0 %v1469, 127
        %v1759 = vpop.permute.xlu0 %1758
        %1760 = vrot.lane.b32.xlu0 %v1470, 127
        %v1761 = vpop.permute.xlu0 %1760
        %v1762 = vsel %vm635, %v1759, %v1761
        %v1763 = vsel %vm635, %v1761, %v1759
        %v1764 = vmul.f32 %v1762, %v641
        %v1765 = vmul.f32 %v1763, %v645
        %v1766 = vpack.c.bf16 %v1764, %v1764
        %v1767 = vpack.c.bf16 %v1765, %v1765
        %v1769 = vsel %vm314, %v1766, 0
        %v1772 = vsel %vm314, %v1767, 0
        %1774 = vmatprep.subr.bf16.mxu0 %v1772
        %1775 = vmatpush1.bf16.msra.mxu0 %v1769
        %1776 = vmatprep.subr.bf16.mxu0 0
        %1777 = vmatpush1.bf16.msra.mxu0 0
        %1778 = vmatprep.subr.bf16.mxu0 0
        %1779 = vmatpush1.bf16.msra.mxu0 0
        %1780 = vmatprep.subr.bf16.mxu0 0
        %1781 = vmatpush1.bf16.msra.mxu0 0
        %1782 = vmatprep.subr.bf16.mxu0 0
        %1783 = vmatpush1.bf16.msra.mxu0 0
        %1784 = vmatprep.subr.bf16.mxu0 0
        %1785 = vmatpush1.bf16.msra.mxu0 0
        %1786 = vmatprep.subr.bf16.mxu0 0
        %1787 = vmatpush1.bf16.msra.mxu0 0
        %1788 = vmatprep.subr.bf16.mxu0 0
        %1789 = vmatpush1.bf16.msra.mxu0 0
        %1790 = vmatprep.subr.bf16.mxu0 0
        %1791 = vmatpush1.bf16.msra.mxu0 0
        %1792 = vmatprep.subr.bf16.mxu0 0
        %1793 = vmatpush1.bf16.msra.mxu0 0
        %1794 = vmatprep.subr.bf16.mxu0 0
        %1795 = vmatpush1.bf16.msra.mxu0 0
        %1796 = vmatprep.subr.bf16.mxu0 0
        %1797 = vmatpush1.bf16.msra.mxu0 0
        %1798 = vmatprep.subr.bf16.mxu0 0
        %1799 = vmatpush1.bf16.msra.mxu0 0
        %1800 = vmatprep.subr.bf16.mxu0 0
        %1801 = vmatpush1.bf16.msra.mxu0 0
        %1802 = vmatprep.subr.bf16.mxu0 0
        %1803 = vmatpush1.bf16.msra.mxu0 0
        %1804 = vmatprep.subr.bf16.mxu0 0
        %1805 = vmatpush1.bf16.msra.mxu0 0
        %1806 = vmatprep.mubr.bf16.mxu0 0
        %1807 = vmatmul.mubr.bf16.gmra.mrb[0].mxu0 %v651
        %v1808 = vpop.f32.mrb[0].mxu0
        %v1809 = vadd.f32 0.0, %v1808
        %v1810 = vpop.f32.mrb[0].mxu0
        %v1811 = vadd.f32 0.0, %v1810
        %v1812 = vpop.f32.mrb[0].mxu0
        %v1813 = vpop.f32.mrb[0].mxu0
        %1814 = vdwg.mxu0
        %v1815 = vadd.f32 %v1756, %v1809
        %v1816 = vadd.f32 %v1757, %v1811
        %1817 = vrot.lane.b32.xlu0 %v1469, 113
        %v1818 = vpop.permute.xlu0 %1817
        %1819 = vrot.lane.b32.xlu0 %v1470, 113
        %v1820 = vpop.permute.xlu0 %1819
        %v1821 = vsel %vm706, %v1818, %v1820
        %v1822 = vsel %vm706, %v1820, %v1818
        %v1823 = vmul.f32 %v1821, %v712
        %v1824 = vmul.f32 %v1822, %v716
        %v1825 = vpack.c.bf16 %v1823, %v1823
        %v1826 = vpack.c.bf16 %v1824, %v1824
        %v1828 = vsel %vm314, %v1825, 0
        %v1831 = vsel %vm314, %v1826, 0
        %1833 = vmatprep.subr.bf16.mxu0 %v1831
        %1834 = vmatpush1.bf16.msra.mxu0 %v1828
        %1835 = vmatprep.subr.bf16.mxu0 0
        %1836 = vmatpush1.bf16.msra.mxu0 0
        %1837 = vmatprep.subr.bf16.mxu0 0
        %1838 = vmatpush1.bf16.msra.mxu0 0
        %1839 = vmatprep.subr.bf16.mxu0 0
        %1840 = vmatpush1.bf16.msra.mxu0 0
        %1841 = vmatprep.subr.bf16.mxu0 0
        %1842 = vmatpush1.bf16.msra.mxu0 0
        %1843 = vmatprep.subr.bf16.mxu0 0
        %1844 = vmatpush1.bf16.msra.mxu0 0
        %1845 = vmatprep.subr.bf16.mxu0 0
        %1846 = vmatpush1.bf16.msra.mxu0 0
        %1847 = vmatprep.subr.bf16.mxu0 0
        %1848 = vmatpush1.bf16.msra.mxu0 0
        %1849 = vmatprep.subr.bf16.mxu0 0
        %1850 = vmatpush1.bf16.msra.mxu0 0
        %1851 = vmatprep.subr.bf16.mxu0 0
        %1852 = vmatpush1.bf16.msra.mxu0 0
        %1853 = vmatprep.subr.bf16.mxu0 0
        %1854 = vmatpush1.bf16.msra.mxu0 0
        %1855 = vmatprep.subr.bf16.mxu0 0
        %1856 = vmatpush1.bf16.msra.mxu0 0
        %1857 = vmatprep.subr.bf16.mxu0 0
        %1858 = vmatpush1.bf16.msra.mxu0 0
        %1859 = vmatprep.subr.bf16.mxu0 0
        %1860 = vmatpush1.bf16.msra.mxu0 0
        %1861 = vmatprep.subr.bf16.mxu0 0
        %1862 = vmatpush1.bf16.msra.mxu0 0
        %1863 = vmatprep.subr.bf16.mxu0 0
        %1864 = vmatpush1.bf16.msra.mxu0 0
        %1865 = vmatprep.mubr.bf16.mxu0 0
        %1866 = vmatmul.mubr.bf16.gmra.mrb[0].mxu0 %v722
        %v1867 = vpop.f32.mrb[0].mxu0
        %v1868 = vadd.f32 0.0, %v1867
        %v1869 = vpop.f32.mrb[0].mxu0
        %v1870 = vadd.f32 0.0, %v1869
        %v1871 = vpop.f32.mrb[0].mxu0
        %v1872 = vpop.f32.mrb[0].mxu0
        %1873 = vdwg.mxu0
        %v1874 = vadd.f32 %v1815, %v1868
        %v1875 = vadd.f32 %v1816, %v1870
        %1876 = vrot.lane.b32.xlu0 %v1469, 112
        %v1877 = vpop.permute.xlu0 %1876
        %1878 = vrot.lane.b32.xlu0 %v1470, 112
        %v1879 = vpop.permute.xlu0 %1878
        %v1880 = vsel %vm777, %v1877, %v1879
        %v1881 = vsel %vm777, %v1879, %v1877
        %v1882 = vmul.f32 %v1880, %v783
        %v1883 = vmul.f32 %v1881, %v787
        %v1884 = vpack.c.bf16 %v1882, %v1882
        %v1885 = vpack.c.bf16 %v1883, %v1883
        %v1887 = vsel %vm314, %v1884, 0
        %v1890 = vsel %vm314, %v1885, 0
        %1892 = vmatprep.subr.bf16.mxu0 %v1890
        %1893 = vmatpush1.bf16.msra.mxu0 %v1887
        %1894 = vmatprep.subr.bf16.mxu0 0
        %1895 = vmatpush1.bf16.msra.mxu0 0
        %1896 = vmatprep.subr.bf16.mxu0 0
        %1897 = vmatpush1.bf16.msra.mxu0 0
        %1898 = vmatprep.subr.bf16.mxu0 0
        %1899 = vmatpush1.bf16.msra.mxu0 0
        %1900 = vmatprep.subr.bf16.mxu0 0
        %1901 = vmatpush1.bf16.msra.mxu0 0
        %1902 = vmatprep.subr.bf16.mxu0 0
        %1903 = vmatpush1.bf16.msra.mxu0 0
        %1904 = vmatprep.subr.bf16.mxu0 0
        %1905 = vmatpush1.bf16.msra.mxu0 0
        %1906 = vmatprep.subr.bf16.mxu0 0
        %1907 = vmatpush1.bf16.msra.mxu0 0
        %1908 = vmatprep.subr.bf16.mxu0 0
        %1909 = vmatpush1.bf16.msra.mxu0 0
        %1910 = vmatprep.subr.bf16.mxu0 0
        %1911 = vmatpush1.bf16.msra.mxu0 0
        %1912 = vmatprep.subr.bf16.mxu0 0
        %1913 = vmatpush1.bf16.msra.mxu0 0
        %1914 = vmatprep.subr.bf16.mxu0 0
        %1915 = vmatpush1.bf16.msra.mxu0 0
        %1916 = vmatprep.subr.bf16.mxu0 0
        %1917 = vmatpush1.bf16.msra.mxu0 0
        %1918 = vmatprep.subr.bf16.mxu0 0
        %1919 = vmatpush1.bf16.msra.mxu0 0
        %1920 = vmatprep.subr.bf16.mxu0 0
        %1921 = vmatpush1.bf16.msra.mxu0 0
        %1922 = vmatprep.subr.bf16.mxu0 0
        %1923 = vmatpush1.bf16.msra.mxu0 0
        %1924 = vmatprep.mubr.bf16.mxu0 0
        %1925 = vmatmul.mubr.bf16.gmra.mrb[0].mxu0 %v793
        %v1926 = vpop.f32.mrb[0].mxu0
        %v1927 = vadd.f32 0.0, %v1926
        %v1928 = vpop.f32.mrb[0].mxu0
        %v1929 = vadd.f32 0.0, %v1928
        %v1930 = vpop.f32.mrb[0].mxu0
        %v1931 = vpop.f32.mrb[0].mxu0
        %1932 = vdwg.mxu0
        %v1933 = vadd.f32 %v1874, %v1927
        %v1934 = vadd.f32 %v1875, %v1929
        %1935 = vrot.lane.b32.xlu0 %v1469, 111
        %v1936 = vpop.permute.xlu0 %1935
        %1937 = vrot.lane.b32.xlu0 %v1470, 111
        %v1938 = vpop.permute.xlu0 %1937
        %v1939 = vsel %vm848, %v1936, %v1938
        %v1940 = vsel %vm848, %v1938, %v1936
        %v1941 = vmul.f32 %v1939, %v854
        %v1942 = vmul.f32 %v1940, %v858
        %v1943 = vpack.c.bf16 %v1941, %v1941
        %v1944 = vpack.c.bf16 %v1942, %v1942
        %v1946 = vsel %vm314, %v1943, 0
        %v1949 = vsel %vm314, %v1944, 0
        %1951 = vmatprep.subr.bf16.mxu0 %v1949
        %1952 = vmatpush1.bf16.msra.mxu0 %v1946
        %1953 = vmatprep.subr.bf16.mxu0 0
        %1954 = vmatpush1.bf16.msra.mxu0 0
        %1955 = vmatprep.subr.bf16.mxu0 0
        %1956 = vmatpush1.bf16.msra.mxu0 0
        %1957 = vmatprep.subr.bf16.mxu0 0
        %1958 = vmatpush1.bf16.msra.mxu0 0
        %1959 = vmatprep.subr.bf16.mxu0 0
        %1960 = vmatpush1.bf16.msra.mxu0 0
        %1961 = vmatprep.subr.bf16.mxu0 0
        %1962 = vmatpush1.bf16.msra.mxu0 0
        %1963 = vmatprep.subr.bf16.mxu0 0
        %1964 = vmatpush1.bf16.msra.mxu0 0
        %1965 = vmatprep.subr.bf16.mxu0 0
        %1966 = vmatpush1.bf16.msra.mxu0 0
        %1967 = vmatprep.subr.bf16.mxu0 0
        %1968 = vmatpush1.bf16.msra.mxu0 0
        %1969 = vmatprep.subr.bf16.mxu0 0
        %1970 = vmatpush1.bf16.msra.mxu0 0
        %1971 = vmatprep.subr.bf16.mxu0 0
        %1972 = vmatpush1.bf16.msra.mxu0 0
        %1973 = vmatprep.subr.bf16.mxu0 0
        %1974 = vmatpush1.bf16.msra.mxu0 0
        %1975 = vmatprep.subr.bf16.mxu0 0
        %1976 = vmatpush1.bf16.msra.mxu0 0
        %1977 = vmatprep.subr.bf16.mxu0 0
        %1978 = vmatpush1.bf16.msra.mxu0 0
        %1979 = vmatprep.subr.bf16.mxu0 0
        %1980 = vmatpush1.bf16.msra.mxu0 0
        %1981 = vmatprep.subr.bf16.mxu0 0
        %1982 = vmatpush1.bf16.msra.mxu0 0
        %1983 = vmatprep.mubr.bf16.mxu0 0
        %1984 = vmatmul.mubr.bf16.gmra.mrb[0].mxu0 %v864
        %v1985 = vpop.f32.mrb[0].mxu0
        %v1986 = vadd.f32 0.0, %v1985
        %v1987 = vpop.f32.mrb[0].mxu0
        %v1988 = vadd.f32 0.0, %v1987
        %v1989 = vpop.f32.mrb[0].mxu0
        %v1990 = vpop.f32.mrb[0].mxu0
        %1991 = vdwg.mxu0
        %v1992 = vadd.f32 %v1933, %v1986
        %v1993 = vadd.f32 %v1934, %v1988
        %v1994 = vmax.f32 %v1992, 0.0
        %v1995 = vmax.f32 %v1993, 0.0
        %1996 = vrot.lane.b32.xlu0 %v1994, 17
        %v1997 = vpop.permute.xlu0 %1996
        %1998 = vrot.lane.b32.xlu0 %v1995, 17
        %v1999 = vpop.permute.xlu0 %1998
        %v2000 = vsel %vm295, %v1997, %v1999
        %v2001 = vsel %vm295, %v1999, %v1997
        %v2002 = vmul.f32 %v2001, %v301
        %v2003 = vmul.f32 %v2000, %v305
        %v2004 = vpack.c.bf16 %v2002, %v2002
        %v2005 = vpack.c.bf16 %v2003, %v2003
        %v2007 = vsel %vm314, %v2004, 0
        %v2010 = vsel %vm314, %v2005, 0
        %2012 = vmatprep.subr.bf16.mxu0 %v2010
        %2013 = vmatpush1.bf16.msra.mxu0 %v2007
        %2014 = vmatprep.subr.bf16.mxu0 0
        %2015 = vmatpush1.bf16.msra.mxu0 0
        %2016 = vmatprep.subr.bf16.mxu0 0
        %2017 = vmatpush1.bf16.msra.mxu0 0
        %2018 = vmatprep.subr.bf16.mxu0 0
        %2019 = vmatpush1.bf16.msra.mxu0 0
        %2020 = vmatprep.subr.bf16.mxu0 0
        %2021 = vmatpush1.bf16.msra.mxu0 0
        %2022 = vmatprep.subr.bf16.mxu0 0
        %2023 = vmatpush1.bf16.msra.mxu0 0
        %2024 = vmatprep.subr.bf16.mxu0 0
        %2025 = vmatpush1.bf16.msra.mxu0 0
        %2026 = vmatprep.subr.bf16.mxu0 0
        %2027 = vmatpush1.bf16.msra.mxu0 0
        %2028 = vmatprep.subr.bf16.mxu0 0
        %2029 = vmatpush1.bf16.msra.mxu0 0
        %2030 = vmatprep.subr.bf16.mxu0 0
        %2031 = vmatpush1.bf16.msra.mxu0 0
        %2032 = vmatprep.subr.bf16.mxu0 0
        %2033 = vmatpush1.bf16.msra.mxu0 0
        %2034 = vmatprep.subr.bf16.mxu0 0
        %2035 = vmatpush1.bf16.msra.mxu0 0
        %2036 = vmatprep.subr.bf16.mxu0 0
        %2037 = vmatpush1.bf16.msra.mxu0 0
        %2038 = vmatprep.subr.bf16.mxu0 0
        %2039 = vmatpush1.bf16.msra.mxu0 0
        %2040 = vmatprep.subr.bf16.mxu0 0
        %2041 = vmatpush1.bf16.msra.mxu0 0
        %2042 = vmatprep.subr.bf16.mxu0 0
        %2043 = vmatpush1.bf16.msra.mxu0 0
        %2044 = vmatprep.mubr.bf16.mxu0 0
        %2045 = vmatmul.mubr.bf16.gmra.mrb[0].mxu0 %v928
        %v2046 = vpop.f32.mrb[0].mxu0
        %v2047 = vadd.f32 0.0, %v2046
        %v2048 = vpop.f32.mrb[0].mxu0
        %v2049 = vadd.f32 0.0, %v2048
        %v2050 = vpop.f32.mrb[0].mxu0
        %v2051 = vpop.f32.mrb[0].mxu0
        %2052 = vdwg.mxu0
        %v2053 = vadd.f32 %v283, %v2047
        %v2054 = vadd.f32 %v283, %v2049
        %2055 = vrot.lane.b32.xlu0 %v1994, 16
        %v2056 = vpop.permute.xlu0 %2055
        %2057 = vrot.lane.b32.xlu0 %v1995, 16
        %v2058 = vpop.permute.xlu0 %2057
        %v2059 = vsel %vm368, %v2056, %v2058
        %v2060 = vsel %vm368, %v2058, %v2056
        %v2061 = vmul.f32 %v2060, %v374
        %v2062 = vmul.f32 %v2059, %v378
        %v2063 = vpack.c.bf16 %v2061, %v2061
        %v2064 = vpack.c.bf16 %v2062, %v2062
        %v2066 = vsel %vm314, %v2063, 0
        %v2069 = vsel %vm314, %v2064, 0
        %2071 = vmatprep.subr.bf16.mxu0 %v2069
        %2072 = vmatpush1.bf16.msra.mxu0 %v2066
        %2073 = vmatprep.subr.bf16.mxu0 0
        %2074 = vmatpush1.bf16.msra.mxu0 0
        %2075 = vmatprep.subr.bf16.mxu0 0
        %2076 = vmatpush1.bf16.msra.mxu0 0
        %2077 = vmatprep.subr.bf16.mxu0 0
        %2078 = vmatpush1.bf16.msra.mxu0 0
        %2079 = vmatprep.subr.bf16.mxu0 0
        %2080 = vmatpush1.bf16.msra.mxu0 0
        %2081 = vmatprep.subr.bf16.mxu0 0
        %2082 = vmatpush1.bf16.msra.mxu0 0
        %2083 = vmatprep.subr.bf16.mxu0 0
        %2084 = vmatpush1.bf16.msra.mxu0 0
        %2085 = vmatprep.subr.bf16.mxu0 0
        %2086 = vmatpush1.bf16.msra.mxu0 0
        %2087 = vmatprep.subr.bf16.mxu0 0
        %2088 = vmatpush1.bf16.msra.mxu0 0
        %2089 = vmatprep.subr.bf16.mxu0 0
        %2090 = vmatpush1.bf16.msra.mxu0 0
        %2091 = vmatprep.subr.bf16.mxu0 0
        %2092 = vmatpush1.bf16.msra.mxu0 0
        %2093 = vmatprep.subr.bf16.mxu0 0
        %2094 = vmatpush1.bf16.msra.mxu0 0
        %2095 = vmatprep.subr.bf16.mxu0 0
        %2096 = vmatpush1.bf16.msra.mxu0 0
        %2097 = vmatprep.subr.bf16.mxu0 0
        %2098 = vmatpush1.bf16.msra.mxu0 0
        %2099 = vmatprep.subr.bf16.mxu0 0
        %2100 = vmatpush1.bf16.msra.mxu0 0
        %2101 = vmatprep.subr.bf16.mxu0 0
        %2102 = vmatpush1.bf16.msra.mxu0 0
        %2103 = vmatprep.mubr.bf16.mxu0 0
        %2104 = vmatmul.mubr.bf16.gmra.mrb[0].mxu0 %v990
        %v2105 = vpop.f32.mrb[0].mxu0
        %v2106 = vadd.f32 0.0, %v2105
        %v2107 = vpop.f32.mrb[0].mxu0
        %v2108 = vadd.f32 0.0, %v2107
        %v2109 = vpop.f32.mrb[0].mxu0
        %v2110 = vpop.f32.mrb[0].mxu0
        %2111 = vdwg.mxu0
        %v2112 = vadd.f32 %v2053, %v2106
        %v2113 = vadd.f32 %v2054, %v2108
        %2114 = vrot.lane.b32.xlu0 %v1994, 15
        %v2115 = vpop.permute.xlu0 %2114
        %2116 = vrot.lane.b32.xlu0 %v1995, 15
        %v2117 = vpop.permute.xlu0 %2116
        %v2118 = vsel %vm439, %v2115, %v2117
        %v2119 = vsel %vm439, %v2117, %v2115
        %v2120 = vmul.f32 %v2119, %v445
        %v2121 = vmul.f32 %v2118, %v449
        %v2122 = vpack.c.bf16 %v2120, %v2120
        %v2123 = vpack.c.bf16 %v2121, %v2121
        %v2125 = vsel %vm314, %v2122, 0
        %v2128 = vsel %vm314, %v2123, 0
        %2130 = vmatprep.subr.bf16.mxu0 %v2128
        %2131 = vmatpush1.bf16.msra.mxu0 %v2125
        %2132 = vmatprep.subr.bf16.mxu0 0
        %2133 = vmatpush1.bf16.msra.mxu0 0
        %2134 = vmatprep.subr.bf16.mxu0 0
        %2135 = vmatpush1.bf16.msra.mxu0 0
        %2136 = vmatprep.subr.bf16.mxu0 0
        %2137 = vmatpush1.bf16.msra.mxu0 0
        %2138 = vmatprep.subr.bf16.mxu0 0
        %2139 = vmatpush1.bf16.msra.mxu0 0
        %2140 = vmatprep.subr.bf16.mxu0 0
        %2141 = vmatpush1.bf16.msra.mxu0 0
        %2142 = vmatprep.subr.bf16.mxu0 0
        %2143 = vmatpush1.bf16.msra.mxu0 0
        %2144 = vmatprep.subr.bf16.mxu0 0
        %2145 = vmatpush1.bf16.msra.mxu0 0
        %2146 = vmatprep.subr.bf16.mxu0 0
        %2147 = vmatpush1.bf16.msra.mxu0 0
        %2148 = vmatprep.subr.bf16.mxu0 0
        %2149 = vmatpush1.bf16.msra.mxu0 0
        %2150 = vmatprep.subr.bf16.mxu0 0
        %2151 = vmatpush1.bf16.msra.mxu0 0
        %2152 = vmatprep.subr.bf16.mxu0 0
        %2153 = vmatpush1.bf16.msra.mxu0 0
        %2154 = vmatprep.subr.bf16.mxu0 0
        %2155 = vmatpush1.bf16.msra.mxu0 0
        %2156 = vmatprep.subr.bf16.mxu0 0
        %2157 = vmatpush1.bf16.msra.mxu0 0
        %2158 = vmatprep.subr.bf16.mxu0 0
        %2159 = vmatpush1.bf16.msra.mxu0 0
        %2160 = vmatprep.subr.bf16.mxu0 0
        %2161 = vmatpush1.bf16.msra.mxu0 0
        %2162 = vmatprep.mubr.bf16.mxu0 0
        %2163 = vmatmul.mubr.bf16.gmra.mrb[0].mxu0 %v1052
        %v2164 = vpop.f32.mrb[0].mxu0
        %v2165 = vadd.f32 0.0, %v2164
        %v2166 = vpop.f32.mrb[0].mxu0
        %v2167 = vadd.f32 0.0, %v2166
        %v2168 = vpop.f32.mrb[0].mxu0
        %v2169 = vpop.f32.mrb[0].mxu0
        %2170 = vdwg.mxu0
        %v2171 = vadd.f32 %v2112, %v2165
        %v2172 = vadd.f32 %v2113, %v2167
        %2173 = vrot.lane.b32.xlu0 %v1994, 1
        %v2174 = vpop.permute.xlu0 %2173
        %2175 = vrot.lane.b32.xlu0 %v1995, 1
        %v2176 = vpop.permute.xlu0 %2175
        %v2177 = vsel %vm510, %v2174, %v2176
        %v2178 = vsel %vm510, %v2176, %v2174
        %v2179 = vmul.f32 %v2178, %v516
        %v2180 = vmul.f32 %v2177, %v520
        %v2181 = vpack.c.bf16 %v2179, %v2179
        %v2182 = vpack.c.bf16 %v2180, %v2180
        %v2184 = vsel %vm314, %v2181, 0
        %v2187 = vsel %vm314, %v2182, 0
        %2189 = vmatprep.subr.bf16.mxu0 %v2187
        %2190 = vmatpush1.bf16.msra.mxu0 %v2184
        %2191 = vmatprep.subr.bf16.mxu0 0
        %2192 = vmatpush1.bf16.msra.mxu0 0
        %2193 = vmatprep.subr.bf16.mxu0 0
        %2194 = vmatpush1.bf16.msra.mxu0 0
        %2195 = vmatprep.subr.bf16.mxu0 0
        %2196 = vmatpush1.bf16.msra.mxu0 0
        %2197 = vmatprep.subr.bf16.mxu0 0
        %2198 = vmatpush1.bf16.msra.mxu0 0
        %2199 = vmatprep.subr.bf16.mxu0 0
        %2200 = vmatpush1.bf16.msra.mxu0 0
        %2201 = vmatprep.subr.bf16.mxu0 0
        %2202 = vmatpush1.bf16.msra.mxu0 0
        %2203 = vmatprep.subr.bf16.mxu0 0
        %2204 = vmatpush1.bf16.msra.mxu0 0
        %2205 = vmatprep.subr.bf16.mxu0 0
        %2206 = vmatpush1.bf16.msra.mxu0 0
        %2207 = vmatprep.subr.bf16.mxu0 0
        %2208 = vmatpush1.bf16.msra.mxu0 0
        %2209 = vmatprep.subr.bf16.mxu0 0
        %2210 = vmatpush1.bf16.msra.mxu0 0
        %2211 = vmatprep.subr.bf16.mxu0 0
        %2212 = vmatpush1.bf16.msra.mxu0 0
        %2213 = vmatprep.subr.bf16.mxu0 0
        %2214 = vmatpush1.bf16.msra.mxu0 0
        %2215 = vmatprep.subr.bf16.mxu0 0
        %2216 = vmatpush1.bf16.msra.mxu0 0
        %2217 = vmatprep.subr.bf16.mxu0 0
        %2218 = vmatpush1.bf16.msra.mxu0 0
        %2219 = vmatprep.subr.bf16.mxu0 0
        %2220 = vmatpush1.bf16.msra.mxu0 0
        %2221 = vmatprep.mubr.bf16.mxu0 0
        %2222 = vmatmul.mubr.bf16.gmra.mrb[0].mxu0 %v1114
        %v2223 = vpop.f32.mrb[0].mxu0
        %v2224 = vadd.f32 0.0, %v2223
        %v2225 = vpop.f32.mrb[0].mxu0
        %v2226 = vadd.f32 0.0, %v2225
        %v2227 = vpop.f32.mrb[0].mxu0
        %v2228 = vpop.f32.mrb[0].mxu0
        %2229 = vdwg.mxu0
        %v2230 = vadd.f32 %v2171, %v2224
        %v2231 = vadd.f32 %v2172, %v2226
        %v2232 = vpack.c.bf16 %v1994, %v1994
        %v2233 = vpack.c.bf16 %v1995, %v1995
        %v2235 = vsel %vm314, %v2232, 0
        %v2238 = vsel %vm314, %v2233, 0
        %2240 = vmatprep.subr.bf16.mxu0 %v2238
        %2241 = vmatpush1.bf16.msra.mxu0 %v2235
        %2242 = vmatprep.subr.bf16.mxu0 0
        %2243 = vmatpush1.bf16.msra.mxu0 0
        %2244 = vmatprep.subr.bf16.mxu0 0
        %2245 = vmatpush1.bf16.msra.mxu0 0
        %2246 = vmatprep.subr.bf16.mxu0 0
        %2247 = vmatpush1.bf16.msra.mxu0 0
        %2248 = vmatprep.subr.bf16.mxu0 0
        %2249 = vmatpush1.bf16.msra.mxu0 0
        %2250 = vmatprep.subr.bf16.mxu0 0
        %2251 = vmatpush1.bf16.msra.mxu0 0
        %2252 = vmatprep.subr.bf16.mxu0 0
        %2253 = vmatpush1.bf16.msra.mxu0 0
        %2254 = vmatprep.subr.bf16.mxu0 0
        %2255 = vmatpush1.bf16.msra.mxu0 0
        %2256 = vmatprep.subr.bf16.mxu0 0
        %2257 = vmatpush1.bf16.msra.mxu0 0
        %2258 = vmatprep.subr.bf16.mxu0 0
        %2259 = vmatpush1.bf16.msra.mxu0 0
        %2260 = vmatprep.subr.bf16.mxu0 0
        %2261 = vmatpush1.bf16.msra.mxu0 0
        %2262 = vmatprep.subr.bf16.mxu0 0
        %2263 = vmatpush1.bf16.msra.mxu0 0
        %2264 = vmatprep.subr.bf16.mxu0 0
        %2265 = vmatpush1.bf16.msra.mxu0 0
        %2266 = vmatprep.subr.bf16.mxu0 0
        %2267 = vmatpush1.bf16.msra.mxu0 0
        %2268 = vmatprep.subr.bf16.mxu0 0
        %2269 = vmatpush1.bf16.msra.mxu0 0
        %2270 = vmatprep.subr.bf16.mxu0 0
        %2271 = vmatpush1.bf16.msra.mxu0 0
        %2272 = vmatprep.mubr.bf16.mxu0 0
        %2273 = vmatmul.mubr.bf16.gmra.mrb[0].mxu0 %v1168
        %v2274 = vpop.f32.mrb[0].mxu0
        %v2275 = vadd.f32 0.0, %v2274
        %v2276 = vpop.f32.mrb[0].mxu0
        %v2277 = vadd.f32 0.0, %v2276
        %v2278 = vpop.f32.mrb[0].mxu0
        %v2279 = vpop.f32.mrb[0].mxu0
        %2280 = vdwg.mxu0
        %v2281 = vadd.f32 %v2230, %v2275
        %v2282 = vadd.f32 %v2231, %v2277
        %2283 = vrot.lane.b32.xlu0 %v1994, 127
        %v2284 = vpop.permute.xlu0 %2283
        %2285 = vrot.lane.b32.xlu0 %v1995, 127
        %v2286 = vpop.permute.xlu0 %2285
        %v2287 = vsel %vm635, %v2284, %v2286
        %v2288 = vsel %vm635, %v2286, %v2284
        %v2289 = vmul.f32 %v2287, %v641
        %v2290 = vmul.f32 %v2288, %v645
        %v2291 = vpack.c.bf16 %v2289, %v2289
        %v2292 = vpack.c.bf16 %v2290, %v2290
        %v2294 = vsel %vm314, %v2291, 0
        %v2297 = vsel %vm314, %v2292, 0
        %2299 = vmatprep.subr.bf16.mxu0 %v2297
        %2300 = vmatpush1.bf16.msra.mxu0 %v2294
        %2301 = vmatprep.subr.bf16.mxu0 0
        %2302 = vmatpush1.bf16.msra.mxu0 0
        %2303 = vmatprep.subr.bf16.mxu0 0
        %2304 = vmatpush1.bf16.msra.mxu0 0
        %2305 = vmatprep.subr.bf16.mxu0 0
        %2306 = vmatpush1.bf16.msra.mxu0 0
        %2307 = vmatprep.subr.bf16.mxu0 0
        %2308 = vmatpush1.bf16.msra.mxu0 0
        %2309 = vmatprep.subr.bf16.mxu0 0
        %2310 = vmatpush1.bf16.msra.mxu0 0
        %2311 = vmatprep.subr.bf16.mxu0 0
        %2312 = vmatpush1.bf16.msra.mxu0 0
        %2313 = vmatprep.subr.bf16.mxu0 0
        %2314 = vmatpush1.bf16.msra.mxu0 0
        %2315 = vmatprep.subr.bf16.mxu0 0
        %2316 = vmatpush1.bf16.msra.mxu0 0
        %2317 = vmatprep.subr.bf16.mxu0 0
        %2318 = vmatpush1.bf16.msra.mxu0 0
        %2319 = vmatprep.subr.bf16.mxu0 0
        %2320 = vmatpush1.bf16.msra.mxu0 0
        %2321 = vmatprep.subr.bf16.mxu0 0
        %2322 = vmatpush1.bf16.msra.mxu0 0
        %2323 = vmatprep.subr.bf16.mxu0 0
        %2324 = vmatpush1.bf16.msra.mxu0 0
        %2325 = vmatprep.subr.bf16.mxu0 0
        %2326 = vmatpush1.bf16.msra.mxu0 0
        %2327 = vmatprep.subr.bf16.mxu0 0
        %2328 = vmatpush1.bf16.msra.mxu0 0
        %2329 = vmatprep.subr.bf16.mxu0 0
        %2330 = vmatpush1.bf16.msra.mxu0 0
        %2331 = vmatprep.mubr.bf16.mxu0 0
        %2332 = vmatmul.mubr.bf16.gmra.mrb[0].mxu0 %v1230
        %v2333 = vpop.f32.mrb[0].mxu0
        %v2334 = vadd.f32 0.0, %v2333
        %v2335 = vpop.f32.mrb[0].mxu0
        %v2336 = vadd.f32 0.0, %v2335
        %v2337 = vpop.f32.mrb[0].mxu0
        %v2338 = vpop.f32.mrb[0].mxu0
        %2339 = vdwg.mxu0
        %v2340 = vadd.f32 %v2281, %v2334
        %v2341 = vadd.f32 %v2282, %v2336
        %2342 = vrot.lane.b32.xlu0 %v1994, 113
        %v2343 = vpop.permute.xlu0 %2342
        %2344 = vrot.lane.b32.xlu0 %v1995, 113
        %v2345 = vpop.permute.xlu0 %2344
        %v2346 = vsel %vm706, %v2343, %v2345
        %v2347 = vsel %vm706, %v2345, %v2343
        %v2348 = vmul.f32 %v2346, %v712
        %v2349 = vmul.f32 %v2347, %v716
        %v2350 = vpack.c.bf16 %v2348, %v2348
        %v2351 = vpack.c.bf16 %v2349, %v2349
        %v2353 = vsel %vm314, %v2350, 0
        %v2356 = vsel %vm314, %v2351, 0
        %2358 = vmatprep.subr.bf16.mxu0 %v2356
        %2359 = vmatpush1.bf16.msra.mxu0 %v2353
        %2360 = vmatprep.subr.bf16.mxu0 0
        %2361 = vmatpush1.bf16.msra.mxu0 0
        %2362 = vmatprep.subr.bf16.mxu0 0
        %2363 = vmatpush1.bf16.msra.mxu0 0
        %2364 = vmatprep.subr.bf16.mxu0 0
        %2365 = vmatpush1.bf16.msra.mxu0 0
        %2366 = vmatprep.subr.bf16.mxu0 0
        %2367 = vmatpush1.bf16.msra.mxu0 0
        %2368 = vmatprep.subr.bf16.mxu0 0
        %2369 = vmatpush1.bf16.msra.mxu0 0
        %2370 = vmatprep.subr.bf16.mxu0 0
        %2371 = vmatpush1.bf16.msra.mxu0 0
        %2372 = vmatprep.subr.bf16.mxu0 0
        %2373 = vmatpush1.bf16.msra.mxu0 0
        %2374 = vmatprep.subr.bf16.mxu0 0
        %2375 = vmatpush1.bf16.msra.mxu0 0
        %2376 = vmatprep.subr.bf16.mxu0 0
        %2377 = vmatpush1.bf16.msra.mxu0 0
        %2378 = vmatprep.subr.bf16.mxu0 0
        %2379 = vmatpush1.bf16.msra.mxu0 0
        %2380 = vmatprep.subr.bf16.mxu0 0
        %2381 = vmatpush1.bf16.msra.mxu0 0
        %2382 = vmatprep.subr.bf16.mxu0 0
        %2383 = vmatpush1.bf16.msra.mxu0 0
        %2384 = vmatprep.subr.bf16.mxu0 0
        %2385 = vmatpush1.bf16.msra.mxu0 0
        %2386 = vmatprep.subr.bf16.mxu0 0
        %2387 = vmatpush1.bf16.msra.mxu0 0
        %2388 = vmatprep.subr.bf16.mxu0 0
        %2389 = vmatpush1.bf16.msra.mxu0 0
        %2390 = vmatprep.mubr.bf16.mxu0 0
        %2391 = vmatmul.mubr.bf16.gmra.mrb[0].mxu0 %v1292
        %v2392 = vpop.f32.mrb[0].mxu0
        %v2393 = vadd.f32 0.0, %v2392
        %v2394 = vpop.f32.mrb[0].mxu0
        %v2395 = vadd.f32 0.0, %v2394
        %v2396 = vpop.f32.mrb[0].mxu0
        %v2397 = vpop.f32.mrb[0].mxu0
        %2398 = vdwg.mxu0
        %v2399 = vadd.f32 %v2340, %v2393
        %v2400 = vadd.f32 %v2341, %v2395
        %2401 = vrot.lane.b32.xlu0 %v1994, 112
        %v2402 = vpop.permute.xlu0 %2401
        %2403 = vrot.lane.b32.xlu0 %v1995, 112
        %v2404 = vpop.permute.xlu0 %2403
        %v2405 = vsel %vm777, %v2402, %v2404
        %v2406 = vsel %vm777, %v2404, %v2402
        %v2407 = vmul.f32 %v2405, %v783
        %v2408 = vmul.f32 %v2406, %v787
        %v2409 = vpack.c.bf16 %v2407, %v2407
        %v2410 = vpack.c.bf16 %v2408, %v2408
        %v2412 = vsel %vm314, %v2409, 0
        %v2415 = vsel %vm314, %v2410, 0
        %2417 = vmatprep.subr.bf16.mxu0 %v2415
        %2418 = vmatpush1.bf16.msra.mxu0 %v2412
        %2419 = vmatprep.subr.bf16.mxu0 0
        %2420 = vmatpush1.bf16.msra.mxu0 0
        %2421 = vmatprep.subr.bf16.mxu0 0
        %2422 = vmatpush1.bf16.msra.mxu0 0
        %2423 = vmatprep.subr.bf16.mxu0 0
        %2424 = vmatpush1.bf16.msra.mxu0 0
        %2425 = vmatprep.subr.bf16.mxu0 0
        %2426 = vmatpush1.bf16.msra.mxu0 0
        %2427 = vmatprep.subr.bf16.mxu0 0
        %2428 = vmatpush1.bf16.msra.mxu0 0
        %2429 = vmatprep.subr.bf16.mxu0 0
        %2430 = vmatpush1.bf16.msra.mxu0 0
        %2431 = vmatprep.subr.bf16.mxu0 0
        %2432 = vmatpush1.bf16.msra.mxu0 0
        %2433 = vmatprep.subr.bf16.mxu0 0
        %2434 = vmatpush1.bf16.msra.mxu0 0
        %2435 = vmatprep.subr.bf16.mxu0 0
        %2436 = vmatpush1.bf16.msra.mxu0 0
        %2437 = vmatprep.subr.bf16.mxu0 0
        %2438 = vmatpush1.bf16.msra.mxu0 0
        %2439 = vmatprep.subr.bf16.mxu0 0
        %2440 = vmatpush1.bf16.msra.mxu0 0
        %2441 = vmatprep.subr.bf16.mxu0 0
        %2442 = vmatpush1.bf16.msra.mxu0 0
        %2443 = vmatprep.subr.bf16.mxu0 0
        %2444 = vmatpush1.bf16.msra.mxu0 0
        %2445 = vmatprep.subr.bf16.mxu0 0
        %2446 = vmatpush1.bf16.msra.mxu0 0
        %2447 = vmatprep.subr.bf16.mxu0 0
        %2448 = vmatpush1.bf16.msra.mxu0 0
        %2449 = vmatprep.mubr.bf16.mxu0 0
        %2450 = vmatmul.mubr.bf16.gmra.mrb[0].mxu0 %v1354
        %v2451 = vpop.f32.mrb[0].mxu0
        %v2452 = vadd.f32 0.0, %v2451
        %v2453 = vpop.f32.mrb[0].mxu0
        %v2454 = vadd.f32 0.0, %v2453
        %v2455 = vpop.f32.mrb[0].mxu0
        %v2456 = vpop.f32.mrb[0].mxu0
        %2457 = vdwg.mxu0
        %v2458 = vadd.f32 %v2399, %v2452
        %v2459 = vadd.f32 %v2400, %v2454
        %2460 = vrot.lane.b32.xlu0 %v1994, 111
        %v2461 = vpop.permute.xlu0 %2460
        %2462 = vrot.lane.b32.xlu0 %v1995, 111
        %v2463 = vpop.permute.xlu0 %2462
        %v2464 = vsel %vm848, %v2461, %v2463
        %v2465 = vsel %vm848, %v2463, %v2461
        %v2466 = vmul.f32 %v2464, %v854
        %v2467 = vmul.f32 %v2465, %v858
        %v2468 = vpack.c.bf16 %v2466, %v2466
        %v2469 = vpack.c.bf16 %v2467, %v2467
        %v2471 = vsel %vm314, %v2468, 0
        %v2474 = vsel %vm314, %v2469, 0
        %2476 = vmatprep.subr.bf16.mxu0 %v2474
        %2477 = vmatpush1.bf16.msra.mxu0 %v2471
        %2478 = vmatprep.subr.bf16.mxu0 0
        %2479 = vmatpush1.bf16.msra.mxu0 0
        %2480 = vmatprep.subr.bf16.mxu0 0
        %2481 = vmatpush1.bf16.msra.mxu0 0
        %2482 = vmatprep.subr.bf16.mxu0 0
        %2483 = vmatpush1.bf16.msra.mxu0 0
        %2484 = vmatprep.subr.bf16.mxu0 0
        %2485 = vmatpush1.bf16.msra.mxu0 0
        %2486 = vmatprep.subr.bf16.mxu0 0
        %2487 = vmatpush1.bf16.msra.mxu0 0
        %2488 = vmatprep.subr.bf16.mxu0 0
        %2489 = vmatpush1.bf16.msra.mxu0 0
        %2490 = vmatprep.subr.bf16.mxu0 0
        %2491 = vmatpush1.bf16.msra.mxu0 0
        %2492 = vmatprep.subr.bf16.mxu0 0
        %2493 = vmatpush1.bf16.msra.mxu0 0
        %2494 = vmatprep.subr.bf16.mxu0 0
        %2495 = vmatpush1.bf16.msra.mxu0 0
        %2496 = vmatprep.subr.bf16.mxu0 0
        %2497 = vmatpush1.bf16.msra.mxu0 0
        %2498 = vmatprep.subr.bf16.mxu0 0
        %2499 = vmatpush1.bf16.msra.mxu0 0
        %2500 = vmatprep.subr.bf16.mxu0 0
        %2501 = vmatpush1.bf16.msra.mxu0 0
        %2502 = vmatprep.subr.bf16.mxu0 0
        %2503 = vmatpush1.bf16.msra.mxu0 0
        %2504 = vmatprep.subr.bf16.mxu0 0
        %2505 = vmatpush1.bf16.msra.mxu0 0
        %2506 = vmatprep.subr.bf16.mxu0 0
        %2507 = vmatpush1.bf16.msra.mxu0 0
        %2508 = vmatprep.mubr.bf16.mxu0 0
        %2509 = vmatmul.mubr.bf16.gmra.mrb[0].mxu0 %v1416
        %v2510 = vpop.f32.mrb[0].mxu0
        %v2511 = vadd.f32 0.0, %v2510
        %v2512 = vpop.f32.mrb[0].mxu0
        %v2513 = vadd.f32 0.0, %v2512
        %v2514 = vpop.f32.mrb[0].mxu0
        %v2515 = vpop.f32.mrb[0].mxu0
        %2516 = vdwg.mxu0
        %v2517 = vadd.f32 %v2458, %v2511
        %v2518 = vadd.f32 %v2459, %v2513
        %v2519 = vadd.f32 %v1467, %v2517
        %v2520 = vadd.f32 %v1468, %v2518
        %v2521 = vmax.f32 %v2519, 0.0
        %v2522 = vmax.f32 %v2520, 0.0
        %2523 = vrot.lane.b32.xlu0 %v2521, 17
        %v2524 = vpop.permute.xlu0 %2523
        %2525 = vrot.lane.b32.xlu0 %v2522, 17
        %v2526 = vpop.permute.xlu0 %2525
        %v2527 = vsel %vm295, %v2524, %v2526
        %v2528 = vsel %vm295, %v2526, %v2524
        %v2529 = vmul.f32 %v2528, %v301
        %v2530 = vmul.f32 %v2527, %v305
        %v2531 = vpack.c.bf16 %v2529, %v2529
        %v2532 = vpack.c.bf16 %v2530, %v2530
        %v2534 = vsel %vm314, %v2531, 0
        %v2537 = vsel %vm314, %v2532, 0
        %2539 = vmatprep.subr.bf16.mxu0 %v2537
        %2540 = vmatpush1.bf16.msra.mxu0 %v2534
        %2541 = vmatprep.subr.bf16.mxu0 0
        %2542 = vmatpush1.bf16.msra.mxu0 0
        %2543 = vmatprep.subr.bf16.mxu0 0
        %2544 = vmatpush1.bf16.msra.mxu0 0
        %2545 = vmatprep.subr.bf16.mxu0 0
        %2546 = vmatpush1.bf16.msra.mxu0 0
        %2547 = vmatprep.subr.bf16.mxu0 0
        %2548 = vmatpush1.bf16.msra.mxu0 0
        %2549 = vmatprep.subr.bf16.mxu0 0
        %2550 = vmatpush1.bf16.msra.mxu0 0
        %2551 = vmatprep.subr.bf16.mxu0 0
        %2552 = vmatpush1.bf16.msra.mxu0 0
        %2553 = vmatprep.subr.bf16.mxu0 0
        %2554 = vmatpush1.bf16.msra.mxu0 0
        %2555 = vmatprep.subr.bf16.mxu0 0
        %2556 = vmatpush1.bf16.msra.mxu0 0
        %2557 = vmatprep.subr.bf16.mxu0 0
        %2558 = vmatpush1.bf16.msra.mxu0 0
        %2559 = vmatprep.subr.bf16.mxu0 0
        %2560 = vmatpush1.bf16.msra.mxu0 0
        %2561 = vmatprep.subr.bf16.mxu0 0
        %2562 = vmatpush1.bf16.msra.mxu0 0
        %2563 = vmatprep.subr.bf16.mxu0 0
        %2564 = vmatpush1.bf16.msra.mxu0 0
        %2565 = vmatprep.subr.bf16.mxu0 0
        %2566 = vmatpush1.bf16.msra.mxu0 0
        %2567 = vmatprep.subr.bf16.mxu0 0
        %2568 = vmatpush1.bf16.msra.mxu0 0
        %2569 = vmatprep.subr.bf16.mxu0 0
        %2570 = vmatpush1.bf16.msra.mxu0 0
        %2571 = vmatprep.mubr.bf16.mxu0 0
        %2572 = vmatmul.mubr.bf16.gmra.mrb[0].mxu0 %v312
        %v2573 = vpop.f32.mrb[0].mxu0
        %v2574 = vadd.f32 0.0, %v2573
        %v2575 = vpop.f32.mrb[0].mxu0
        %v2576 = vadd.f32 0.0, %v2575
        %v2577 = vpop.f32.mrb[0].mxu0
        %v2578 = vpop.f32.mrb[0].mxu0
        %2579 = vdwg.mxu0
        %v2580 = vadd.f32 %v277, %v2574
        %v2581 = vadd.f32 %v277, %v2576
        %2582 = vrot.lane.b32.xlu0 %v2521, 16
        %v2583 = vpop.permute.xlu0 %2582
        %2584 = vrot.lane.b32.xlu0 %v2522, 16
        %v2585 = vpop.permute.xlu0 %2584
        %v2586 = vsel %vm368, %v2583, %v2585
        %v2587 = vsel %vm368, %v2585, %v2583
        %v2588 = vmul.f32 %v2587, %v374
        %v2589 = vmul.f32 %v2586, %v378
        %v2590 = vpack.c.bf16 %v2588, %v2588
        %v2591 = vpack.c.bf16 %v2589, %v2589
        %v2593 = vsel %vm314, %v2590, 0
        %v2596 = vsel %vm314, %v2591, 0
        %2598 = vmatprep.subr.bf16.mxu0 %v2596
        %2599 = vmatpush1.bf16.msra.mxu0 %v2593
        %2600 = vmatprep.subr.bf16.mxu0 0
        %2601 = vmatpush1.bf16.msra.mxu0 0
        %2602 = vmatprep.subr.bf16.mxu0 0
        %2603 = vmatpush1.bf16.msra.mxu0 0
        %2604 = vmatprep.subr.bf16.mxu0 0
        %2605 = vmatpush1.bf16.msra.mxu0 0
        %2606 = vmatprep.subr.bf16.mxu0 0
        %2607 = vmatpush1.bf16.msra.mxu0 0
        %2608 = vmatprep.subr.bf16.mxu0 0
        %2609 = vmatpush1.bf16.msra.mxu0 0
        %2610 = vmatprep.subr.bf16.mxu0 0
        %2611 = vmatpush1.bf16.msra.mxu0 0
        %2612 = vmatprep.subr.bf16.mxu0 0
        %2613 = vmatpush1.bf16.msra.mxu0 0
        %2614 = vmatprep.subr.bf16.mxu0 0
        %2615 = vmatpush1.bf16.msra.mxu0 0
        %2616 = vmatprep.subr.bf16.mxu0 0
        %2617 = vmatpush1.bf16.msra.mxu0 0
        %2618 = vmatprep.subr.bf16.mxu0 0
        %2619 = vmatpush1.bf16.msra.mxu0 0
        %2620 = vmatprep.subr.bf16.mxu0 0
        %2621 = vmatpush1.bf16.msra.mxu0 0
        %2622 = vmatprep.subr.bf16.mxu0 0
        %2623 = vmatpush1.bf16.msra.mxu0 0
        %2624 = vmatprep.subr.bf16.mxu0 0
        %2625 = vmatpush1.bf16.msra.mxu0 0
        %2626 = vmatprep.subr.bf16.mxu0 0
        %2627 = vmatpush1.bf16.msra.mxu0 0
        %2628 = vmatprep.subr.bf16.mxu0 0
        %2629 = vmatpush1.bf16.msra.mxu0 0
        %2630 = vmatprep.mubr.bf16.mxu0 0
        %2631 = vmatmul.mubr.bf16.gmra.mrb[0].mxu0 %v384
        %v2632 = vpop.f32.mrb[0].mxu0
        %v2633 = vadd.f32 0.0, %v2632
        %v2634 = vpop.f32.mrb[0].mxu0
        %v2635 = vadd.f32 0.0, %v2634
        %v2636 = vpop.f32.mrb[0].mxu0
        %v2637 = vpop.f32.mrb[0].mxu0
        %2638 = vdwg.mxu0
        %v2639 = vadd.f32 %v2580, %v2633
        %v2640 = vadd.f32 %v2581, %v2635
        %2641 = vrot.lane.b32.xlu0 %v2521, 15
        %v2642 = vpop.permute.xlu0 %2641
        %2643 = vrot.lane.b32.xlu0 %v2522, 15
        %v2644 = vpop.permute.xlu0 %2643
        %v2645 = vsel %vm439, %v2642, %v2644
        %v2646 = vsel %vm439, %v2644, %v2642
        %v2647 = vmul.f32 %v2646, %v445
        %v2648 = vmul.f32 %v2645, %v449
        %v2649 = vpack.c.bf16 %v2647, %v2647
        %v2650 = vpack.c.bf16 %v2648, %v2648
        %v2652 = vsel %vm314, %v2649, 0
        %v2655 = vsel %vm314, %v2650, 0
        %2657 = vmatprep.subr.bf16.mxu0 %v2655
        %2658 = vmatpush1.bf16.msra.mxu0 %v2652
        %2659 = vmatprep.subr.bf16.mxu0 0
        %2660 = vmatpush1.bf16.msra.mxu0 0
        %2661 = vmatprep.subr.bf16.mxu0 0
        %2662 = vmatpush1.bf16.msra.mxu0 0
        %2663 = vmatprep.subr.bf16.mxu0 0
        %2664 = vmatpush1.bf16.msra.mxu0 0
        %2665 = vmatprep.subr.bf16.mxu0 0
        %2666 = vmatpush1.bf16.msra.mxu0 0
        %2667 = vmatprep.subr.bf16.mxu0 0
        %2668 = vmatpush1.bf16.msra.mxu0 0
        %2669 = vmatprep.subr.bf16.mxu0 0
        %2670 = vmatpush1.bf16.msra.mxu0 0
        %2671 = vmatprep.subr.bf16.mxu0 0
        %2672 = vmatpush1.bf16.msra.mxu0 0
        %2673 = vmatprep.subr.bf16.mxu0 0
        %2674 = vmatpush1.bf16.msra.mxu0 0
        %2675 = vmatprep.subr.bf16.mxu0 0
        %2676 = vmatpush1.bf16.msra.mxu0 0
        %2677 = vmatprep.subr.bf16.mxu0 0
        %2678 = vmatpush1.bf16.msra.mxu0 0
        %2679 = vmatprep.subr.bf16.mxu0 0
        %2680 = vmatpush1.bf16.msra.mxu0 0
        %2681 = vmatprep.subr.bf16.mxu0 0
        %2682 = vmatpush1.bf16.msra.mxu0 0
        %2683 = vmatprep.subr.bf16.mxu0 0
        %2684 = vmatpush1.bf16.msra.mxu0 0
        %2685 = vmatprep.subr.bf16.mxu0 0
        %2686 = vmatpush1.bf16.msra.mxu0 0
        %2687 = vmatprep.subr.bf16.mxu0 0
        %2688 = vmatpush1.bf16.msra.mxu0 0
        %2689 = vmatprep.mubr.bf16.mxu0 0
        %2690 = vmatmul.mubr.bf16.gmra.mrb[0].mxu0 %v455
        %v2691 = vpop.f32.mrb[0].mxu0
        %v2692 = vadd.f32 0.0, %v2691
        %v2693 = vpop.f32.mrb[0].mxu0
        %v2694 = vadd.f32 0.0, %v2693
        %v2695 = vpop.f32.mrb[0].mxu0
        %v2696 = vpop.f32.mrb[0].mxu0
        %2697 = vdwg.mxu0
        %v2698 = vadd.f32 %v2639, %v2692
        %v2699 = vadd.f32 %v2640, %v2694
        %2700 = vrot.lane.b32.xlu0 %v2521, 1
        %v2701 = vpop.permute.xlu0 %2700
        %2702 = vrot.lane.b32.xlu0 %v2522, 1
        %v2703 = vpop.permute.xlu0 %2702
        %v2704 = vsel %vm510, %v2701, %v2703
        %v2705 = vsel %vm510, %v2703, %v2701
        %v2706 = vmul.f32 %v2705, %v516
        %v2707 = vmul.f32 %v2704, %v520
        %v2708 = vpack.c.bf16 %v2706, %v2706
        %v2709 = vpack.c.bf16 %v2707, %v2707
        %v2711 = vsel %vm314, %v2708, 0
        %v2714 = vsel %vm314, %v2709, 0
        %2716 = vmatprep.subr.bf16.mxu0 %v2714
        %2717 = vmatpush1.bf16.msra.mxu0 %v2711
        %2718 = vmatprep.subr.bf16.mxu0 0
        %2719 = vmatpush1.bf16.msra.mxu0 0
        %2720 = vmatprep.subr.bf16.mxu0 0
        %2721 = vmatpush1.bf16.msra.mxu0 0
        %2722 = vmatprep.subr.bf16.mxu0 0
        %2723 = vmatpush1.bf16.msra.mxu0 0
        %2724 = vmatprep.subr.bf16.mxu0 0
        %2725 = vmatpush1.bf16.msra.mxu0 0
        %2726 = vmatprep.subr.bf16.mxu0 0
        %2727 = vmatpush1.bf16.msra.mxu0 0
        %2728 = vmatprep.subr.bf16.mxu0 0
        %2729 = vmatpush1.bf16.msra.mxu0 0
        %2730 = vmatprep.subr.bf16.mxu0 0
        %2731 = vmatpush1.bf16.msra.mxu0 0
        %2732 = vmatprep.subr.bf16.mxu0 0
        %2733 = vmatpush1.bf16.msra.mxu0 0
        %2734 = vmatprep.subr.bf16.mxu0 0
        %2735 = vmatpush1.bf16.msra.mxu0 0
        %2736 = vmatprep.subr.bf16.mxu0 0
        %2737 = vmatpush1.bf16.msra.mxu0 0
        %2738 = vmatprep.subr.bf16.mxu0 0
        %2739 = vmatpush1.bf16.msra.mxu0 0
        %2740 = vmatprep.subr.bf16.mxu0 0
        %2741 = vmatpush1.bf16.msra.mxu0 0
        %2742 = vmatprep.subr.bf16.mxu0 0
        %2743 = vmatpush1.bf16.msra.mxu0 0
        %2744 = vmatprep.subr.bf16.mxu0 0
        %2745 = vmatpush1.bf16.msra.mxu0 0
        %2746 = vmatprep.subr.bf16.mxu0 0
        %2747 = vmatpush1.bf16.msra.mxu0 0
        %2748 = vmatprep.mubr.bf16.mxu0 0
        %2749 = vmatmul.mubr.bf16.gmra.mrb[0].mxu0 %v526
        %v2750 = vpop.f32.mrb[0].mxu0
        %v2751 = vadd.f32 0.0, %v2750
        %v2752 = vpop.f32.mrb[0].mxu0
        %v2753 = vadd.f32 0.0, %v2752
        %v2754 = vpop.f32.mrb[0].mxu0
        %v2755 = vpop.f32.mrb[0].mxu0
        %2756 = vdwg.mxu0
        %v2757 = vadd.f32 %v2698, %v2751
        %v2758 = vadd.f32 %v2699, %v2753
        %v2759 = vpack.c.bf16 %v2521, %v2521
        %v2760 = vpack.c.bf16 %v2522, %v2522
        %v2762 = vsel %vm314, %v2759, 0
        %v2765 = vsel %vm314, %v2760, 0
        %2767 = vmatprep.subr.bf16.mxu0 %v2765
        %2768 = vmatpush1.bf16.msra.mxu0 %v2762
        %2769 = vmatprep.subr.bf16.mxu0 0
        %2770 = vmatpush1.bf16.msra.mxu0 0
        %2771 = vmatprep.subr.bf16.mxu0 0
        %2772 = vmatpush1.bf16.msra.mxu0 0
        %2773 = vmatprep.subr.bf16.mxu0 0
        %2774 = vmatpush1.bf16.msra.mxu0 0
        %2775 = vmatprep.subr.bf16.mxu0 0
        %2776 = vmatpush1.bf16.msra.mxu0 0
        %2777 = vmatprep.subr.bf16.mxu0 0
        %2778 = vmatpush1.bf16.msra.mxu0 0
        %2779 = vmatprep.subr.bf16.mxu0 0
        %2780 = vmatpush1.bf16.msra.mxu0 0
        %2781 = vmatprep.subr.bf16.mxu0 0
        %2782 = vmatpush1.bf16.msra.mxu0 0
        %2783 = vmatprep.subr.bf16.mxu0 0
        %2784 = vmatpush1.bf16.msra.mxu0 0
        %2785 = vmatprep.subr.bf16.mxu0 0
        %2786 = vmatpush1.bf16.msra.mxu0 0
        %2787 = vmatprep.subr.bf16.mxu0 0
        %2788 = vmatpush1.bf16.msra.mxu0 0
        %2789 = vmatprep.subr.bf16.mxu0 0
        %2790 = vmatpush1.bf16.msra.mxu0 0
        %2791 = vmatprep.subr.bf16.mxu0 0
        %2792 = vmatpush1.bf16.msra.mxu0 0
        %2793 = vmatprep.subr.bf16.mxu0 0
        %2794 = vmatpush1.bf16.msra.mxu0 0
        %2795 = vmatprep.subr.bf16.mxu0 0
        %2796 = vmatpush1.bf16.msra.mxu0 0
        %2797 = vmatprep.subr.bf16.mxu0 0
        %2798 = vmatpush1.bf16.msra.mxu0 0
        %2799 = vmatprep.mubr.bf16.mxu0 0
        %2800 = vmatmul.mubr.bf16.gmra.mrb[0].mxu0 %v580
        %v2801 = vpop.f32.mrb[0].mxu0
        %v2802 = vadd.f32 0.0, %v2801
        %v2803 = vpop.f32.mrb[0].mxu0
        %v2804 = vadd.f32 0.0, %v2803
        %v2805 = vpop.f32.mrb[0].mxu0
        %v2806 = vpop.f32.mrb[0].mxu0
        %2807 = vdwg.mxu0
        %v2808 = vadd.f32 %v2757, %v2802
        %v2809 = vadd.f32 %v2758, %v2804
        %2810 = vrot.lane.b32.xlu0 %v2521, 127
        %v2811 = vpop.permute.xlu0 %2810
        %2812 = vrot.lane.b32.xlu0 %v2522, 127
        %v2813 = vpop.permute.xlu0 %2812
        %v2814 = vsel %vm635, %v2811, %v2813
        %v2815 = vsel %vm635, %v2813, %v2811
        %v2816 = vmul.f32 %v2814, %v641
        %v2817 = vmul.f32 %v2815, %v645
        %v2818 = vpack.c.bf16 %v2816, %v2816
        %v2819 = vpack.c.bf16 %v2817, %v2817
        %v2821 = vsel %vm314, %v2818, 0
        %v2824 = vsel %vm314, %v2819, 0
        %2826 = vmatprep.subr.bf16.mxu0 %v2824
        %2827 = vmatpush1.bf16.msra.mxu0 %v2821
        %2828 = vmatprep.subr.bf16.mxu0 0
        %2829 = vmatpush1.bf16.msra.mxu0 0
        %2830 = vmatprep.subr.bf16.mxu0 0
        %2831 = vmatpush1.bf16.msra.mxu0 0
        %2832 = vmatprep.subr.bf16.mxu0 0
        %2833 = vmatpush1.bf16.msra.mxu0 0
        %2834 = vmatprep.subr.bf16.mxu0 0
        %2835 = vmatpush1.bf16.msra.mxu0 0
        %2836 = vmatprep.subr.bf16.mxu0 0
        %2837 = vmatpush1.bf16.msra.mxu0 0
        %2838 = vmatprep.subr.bf16.mxu0 0
        %2839 = vmatpush1.bf16.msra.mxu0 0
        %2840 = vmatprep.subr.bf16.mxu0 0
        %2841 = vmatpush1.bf16.msra.mxu0 0
        %2842 = vmatprep.subr.bf16.mxu0 0
        %2843 = vmatpush1.bf16.msra.mxu0 0
        %2844 = vmatprep.subr.bf16.mxu0 0
        %2845 = vmatpush1.bf16.msra.mxu0 0
        %2846 = vmatprep.subr.bf16.mxu0 0
        %2847 = vmatpush1.bf16.msra.mxu0 0
        %2848 = vmatprep.subr.bf16.mxu0 0
        %2849 = vmatpush1.bf16.msra.mxu0 0
        %2850 = vmatprep.subr.bf16.mxu0 0
        %2851 = vmatpush1.bf16.msra.mxu0 0
        %2852 = vmatprep.subr.bf16.mxu0 0
        %2853 = vmatpush1.bf16.msra.mxu0 0
        %2854 = vmatprep.subr.bf16.mxu0 0
        %2855 = vmatpush1.bf16.msra.mxu0 0
        %2856 = vmatprep.subr.bf16.mxu0 0
        %2857 = vmatpush1.bf16.msra.mxu0 0
        %2858 = vmatprep.mubr.bf16.mxu0 0
        %2859 = vmatmul.mubr.bf16.gmra.mrb[0].mxu0 %v651
        %v2860 = vpop.f32.mrb[0].mxu0
        %v2861 = vadd.f32 0.0, %v2860
        %v2862 = vpop.f32.mrb[0].mxu0
        %v2863 = vadd.f32 0.0, %v2862
        %v2864 = vpop.f32.mrb[0].mxu0
        %v2865 = vpop.f32.mrb[0].mxu0
        %2866 = vdwg.mxu0
        %v2867 = vadd.f32 %v2808, %v2861
        %v2868 = vadd.f32 %v2809, %v2863
        %2869 = vrot.lane.b32.xlu0 %v2521, 113
        %v2870 = vpop.permute.xlu0 %2869
        %2871 = vrot.lane.b32.xlu0 %v2522, 113
        %v2872 = vpop.permute.xlu0 %2871
        %v2873 = vsel %vm706, %v2870, %v2872
        %v2874 = vsel %vm706, %v2872, %v2870
        %v2875 = vmul.f32 %v2873, %v712
        %v2876 = vmul.f32 %v2874, %v716
        %v2877 = vpack.c.bf16 %v2875, %v2875
        %v2878 = vpack.c.bf16 %v2876, %v2876
        %v2880 = vsel %vm314, %v2877, 0
        %v2883 = vsel %vm314, %v2878, 0
        %2885 = vmatprep.subr.bf16.mxu0 %v2883
        %2886 = vmatpush1.bf16.msra.mxu0 %v2880
        %2887 = vmatprep.subr.bf16.mxu0 0
        %2888 = vmatpush1.bf16.msra.mxu0 0
        %2889 = vmatprep.subr.bf16.mxu0 0
        %2890 = vmatpush1.bf16.msra.mxu0 0
        %2891 = vmatprep.subr.bf16.mxu0 0
        %2892 = vmatpush1.bf16.msra.mxu0 0
        %2893 = vmatprep.subr.bf16.mxu0 0
        %2894 = vmatpush1.bf16.msra.mxu0 0
        %2895 = vmatprep.subr.bf16.mxu0 0
        %2896 = vmatpush1.bf16.msra.mxu0 0
        %2897 = vmatprep.subr.bf16.mxu0 0
        %2898 = vmatpush1.bf16.msra.mxu0 0
        %2899 = vmatprep.subr.bf16.mxu0 0
        %2900 = vmatpush1.bf16.msra.mxu0 0
        %2901 = vmatprep.subr.bf16.mxu0 0
        %2902 = vmatpush1.bf16.msra.mxu0 0
        %2903 = vmatprep.subr.bf16.mxu0 0
        %2904 = vmatpush1.bf16.msra.mxu0 0
        %2905 = vmatprep.subr.bf16.mxu0 0
        %2906 = vmatpush1.bf16.msra.mxu0 0
        %2907 = vmatprep.subr.bf16.mxu0 0
        %2908 = vmatpush1.bf16.msra.mxu0 0
        %2909 = vmatprep.subr.bf16.mxu0 0
        %2910 = vmatpush1.bf16.msra.mxu0 0
        %2911 = vmatprep.subr.bf16.mxu0 0
        %2912 = vmatpush1.bf16.msra.mxu0 0
        %2913 = vmatprep.subr.bf16.mxu0 0
        %2914 = vmatpush1.bf16.msra.mxu0 0
        %2915 = vmatprep.subr.bf16.mxu0 0
        %2916 = vmatpush1.bf16.msra.mxu0 0
        %2917 = vmatprep.mubr.bf16.mxu0 0
        %2918 = vmatmul.mubr.bf16.gmra.mrb[0].mxu0 %v722
        %v2919 = vpop.f32.mrb[0].mxu0
        %v2920 = vadd.f32 0.0, %v2919
        %v2921 = vpop.f32.mrb[0].mxu0
        %v2922 = vadd.f32 0.0, %v2921
        %v2923 = vpop.f32.mrb[0].mxu0
        %v2924 = vpop.f32.mrb[0].mxu0
        %2925 = vdwg.mxu0
        %v2926 = vadd.f32 %v2867, %v2920
        %v2927 = vadd.f32 %v2868, %v2922
        %2928 = vrot.lane.b32.xlu0 %v2521, 112
        %v2929 = vpop.permute.xlu0 %2928
        %2930 = vrot.lane.b32.xlu0 %v2522, 112
        %v2931 = vpop.permute.xlu0 %2930
        %v2932 = vsel %vm777, %v2929, %v2931
        %v2933 = vsel %vm777, %v2931, %v2929
        %v2934 = vmul.f32 %v2932, %v783
        %v2935 = vmul.f32 %v2933, %v787
        %v2936 = vpack.c.bf16 %v2934, %v2934
        %v2937 = vpack.c.bf16 %v2935, %v2935
        %v2939 = vsel %vm314, %v2936, 0
        %v2942 = vsel %vm314, %v2937, 0
        %2944 = vmatprep.subr.bf16.mxu0 %v2942
        %2945 = vmatpush1.bf16.msra.mxu0 %v2939
        %2946 = vmatprep.subr.bf16.mxu0 0
        %2947 = vmatpush1.bf16.msra.mxu0 0
        %2948 = vmatprep.subr.bf16.mxu0 0
        %2949 = vmatpush1.bf16.msra.mxu0 0
        %2950 = vmatprep.subr.bf16.mxu0 0
        %2951 = vmatpush1.bf16.msra.mxu0 0
        %2952 = vmatprep.subr.bf16.mxu0 0
        %2953 = vmatpush1.bf16.msra.mxu0 0
        %2954 = vmatprep.subr.bf16.mxu0 0
        %2955 = vmatpush1.bf16.msra.mxu0 0
        %2956 = vmatprep.subr.bf16.mxu0 0
        %2957 = vmatpush1.bf16.msra.mxu0 0
        %2958 = vmatprep.subr.bf16.mxu0 0
        %2959 = vmatpush1.bf16.msra.mxu0 0
        %2960 = vmatprep.subr.bf16.mxu0 0
        %2961 = vmatpush1.bf16.msra.mxu0 0
        %2962 = vmatprep.subr.bf16.mxu0 0
        %2963 = vmatpush1.bf16.msra.mxu0 0
        %2964 = vmatprep.subr.bf16.mxu0 0
        %2965 = vmatpush1.bf16.msra.mxu0 0
        %2966 = vmatprep.subr.bf16.mxu0 0
        %2967 = vmatpush1.bf16.msra.mxu0 0
        %2968 = vmatprep.subr.bf16.mxu0 0
        %2969 = vmatpush1.bf16.msra.mxu0 0
        %2970 = vmatprep.subr.bf16.mxu0 0
        %2971 = vmatpush1.bf16.msra.mxu0 0
        %2972 = vmatprep.subr.bf16.mxu0 0
        %2973 = vmatpush1.bf16.msra.mxu0 0
        %2974 = vmatprep.subr.bf16.mxu0 0
        %2975 = vmatpush1.bf16.msra.mxu0 0
        %2976 = vmatprep.mubr.bf16.mxu0 0
        %2977 = vmatmul.mubr.bf16.gmra.mrb[0].mxu0 %v793
        %v2978 = vpop.f32.mrb[0].mxu0
        %v2979 = vadd.f32 0.0, %v2978
        %v2980 = vpop.f32.mrb[0].mxu0
        %v2981 = vadd.f32 0.0, %v2980
        %v2982 = vpop.f32.mrb[0].mxu0
        %v2983 = vpop.f32.mrb[0].mxu0
        %2984 = vdwg.mxu0
        %v2985 = vadd.f32 %v2926, %v2979
        %v2986 = vadd.f32 %v2927, %v2981
        %2987 = vrot.lane.b32.xlu0 %v2521, 111
        %v2988 = vpop.permute.xlu0 %2987
        %2989 = vrot.lane.b32.xlu0 %v2522, 111
        %v2990 = vpop.permute.xlu0 %2989
        %v2991 = vsel %vm848, %v2988, %v2990
        %v2992 = vsel %vm848, %v2990, %v2988
        %v2993 = vmul.f32 %v2991, %v854
        %v2994 = vmul.f32 %v2992, %v858
        %v2995 = vpack.c.bf16 %v2993, %v2993
        %v2996 = vpack.c.bf16 %v2994, %v2994
        %v2998 = vsel %vm314, %v2995, 0
        %v3001 = vsel %vm314, %v2996, 0
        %3003 = vmatprep.subr.bf16.mxu0 %v3001
        %3004 = vmatpush1.bf16.msra.mxu0 %v2998
        %3005 = vmatprep.subr.bf16.mxu0 0
        %3006 = vmatpush1.bf16.msra.mxu0 0
        %3007 = vmatprep.subr.bf16.mxu0 0
        %3008 = vmatpush1.bf16.msra.mxu0 0
        %3009 = vmatprep.subr.bf16.mxu0 0
        %3010 = vmatpush1.bf16.msra.mxu0 0
        %3011 = vmatprep.subr.bf16.mxu0 0
        %3012 = vmatpush1.bf16.msra.mxu0 0
        %3013 = vmatprep.subr.bf16.mxu0 0
        %3014 = vmatpush1.bf16.msra.mxu0 0
        %3015 = vmatprep.subr.bf16.mxu0 0
        %3016 = vmatpush1.bf16.msra.mxu0 0
        %3017 = vmatprep.subr.bf16.mxu0 0
        %3018 = vmatpush1.bf16.msra.mxu0 0
        %3019 = vmatprep.subr.bf16.mxu0 0
        %3020 = vmatpush1.bf16.msra.mxu0 0
        %3021 = vmatprep.subr.bf16.mxu0 0
        %3022 = vmatpush1.bf16.msra.mxu0 0
        %3023 = vmatprep.subr.bf16.mxu0 0
        %3024 = vmatpush1.bf16.msra.mxu0 0
        %3025 = vmatprep.subr.bf16.mxu0 0
        %3026 = vmatpush1.bf16.msra.mxu0 0
        %3027 = vmatprep.subr.bf16.mxu0 0
        %3028 = vmatpush1.bf16.msra.mxu0 0
        %3029 = vmatprep.subr.bf16.mxu0 0
        %3030 = vmatpush1.bf16.msra.mxu0 0
        %3031 = vmatprep.subr.bf16.mxu0 0
        %3032 = vmatpush1.bf16.msra.mxu0 0
        %3033 = vmatprep.subr.bf16.mxu0 0
        %3034 = vmatpush1.bf16.msra.mxu0 0
        %3035 = vmatprep.mubr.bf16.mxu0 0
        %3036 = vmatmul.mubr.bf16.gmra.mrb[0].mxu0 %v864
        %v3037 = vpop.f32.mrb[0].mxu0
        %v3038 = vadd.f32 0.0, %v3037
        %v3039 = vpop.f32.mrb[0].mxu0
        %v3040 = vadd.f32 0.0, %v3039
        %v3041 = vpop.f32.mrb[0].mxu0
        %v3042 = vpop.f32.mrb[0].mxu0
        %3043 = vdwg.mxu0
        %v3044 = vadd.f32 %v2985, %v3038
        %v3045 = vadd.f32 %v2986, %v3040
        %v3046 = vmax.f32 %v3044, 0.0
        %v3047 = vmax.f32 %v3045, 0.0
        %3048 = vrot.lane.b32.xlu0 %v3046, 17
        %v3049 = vpop.permute.xlu0 %3048
        %3050 = vrot.lane.b32.xlu0 %v3047, 17
        %v3051 = vpop.permute.xlu0 %3050
        %v3052 = vsel %vm295, %v3049, %v3051
        %v3053 = vsel %vm295, %v3051, %v3049
        %v3054 = vmul.f32 %v3053, %v301
        %v3055 = vmul.f32 %v3052, %v305
        %v3056 = vpack.c.bf16 %v3054, %v3054
        %v3057 = vpack.c.bf16 %v3055, %v3055
        %v3059 = vsel %vm314, %v3056, 0
        %v3062 = vsel %vm314, %v3057, 0
        %3064 = vmatprep.subr.bf16.mxu0 %v3062
        %3065 = vmatpush1.bf16.msra.mxu0 %v3059
        %3066 = vmatprep.subr.bf16.mxu0 0
        %3067 = vmatpush1.bf16.msra.mxu0 0
        %3068 = vmatprep.subr.bf16.mxu0 0
        %3069 = vmatpush1.bf16.msra.mxu0 0
        %3070 = vmatprep.subr.bf16.mxu0 0
        %3071 = vmatpush1.bf16.msra.mxu0 0
        %3072 = vmatprep.subr.bf16.mxu0 0
        %3073 = vmatpush1.bf16.msra.mxu0 0
        %3074 = vmatprep.subr.bf16.mxu0 0
        %3075 = vmatpush1.bf16.msra.mxu0 0
        %3076 = vmatprep.subr.bf16.mxu0 0
        %3077 = vmatpush1.bf16.msra.mxu0 0
        %3078 = vmatprep.subr.bf16.mxu0 0
        %3079 = vmatpush1.bf16.msra.mxu0 0
        %3080 = vmatprep.subr.bf16.mxu0 0
        %3081 = vmatpush1.bf16.msra.mxu0 0
        %3082 = vmatprep.subr.bf16.mxu0 0
        %3083 = vmatpush1.bf16.msra.mxu0 0
        %3084 = vmatprep.subr.bf16.mxu0 0
        %3085 = vmatpush1.bf16.msra.mxu0 0
        %3086 = vmatprep.subr.bf16.mxu0 0
        %3087 = vmatpush1.bf16.msra.mxu0 0
        %3088 = vmatprep.subr.bf16.mxu0 0
        %3089 = vmatpush1.bf16.msra.mxu0 0
        %3090 = vmatprep.subr.bf16.mxu0 0
        %3091 = vmatpush1.bf16.msra.mxu0 0
        %3092 = vmatprep.subr.bf16.mxu0 0
        %3093 = vmatpush1.bf16.msra.mxu0 0
        %3094 = vmatprep.subr.bf16.mxu0 0
        %3095 = vmatpush1.bf16.msra.mxu0 0
        %3096 = vmatprep.mubr.bf16.mxu0 0
        %3097 = vmatmul.mubr.bf16.gmra.mrb[0].mxu0 %v928
        %v3098 = vpop.f32.mrb[0].mxu0
        %v3099 = vadd.f32 0.0, %v3098
        %v3100 = vpop.f32.mrb[0].mxu0
        %v3101 = vadd.f32 0.0, %v3100
        %v3102 = vpop.f32.mrb[0].mxu0
        %v3103 = vpop.f32.mrb[0].mxu0
        %3104 = vdwg.mxu0
        %v3105 = vadd.f32 %v283, %v3099
        %v3106 = vadd.f32 %v283, %v3101
        %3107 = vrot.lane.b32.xlu0 %v3046, 16
        %v3108 = vpop.permute.xlu0 %3107
        %3109 = vrot.lane.b32.xlu0 %v3047, 16
        %v3110 = vpop.permute.xlu0 %3109
        %v3111 = vsel %vm368, %v3108, %v3110
        %v3112 = vsel %vm368, %v3110, %v3108
        %v3113 = vmul.f32 %v3112, %v374
        %v3114 = vmul.f32 %v3111, %v378
        %v3115 = vpack.c.bf16 %v3113, %v3113
        %v3116 = vpack.c.bf16 %v3114, %v3114
        %v3118 = vsel %vm314, %v3115, 0
        %v3121 = vsel %vm314, %v3116, 0
        %3123 = vmatprep.subr.bf16.mxu0 %v3121
        %3124 = vmatpush1.bf16.msra.mxu0 %v3118
        %3125 = vmatprep.subr.bf16.mxu0 0
        %3126 = vmatpush1.bf16.msra.mxu0 0
        %3127 = vmatprep.subr.bf16.mxu0 0
        %3128 = vmatpush1.bf16.msra.mxu0 0
        %3129 = vmatprep.subr.bf16.mxu0 0
        %3130 = vmatpush1.bf16.msra.mxu0 0
        %3131 = vmatprep.subr.bf16.mxu0 0
        %3132 = vmatpush1.bf16.msra.mxu0 0
        %3133 = vmatprep.subr.bf16.mxu0 0
        %3134 = vmatpush1.bf16.msra.mxu0 0
        %3135 = vmatprep.subr.bf16.mxu0 0
        %3136 = vmatpush1.bf16.msra.mxu0 0
        %3137 = vmatprep.subr.bf16.mxu0 0
        %3138 = vmatpush1.bf16.msra.mxu0 0
        %3139 = vmatprep.subr.bf16.mxu0 0
        %3140 = vmatpush1.bf16.msra.mxu0 0
        %3141 = vmatprep.subr.bf16.mxu0 0
        %3142 = vmatpush1.bf16.msra.mxu0 0
        %3143 = vmatprep.subr.bf16.mxu0 0
        %3144 = vmatpush1.bf16.msra.mxu0 0
        %3145 = vmatprep.subr.bf16.mxu0 0
        %3146 = vmatpush1.bf16.msra.mxu0 0
        %3147 = vmatprep.subr.bf16.mxu0 0
        %3148 = vmatpush1.bf16.msra.mxu0 0
        %3149 = vmatprep.subr.bf16.mxu0 0
        %3150 = vmatpush1.bf16.msra.mxu0 0
        %3151 = vmatprep.subr.bf16.mxu0 0
        %3152 = vmatpush1.bf16.msra.mxu0 0
        %3153 = vmatprep.subr.bf16.mxu0 0
        %3154 = vmatpush1.bf16.msra.mxu0 0
        %3155 = vmatprep.mubr.bf16.mxu0 0
        %3156 = vmatmul.mubr.bf16.gmra.mrb[0].mxu0 %v990
        %v3157 = vpop.f32.mrb[0].mxu0
        %v3158 = vadd.f32 0.0, %v3157
        %v3159 = vpop.f32.mrb[0].mxu0
        %v3160 = vadd.f32 0.0, %v3159
        %v3161 = vpop.f32.mrb[0].mxu0
        %v3162 = vpop.f32.mrb[0].mxu0
        %3163 = vdwg.mxu0
        %v3164 = vadd.f32 %v3105, %v3158
        %v3165 = vadd.f32 %v3106, %v3160
        %3166 = vrot.lane.b32.xlu0 %v3046, 15
        %v3167 = vpop.permute.xlu0 %3166
        %3168 = vrot.lane.b32.xlu0 %v3047, 15
        %v3169 = vpop.permute.xlu0 %3168
        %v3170 = vsel %vm439, %v3167, %v3169
        %v3171 = vsel %vm439, %v3169, %v3167
        %v3172 = vmul.f32 %v3171, %v445
        %v3173 = vmul.f32 %v3170, %v449
        %v3174 = vpack.c.bf16 %v3172, %v3172
        %v3175 = vpack.c.bf16 %v3173, %v3173
        %v3177 = vsel %vm314, %v3174, 0
        %v3180 = vsel %vm314, %v3175, 0
        %3182 = vmatprep.subr.bf16.mxu0 %v3180
        %3183 = vmatpush1.bf16.msra.mxu0 %v3177
        %3184 = vmatprep.subr.bf16.mxu0 0
        %3185 = vmatpush1.bf16.msra.mxu0 0
        %3186 = vmatprep.subr.bf16.mxu0 0
        %3187 = vmatpush1.bf16.msra.mxu0 0
        %3188 = vmatprep.subr.bf16.mxu0 0
        %3189 = vmatpush1.bf16.msra.mxu0 0
        %3190 = vmatprep.subr.bf16.mxu0 0
        %3191 = vmatpush1.bf16.msra.mxu0 0
        %3192 = vmatprep.subr.bf16.mxu0 0
        %3193 = vmatpush1.bf16.msra.mxu0 0
        %3194 = vmatprep.subr.bf16.mxu0 0
        %3195 = vmatpush1.bf16.msra.mxu0 0
        %3196 = vmatprep.subr.bf16.mxu0 0
        %3197 = vmatpush1.bf16.msra.mxu0 0
        %3198 = vmatprep.subr.bf16.mxu0 0
        %3199 = vmatpush1.bf16.msra.mxu0 0
        %3200 = vmatprep.subr.bf16.mxu0 0
        %3201 = vmatpush1.bf16.msra.mxu0 0
        %3202 = vmatprep.subr.bf16.mxu0 0
        %3203 = vmatpush1.bf16.msra.mxu0 0
        %3204 = vmatprep.subr.bf16.mxu0 0
        %3205 = vmatpush1.bf16.msra.mxu0 0
        %3206 = vmatprep.subr.bf16.mxu0 0
        %3207 = vmatpush1.bf16.msra.mxu0 0
        %3208 = vmatprep.subr.bf16.mxu0 0
        %3209 = vmatpush1.bf16.msra.mxu0 0
        %3210 = vmatprep.subr.bf16.mxu0 0
        %3211 = vmatpush1.bf16.msra.mxu0 0
        %3212 = vmatprep.subr.bf16.mxu0 0
        %3213 = vmatpush1.bf16.msra.mxu0 0
        %3214 = vmatprep.mubr.bf16.mxu0 0
        %3215 = vmatmul.mubr.bf16.gmra.mrb[0].mxu0 %v1052
        %v3216 = vpop.f32.mrb[0].mxu0
        %v3217 = vadd.f32 0.0, %v3216
        %v3218 = vpop.f32.mrb[0].mxu0
        %v3219 = vadd.f32 0.0, %v3218
        %v3220 = vpop.f32.mrb[0].mxu0
        %v3221 = vpop.f32.mrb[0].mxu0
        %3222 = vdwg.mxu0
        %v3223 = vadd.f32 %v3164, %v3217
        %v3224 = vadd.f32 %v3165, %v3219
        %3225 = vrot.lane.b32.xlu0 %v3046, 1
        %v3226 = vpop.permute.xlu0 %3225
        %3227 = vrot.lane.b32.xlu0 %v3047, 1
        %v3228 = vpop.permute.xlu0 %3227
        %v3229 = vsel %vm510, %v3226, %v3228
        %v3230 = vsel %vm510, %v3228, %v3226
        %v3231 = vmul.f32 %v3230, %v516
        %v3232 = vmul.f32 %v3229, %v520
        %v3233 = vpack.c.bf16 %v3231, %v3231
        %v3234 = vpack.c.bf16 %v3232, %v3232
        %v3236 = vsel %vm314, %v3233, 0
        %v3239 = vsel %vm314, %v3234, 0
        %3241 = vmatprep.subr.bf16.mxu0 %v3239
        %3242 = vmatpush1.bf16.msra.mxu0 %v3236
        %3243 = vmatprep.subr.bf16.mxu0 0
        %3244 = vmatpush1.bf16.msra.mxu0 0
        %3245 = vmatprep.subr.bf16.mxu0 0
        %3246 = vmatpush1.bf16.msra.mxu0 0
        %3247 = vmatprep.subr.bf16.mxu0 0
        %3248 = vmatpush1.bf16.msra.mxu0 0
        %3249 = vmatprep.subr.bf16.mxu0 0
        %3250 = vmatpush1.bf16.msra.mxu0 0
        %3251 = vmatprep.subr.bf16.mxu0 0
        %3252 = vmatpush1.bf16.msra.mxu0 0
        %3253 = vmatprep.subr.bf16.mxu0 0
        %3254 = vmatpush1.bf16.msra.mxu0 0
        %3255 = vmatprep.subr.bf16.mxu0 0
        %3256 = vmatpush1.bf16.msra.mxu0 0
        %3257 = vmatprep.subr.bf16.mxu0 0
        %3258 = vmatpush1.bf16.msra.mxu0 0
        %3259 = vmatprep.subr.bf16.mxu0 0
        %3260 = vmatpush1.bf16.msra.mxu0 0
        %3261 = vmatprep.subr.bf16.mxu0 0
        %3262 = vmatpush1.bf16.msra.mxu0 0
        %3263 = vmatprep.subr.bf16.mxu0 0
        %3264 = vmatpush1.bf16.msra.mxu0 0
        %3265 = vmatprep.subr.bf16.mxu0 0
        %3266 = vmatpush1.bf16.msra.mxu0 0
        %3267 = vmatprep.subr.bf16.mxu0 0
        %3268 = vmatpush1.bf16.msra.mxu0 0
        %3269 = vmatprep.subr.bf16.mxu0 0
        %3270 = vmatpush1.bf16.msra.mxu0 0
        %3271 = vmatprep.subr.bf16.mxu0 0
        %3272 = vmatpush1.bf16.msra.mxu0 0
        %3273 = vmatprep.mubr.bf16.mxu0 0
        %3274 = vmatmul.mubr.bf16.gmra.mrb[0].mxu0 %v1114
        %v3275 = vpop.f32.mrb[0].mxu0
        %v3276 = vadd.f32 0.0, %v3275
        %v3277 = vpop.f32.mrb[0].mxu0
        %v3278 = vadd.f32 0.0, %v3277
        %v3279 = vpop.f32.mrb[0].mxu0
        %v3280 = vpop.f32.mrb[0].mxu0
        %3281 = vdwg.mxu0
        %v3282 = vadd.f32 %v3223, %v3276
        %v3283 = vadd.f32 %v3224, %v3278
        %v3284 = vpack.c.bf16 %v3046, %v3046
        %v3285 = vpack.c.bf16 %v3047, %v3047
        %v3287 = vsel %vm314, %v3284, 0
        %v3290 = vsel %vm314, %v3285, 0
        %3292 = vmatprep.subr.bf16.mxu0 %v3290
        %3293 = vmatpush1.bf16.msra.mxu0 %v3287
        %3294 = vmatprep.subr.bf16.mxu0 0
        %3295 = vmatpush1.bf16.msra.mxu0 0
        %3296 = vmatprep.subr.bf16.mxu0 0
        %3297 = vmatpush1.bf16.msra.mxu0 0
        %3298 = vmatprep.subr.bf16.mxu0 0
        %3299 = vmatpush1.bf16.msra.mxu0 0
        %3300 = vmatprep.subr.bf16.mxu0 0
        %3301 = vmatpush1.bf16.msra.mxu0 0
        %3302 = vmatprep.subr.bf16.mxu0 0
        %3303 = vmatpush1.bf16.msra.mxu0 0
        %3304 = vmatprep.subr.bf16.mxu0 0
        %3305 = vmatpush1.bf16.msra.mxu0 0
        %3306 = vmatprep.subr.bf16.mxu0 0
        %3307 = vmatpush1.bf16.msra.mxu0 0
        %3308 = vmatprep.subr.bf16.mxu0 0
        %3309 = vmatpush1.bf16.msra.mxu0 0
        %3310 = vmatprep.subr.bf16.mxu0 0
        %3311 = vmatpush1.bf16.msra.mxu0 0
        %3312 = vmatprep.subr.bf16.mxu0 0
        %3313 = vmatpush1.bf16.msra.mxu0 0
        %3314 = vmatprep.subr.bf16.mxu0 0
        %3315 = vmatpush1.bf16.msra.mxu0 0
        %3316 = vmatprep.subr.bf16.mxu0 0
        %3317 = vmatpush1.bf16.msra.mxu0 0
        %3318 = vmatprep.subr.bf16.mxu0 0
        %3319 = vmatpush1.bf16.msra.mxu0 0
        %3320 = vmatprep.subr.bf16.mxu0 0
        %3321 = vmatpush1.bf16.msra.mxu0 0
        %3322 = vmatprep.subr.bf16.mxu0 0
        %3323 = vmatpush1.bf16.msra.mxu0 0
        %3324 = vmatprep.mubr.bf16.mxu0 0
        %3325 = vmatmul.mubr.bf16.gmra.mrb[0].mxu0 %v1168
        %v3326 = vpop.f32.mrb[0].mxu0
        %v3327 = vadd.f32 0.0, %v3326
        %v3328 = vpop.f32.mrb[0].mxu0
        %v3329 = vadd.f32 0.0, %v3328
        %v3330 = vpop.f32.mrb[0].mxu0
        %v3331 = vpop.f32.mrb[0].mxu0
        %3332 = vdwg.mxu0
        %v3333 = vadd.f32 %v3282, %v3327
        %v3334 = vadd.f32 %v3283, %v3329
        %3335 = vrot.lane.b32.xlu0 %v3046, 127
        %v3336 = vpop.permute.xlu0 %3335
        %3337 = vrot.lane.b32.xlu0 %v3047, 127
        %v3338 = vpop.permute.xlu0 %3337
        %v3339 = vsel %vm635, %v3336, %v3338
        %v3340 = vsel %vm635, %v3338, %v3336
        %v3341 = vmul.f32 %v3339, %v641
        %v3342 = vmul.f32 %v3340, %v645
        %v3343 = vpack.c.bf16 %v3341, %v3341
        %v3344 = vpack.c.bf16 %v3342, %v3342
        %v3346 = vsel %vm314, %v3343, 0
        %v3349 = vsel %vm314, %v3344, 0
        %3351 = vmatprep.subr.bf16.mxu0 %v3349
        %3352 = vmatpush1.bf16.msra.mxu0 %v3346
        %3353 = vmatprep.subr.bf16.mxu0 0
        %3354 = vmatpush1.bf16.msra.mxu0 0
        %3355 = vmatprep.subr.bf16.mxu0 0
        %3356 = vmatpush1.bf16.msra.mxu0 0
        %3357 = vmatprep.subr.bf16.mxu0 0
        %3358 = vmatpush1.bf16.msra.mxu0 0
        %3359 = vmatprep.subr.bf16.mxu0 0
        %3360 = vmatpush1.bf16.msra.mxu0 0
        %3361 = vmatprep.subr.bf16.mxu0 0
        %3362 = vmatpush1.bf16.msra.mxu0 0
        %3363 = vmatprep.subr.bf16.mxu0 0
        %3364 = vmatpush1.bf16.msra.mxu0 0
        %3365 = vmatprep.subr.bf16.mxu0 0
        %3366 = vmatpush1.bf16.msra.mxu0 0
        %3367 = vmatprep.subr.bf16.mxu0 0
        %3368 = vmatpush1.bf16.msra.mxu0 0
        %3369 = vmatprep.subr.bf16.mxu0 0
        %3370 = vmatpush1.bf16.msra.mxu0 0
        %3371 = vmatprep.subr.bf16.mxu0 0
        %3372 = vmatpush1.bf16.msra.mxu0 0
        %3373 = vmatprep.subr.bf16.mxu0 0
        %3374 = vmatpush1.bf16.msra.mxu0 0
        %3375 = vmatprep.subr.bf16.mxu0 0
        %3376 = vmatpush1.bf16.msra.mxu0 0
        %3377 = vmatprep.subr.bf16.mxu0 0
        %3378 = vmatpush1.bf16.msra.mxu0 0
        %3379 = vmatprep.subr.bf16.mxu0 0
        %3380 = vmatpush1.bf16.msra.mxu0 0
        %3381 = vmatprep.subr.bf16.mxu0 0
        %3382 = vmatpush1.bf16.msra.mxu0 0
        %3383 = vmatprep.mubr.bf16.mxu0 0
        %3384 = vmatmul.mubr.bf16.gmra.mrb[0].mxu0 %v1230
        %v3385 = vpop.f32.mrb[0].mxu0
        %v3386 = vadd.f32 0.0, %v3385
        %v3387 = vpop.f32.mrb[0].mxu0
        %v3388 = vadd.f32 0.0, %v3387
        %v3389 = vpop.f32.mrb[0].mxu0
        %v3390 = vpop.f32.mrb[0].mxu0
        %3391 = vdwg.mxu0
        %v3392 = vadd.f32 %v3333, %v3386
        %v3393 = vadd.f32 %v3334, %v3388
        %3394 = vrot.lane.b32.xlu0 %v3046, 113
        %v3395 = vpop.permute.xlu0 %3394
        %3396 = vrot.lane.b32.xlu0 %v3047, 113
        %v3397 = vpop.permute.xlu0 %3396
        %v3398 = vsel %vm706, %v3395, %v3397
        %v3399 = vsel %vm706, %v3397, %v3395
        %v3400 = vmul.f32 %v3398, %v712
        %v3401 = vmul.f32 %v3399, %v716
        %v3402 = vpack.c.bf16 %v3400, %v3400
        %v3403 = vpack.c.bf16 %v3401, %v3401
        %v3405 = vsel %vm314, %v3402, 0
        %v3408 = vsel %vm314, %v3403, 0
        %3410 = vmatprep.subr.bf16.mxu0 %v3408
        %3411 = vmatpush1.bf16.msra.mxu0 %v3405
        %3412 = vmatprep.subr.bf16.mxu0 0
        %3413 = vmatpush1.bf16.msra.mxu0 0
        %3414 = vmatprep.subr.bf16.mxu0 0
        %3415 = vmatpush1.bf16.msra.mxu0 0
        %3416 = vmatprep.subr.bf16.mxu0 0
        %3417 = vmatpush1.bf16.msra.mxu0 0
        %3418 = vmatprep.subr.bf16.mxu0 0
        %3419 = vmatpush1.bf16.msra.mxu0 0
        %3420 = vmatprep.subr.bf16.mxu0 0
        %3421 = vmatpush1.bf16.msra.mxu0 0
        %3422 = vmatprep.subr.bf16.mxu0 0
        %3423 = vmatpush1.bf16.msra.mxu0 0
        %3424 = vmatprep.subr.bf16.mxu0 0
        %3425 = vmatpush1.bf16.msra.mxu0 0
        %3426 = vmatprep.subr.bf16.mxu0 0
        %3427 = vmatpush1.bf16.msra.mxu0 0
        %3428 = vmatprep.subr.bf16.mxu0 0
        %3429 = vmatpush1.bf16.msra.mxu0 0
        %3430 = vmatprep.subr.bf16.mxu0 0
        %3431 = vmatpush1.bf16.msra.mxu0 0
        %3432 = vmatprep.subr.bf16.mxu0 0
        %3433 = vmatpush1.bf16.msra.mxu0 0
        %3434 = vmatprep.subr.bf16.mxu0 0
        %3435 = vmatpush1.bf16.msra.mxu0 0
        %3436 = vmatprep.subr.bf16.mxu0 0
        %3437 = vmatpush1.bf16.msra.mxu0 0
        %3438 = vmatprep.subr.bf16.mxu0 0
        %3439 = vmatpush1.bf16.msra.mxu0 0
        %3440 = vmatprep.subr.bf16.mxu0 0
        %3441 = vmatpush1.bf16.msra.mxu0 0
        %3442 = vmatprep.mubr.bf16.mxu0 0
        %3443 = vmatmul.mubr.bf16.gmra.mrb[0].mxu0 %v1292
        %v3444 = vpop.f32.mrb[0].mxu0
        %v3445 = vadd.f32 0.0, %v3444
        %v3446 = vpop.f32.mrb[0].mxu0
        %v3447 = vadd.f32 0.0, %v3446
        %v3448 = vpop.f32.mrb[0].mxu0
        %v3449 = vpop.f32.mrb[0].mxu0
        %3450 = vdwg.mxu0
        %v3451 = vadd.f32 %v3392, %v3445
        %v3452 = vadd.f32 %v3393, %v3447
        %3453 = vrot.lane.b32.xlu0 %v3046, 112
        %v3454 = vpop.permute.xlu0 %3453
        %3455 = vrot.lane.b32.xlu0 %v3047, 112
        %v3456 = vpop.permute.xlu0 %3455
        %v3457 = vsel %vm777, %v3454, %v3456
        %v3458 = vsel %vm777, %v3456, %v3454
        %v3459 = vmul.f32 %v3457, %v783
        %v3460 = vmul.f32 %v3458, %v787
        %v3461 = vpack.c.bf16 %v3459, %v3459
        %v3462 = vpack.c.bf16 %v3460, %v3460
        %v3464 = vsel %vm314, %v3461, 0
        %v3467 = vsel %vm314, %v3462, 0
        %3469 = vmatprep.subr.bf16.mxu0 %v3467
        %3470 = vmatpush1.bf16.msra.mxu0 %v3464
        %3471 = vmatprep.subr.bf16.mxu0 0
        %3472 = vmatpush1.bf16.msra.mxu0 0
        %3473 = vmatprep.subr.bf16.mxu0 0
        %3474 = vmatpush1.bf16.msra.mxu0 0
        %3475 = vmatprep.subr.bf16.mxu0 0
        %3476 = vmatpush1.bf16.msra.mxu0 0
        %3477 = vmatprep.subr.bf16.mxu0 0
        %3478 = vmatpush1.bf16.msra.mxu0 0
        %3479 = vmatprep.subr.bf16.mxu0 0
        %3480 = vmatpush1.bf16.msra.mxu0 0
        %3481 = vmatprep.subr.bf16.mxu0 0
        %3482 = vmatpush1.bf16.msra.mxu0 0
        %3483 = vmatprep.subr.bf16.mxu0 0
        %3484 = vmatpush1.bf16.msra.mxu0 0
        %3485 = vmatprep.subr.bf16.mxu0 0
        %3486 = vmatpush1.bf16.msra.mxu0 0
        %3487 = vmatprep.subr.bf16.mxu0 0
        %3488 = vmatpush1.bf16.msra.mxu0 0
        %3489 = vmatprep.subr.bf16.mxu0 0
        %3490 = vmatpush1.bf16.msra.mxu0 0
        %3491 = vmatprep.subr.bf16.mxu0 0
        %3492 = vmatpush1.bf16.msra.mxu0 0
        %3493 = vmatprep.subr.bf16.mxu0 0
        %3494 = vmatpush1.bf16.msra.mxu0 0
        %3495 = vmatprep.subr.bf16.mxu0 0
        %3496 = vmatpush1.bf16.msra.mxu0 0
        %3497 = vmatprep.subr.bf16.mxu0 0
        %3498 = vmatpush1.bf16.msra.mxu0 0
        %3499 = vmatprep.subr.bf16.mxu0 0
        %3500 = vmatpush1.bf16.msra.mxu0 0
        %3501 = vmatprep.mubr.bf16.mxu0 0
        %3502 = vmatmul.mubr.bf16.gmra.mrb[0].mxu0 %v1354
        %v3503 = vpop.f32.mrb[0].mxu0
        %v3504 = vadd.f32 0.0, %v3503
        %v3505 = vpop.f32.mrb[0].mxu0
        %v3506 = vadd.f32 0.0, %v3505
        %v3507 = vpop.f32.mrb[0].mxu0
        %v3508 = vpop.f32.mrb[0].mxu0
        %3509 = vdwg.mxu0
        %v3510 = vadd.f32 %v3451, %v3504
        %v3511 = vadd.f32 %v3452, %v3506
        %3512 = vrot.lane.b32.xlu0 %v3046, 111
        %v3513 = vpop.permute.xlu0 %3512
        %3514 = vrot.lane.b32.xlu0 %v3047, 111
        %v3515 = vpop.permute.xlu0 %3514
        %v3516 = vsel %vm848, %v3513, %v3515
        %v3517 = vsel %vm848, %v3515, %v3513
        %v3518 = vmul.f32 %v3516, %v854
        %v3519 = vmul.f32 %v3517, %v858
        %v3520 = vpack.c.bf16 %v3518, %v3518
        %v3521 = vpack.c.bf16 %v3519, %v3519
        %v3523 = vsel %vm314, %v3520, 0
        %v3526 = vsel %vm314, %v3521, 0
        %3528 = vmatprep.subr.bf16.mxu0 %v3526
        %3529 = vmatpush1.bf16.msra.mxu0 %v3523
        %3530 = vmatprep.subr.bf16.mxu0 0
        %3531 = vmatpush1.bf16.msra.mxu0 0
        %3532 = vmatprep.subr.bf16.mxu0 0
        %3533 = vmatpush1.bf16.msra.mxu0 0
        %3534 = vmatprep.subr.bf16.mxu0 0
        %3535 = vmatpush1.bf16.msra.mxu0 0
        %3536 = vmatprep.subr.bf16.mxu0 0
        %3537 = vmatpush1.bf16.msra.mxu0 0
        %3538 = vmatprep.subr.bf16.mxu0 0
        %3539 = vmatpush1.bf16.msra.mxu0 0
        %3540 = vmatprep.subr.bf16.mxu0 0
        %3541 = vmatpush1.bf16.msra.mxu0 0
        %3542 = vmatprep.subr.bf16.mxu0 0
        %3543 = vmatpush1.bf16.msra.mxu0 0
        %3544 = vmatprep.subr.bf16.mxu0 0
        %3545 = vmatpush1.bf16.msra.mxu0 0
        %3546 = vmatprep.subr.bf16.mxu0 0
        %3547 = vmatpush1.bf16.msra.mxu0 0
        %3548 = vmatprep.subr.bf16.mxu0 0
        %3549 = vmatpush1.bf16.msra.mxu0 0
        %3550 = vmatprep.subr.bf16.mxu0 0
        %3551 = vmatpush1.bf16.msra.mxu0 0
        %3552 = vmatprep.subr.bf16.mxu0 0
        %3553 = vmatpush1.bf16.msra.mxu0 0
        %3554 = vmatprep.subr.bf16.mxu0 0
        %3555 = vmatpush1.bf16.msra.mxu0 0
        %3556 = vmatprep.subr.bf16.mxu0 0
        %3557 = vmatpush1.bf16.msra.mxu0 0
        %3558 = vmatprep.subr.bf16.mxu0 0
        %3559 = vmatpush1.bf16.msra.mxu0 0
        %3560 = vmatprep.mubr.bf16.mxu0 0
        %3561 = vmatmul.mubr.bf16.gmra.mrb[0].mxu0 %v1416
        %v3562 = vpop.f32.mrb[0].mxu0
        %v3563 = vadd.f32 0.0, %v3562
        %v3564 = vpop.f32.mrb[0].mxu0
        %v3565 = vadd.f32 0.0, %v3564
        %v3566 = vpop.f32.mrb[0].mxu0
        %v3567 = vpop.f32.mrb[0].mxu0
        %3568 = vdwg.mxu0
        %v3569 = vadd.f32 %v3510, %v3563
        %v3570 = vadd.f32 %v3511, %v3565
        %v3571 = vadd.f32 %v2519, %v3569
        %v3572 = vadd.f32 %v2520, %v3570
        %v3573 = vmax.f32 %v3571, 0.0
        %v3574 = vmax.f32 %v3572, 0.0
        %3575 = vrot.lane.b32.xlu0 %v3573, 17
        %v3576 = vpop.permute.xlu0 %3575
        %3577 = vrot.lane.b32.xlu0 %v3574, 17
        %v3578 = vpop.permute.xlu0 %3577
        %v3579 = vsel %vm295, %v3576, %v3578
        %v3580 = vsel %vm295, %v3578, %v3576
        %v3581 = vmul.f32 %v3580, %v301
        %v3582 = vmul.f32 %v3579, %v305
        %v3583 = vpack.c.bf16 %v3581, %v3581
        %v3584 = vpack.c.bf16 %v3582, %v3582
        %v3586 = vsel %vm314, %v3583, 0
        %v3589 = vsel %vm314, %v3584, 0
        %3591 = vmatprep.subr.bf16.mxu0 %v3589
        %3592 = vmatpush1.bf16.msra.mxu0 %v3586
        %3593 = vmatprep.subr.bf16.mxu0 0
        %3594 = vmatpush1.bf16.msra.mxu0 0
        %3595 = vmatprep.subr.bf16.mxu0 0
        %3596 = vmatpush1.bf16.msra.mxu0 0
        %3597 = vmatprep.subr.bf16.mxu0 0
        %3598 = vmatpush1.bf16.msra.mxu0 0
        %3599 = vmatprep.subr.bf16.mxu0 0
        %3600 = vmatpush1.bf16.msra.mxu0 0
        %3601 = vmatprep.subr.bf16.mxu0 0
        %3602 = vmatpush1.bf16.msra.mxu0 0
        %3603 = vmatprep.subr.bf16.mxu0 0
        %3604 = vmatpush1.bf16.msra.mxu0 0
        %3605 = vmatprep.subr.bf16.mxu0 0
        %3606 = vmatpush1.bf16.msra.mxu0 0
        %3607 = vmatprep.subr.bf16.mxu0 0
        %3608 = vmatpush1.bf16.msra.mxu0 0
        %3609 = vmatprep.subr.bf16.mxu0 0
        %3610 = vmatpush1.bf16.msra.mxu0 0
        %3611 = vmatprep.subr.bf16.mxu0 0
        %3612 = vmatpush1.bf16.msra.mxu0 0
        %3613 = vmatprep.subr.bf16.mxu0 0
        %3614 = vmatpush1.bf16.msra.mxu0 0
        %3615 = vmatprep.subr.bf16.mxu0 0
        %3616 = vmatpush1.bf16.msra.mxu0 0
        %3617 = vmatprep.subr.bf16.mxu0 0
        %3618 = vmatpush1.bf16.msra.mxu0 0
        %3619 = vmatprep.subr.bf16.mxu0 0
        %3620 = vmatpush1.bf16.msra.mxu0 0
        %3621 = vmatprep.subr.bf16.mxu0 0
        %3622 = vmatpush1.bf16.msra.mxu0 0
        %3623 = vmatprep.mubr.bf16.mxu0 0
        %3624 = vmatmul.mubr.bf16.gmra.mrb[0].mxu0 %v312
        %v3625 = vpop.f32.mrb[0].mxu0
        %v3626 = vadd.f32 0.0, %v3625
        %v3627 = vpop.f32.mrb[0].mxu0
        %v3628 = vadd.f32 0.0, %v3627
        %v3629 = vpop.f32.mrb[0].mxu0
        %v3630 = vpop.f32.mrb[0].mxu0
        %3631 = vdwg.mxu0
        %v3632 = vadd.f32 %v277, %v3626
        %v3633 = vadd.f32 %v277, %v3628
        %3634 = vrot.lane.b32.xlu0 %v3573, 16
        %v3635 = vpop.permute.xlu0 %3634
        %3636 = vrot.lane.b32.xlu0 %v3574, 16
        %v3637 = vpop.permute.xlu0 %3636
        %v3638 = vsel %vm368, %v3635, %v3637
        %v3639 = vsel %vm368, %v3637, %v3635
        %v3640 = vmul.f32 %v3639, %v374
        %v3641 = vmul.f32 %v3638, %v378
        %v3642 = vpack.c.bf16 %v3640, %v3640
        %v3643 = vpack.c.bf16 %v3641, %v3641
        %v3645 = vsel %vm314, %v3642, 0
        %v3648 = vsel %vm314, %v3643, 0
        %3650 = vmatprep.subr.bf16.mxu0 %v3648
        %3651 = vmatpush1.bf16.msra.mxu0 %v3645
        %3652 = vmatprep.subr.bf16.mxu0 0
        %3653 = vmatpush1.bf16.msra.mxu0 0
        %3654 = vmatprep.subr.bf16.mxu0 0
        %3655 = vmatpush1.bf16.msra.mxu0 0
        %3656 = vmatprep.subr.bf16.mxu0 0
        %3657 = vmatpush1.bf16.msra.mxu0 0
        %3658 = vmatprep.subr.bf16.mxu0 0
        %3659 = vmatpush1.bf16.msra.mxu0 0
        %3660 = vmatprep.subr.bf16.mxu0 0
        %3661 = vmatpush1.bf16.msra.mxu0 0
        %3662 = vmatprep.subr.bf16.mxu0 0
        %3663 = vmatpush1.bf16.msra.mxu0 0
        %3664 = vmatprep.subr.bf16.mxu0 0
        %3665 = vmatpush1.bf16.msra.mxu0 0
        %3666 = vmatprep.subr.bf16.mxu0 0
        %3667 = vmatpush1.bf16.msra.mxu0 0
        %3668 = vmatprep.subr.bf16.mxu0 0
        %3669 = vmatpush1.bf16.msra.mxu0 0
        %3670 = vmatprep.subr.bf16.mxu0 0
        %3671 = vmatpush1.bf16.msra.mxu0 0
        %3672 = vmatprep.subr.bf16.mxu0 0
        %3673 = vmatpush1.bf16.msra.mxu0 0
        %3674 = vmatprep.subr.bf16.mxu0 0
        %3675 = vmatpush1.bf16.msra.mxu0 0
        %3676 = vmatprep.subr.bf16.mxu0 0
        %3677 = vmatpush1.bf16.msra.mxu0 0
        %3678 = vmatprep.subr.bf16.mxu0 0
        %3679 = vmatpush1.bf16.msra.mxu0 0
        %3680 = vmatprep.subr.bf16.mxu0 0
        %3681 = vmatpush1.bf16.msra.mxu0 0
        %3682 = vmatprep.mubr.bf16.mxu0 0
        %3683 = vmatmul.mubr.bf16.gmra.mrb[0].mxu0 %v384
        %v3684 = vpop.f32.mrb[0].mxu0
        %v3685 = vadd.f32 0.0, %v3684
        %v3686 = vpop.f32.mrb[0].mxu0
        %v3687 = vadd.f32 0.0, %v3686
        %v3688 = vpop.f32.mrb[0].mxu0
        %v3689 = vpop.f32.mrb[0].mxu0
        %3690 = vdwg.mxu0
        %v3691 = vadd.f32 %v3632, %v3685
        %v3692 = vadd.f32 %v3633, %v3687
        %3693 = vrot.lane.b32.xlu0 %v3573, 15
        %v3694 = vpop.permute.xlu0 %3693
        %3695 = vrot.lane.b32.xlu0 %v3574, 15
        %v3696 = vpop.permute.xlu0 %3695
        %v3697 = vsel %vm439, %v3694, %v3696
        %v3698 = vsel %vm439, %v3696, %v3694
        %v3699 = vmul.f32 %v3698, %v445
        %v3700 = vmul.f32 %v3697, %v449
        %v3701 = vpack.c.bf16 %v3699, %v3699
        %v3702 = vpack.c.bf16 %v3700, %v3700
        %v3704 = vsel %vm314, %v3701, 0
        %v3707 = vsel %vm314, %v3702, 0
        %3709 = vmatprep.subr.bf16.mxu0 %v3707
        %3710 = vmatpush1.bf16.msra.mxu0 %v3704
        %3711 = vmatprep.subr.bf16.mxu0 0
        %3712 = vmatpush1.bf16.msra.mxu0 0
        %3713 = vmatprep.subr.bf16.mxu0 0
        %3714 = vmatpush1.bf16.msra.mxu0 0
        %3715 = vmatprep.subr.bf16.mxu0 0
        %3716 = vmatpush1.bf16.msra.mxu0 0
        %3717 = vmatprep.subr.bf16.mxu0 0
        %3718 = vmatpush1.bf16.msra.mxu0 0
        %3719 = vmatprep.subr.bf16.mxu0 0
        %3720 = vmatpush1.bf16.msra.mxu0 0
        %3721 = vmatprep.subr.bf16.mxu0 0
        %3722 = vmatpush1.bf16.msra.mxu0 0
        %3723 = vmatprep.subr.bf16.mxu0 0
        %3724 = vmatpush1.bf16.msra.mxu0 0
        %3725 = vmatprep.subr.bf16.mxu0 0
        %3726 = vmatpush1.bf16.msra.mxu0 0
        %3727 = vmatprep.subr.bf16.mxu0 0
        %3728 = vmatpush1.bf16.msra.mxu0 0
        %3729 = vmatprep.subr.bf16.mxu0 0
        %3730 = vmatpush1.bf16.msra.mxu0 0
        %3731 = vmatprep.subr.bf16.mxu0 0
        %3732 = vmatpush1.bf16.msra.mxu0 0
        %3733 = vmatprep.subr.bf16.mxu0 0
        %3734 = vmatpush1.bf16.msra.mxu0 0
        %3735 = vmatprep.subr.bf16.mxu0 0
        %3736 = vmatpush1.bf16.msra.mxu0 0
        %3737 = vmatprep.subr.bf16.mxu0 0
        %3738 = vmatpush1.bf16.msra.mxu0 0
        %3739 = vmatprep.subr.bf16.mxu0 0
        %3740 = vmatpush1.bf16.msra.mxu0 0
        %3741 = vmatprep.mubr.bf16.mxu0 0
        %3742 = vmatmul.mubr.bf16.gmra.mrb[0].mxu0 %v455
        %v3743 = vpop.f32.mrb[0].mxu0
        %v3744 = vadd.f32 0.0, %v3743
        %v3745 = vpop.f32.mrb[0].mxu0
        %v3746 = vadd.f32 0.0, %v3745
        %v3747 = vpop.f32.mrb[0].mxu0
        %v3748 = vpop.f32.mrb[0].mxu0
        %3749 = vdwg.mxu0
        %v3750 = vadd.f32 %v3691, %v3744
        %v3751 = vadd.f32 %v3692, %v3746
        %3752 = vrot.lane.b32.xlu0 %v3573, 1
        %v3753 = vpop.permute.xlu0 %3752
        %3754 = vrot.lane.b32.xlu0 %v3574, 1
        %v3755 = vpop.permute.xlu0 %3754
        %v3756 = vsel %vm510, %v3753, %v3755
        %v3757 = vsel %vm510, %v3755, %v3753
        %v3758 = vmul.f32 %v3757, %v516
        %v3759 = vmul.f32 %v3756, %v520
        %v3760 = vpack.c.bf16 %v3758, %v3758
        %v3761 = vpack.c.bf16 %v3759, %v3759
        %v3763 = vsel %vm314, %v3760, 0
        %v3766 = vsel %vm314, %v3761, 0
        %3768 = vmatprep.subr.bf16.mxu0 %v3766
        %3769 = vmatpush1.bf16.msra.mxu0 %v3763
        %3770 = vmatprep.subr.bf16.mxu0 0
        %3771 = vmatpush1.bf16.msra.mxu0 0
        %3772 = vmatprep.subr.bf16.mxu0 0
        %3773 = vmatpush1.bf16.msra.mxu0 0
        %3774 = vmatprep.subr.bf16.mxu0 0
        %3775 = vmatpush1.bf16.msra.mxu0 0
        %3776 = vmatprep.subr.bf16.mxu0 0
        %3777 = vmatpush1.bf16.msra.mxu0 0
        %3778 = vmatprep.subr.bf16.mxu0 0
        %3779 = vmatpush1.bf16.msra.mxu0 0
        %3780 = vmatprep.subr.bf16.mxu0 0
        %3781 = vmatpush1.bf16.msra.mxu0 0
        %3782 = vmatprep.subr.bf16.mxu0 0
        %3783 = vmatpush1.bf16.msra.mxu0 0
        %3784 = vmatprep.subr.bf16.mxu0 0
        %3785 = vmatpush1.bf16.msra.mxu0 0
        %3786 = vmatprep.subr.bf16.mxu0 0
        %3787 = vmatpush1.bf16.msra.mxu0 0
        %3788 = vmatprep.subr.bf16.mxu0 0
        %3789 = vmatpush1.bf16.msra.mxu0 0
        %3790 = vmatprep.subr.bf16.mxu0 0
        %3791 = vmatpush1.bf16.msra.mxu0 0
        %3792 = vmatprep.subr.bf16.mxu0 0
        %3793 = vmatpush1.bf16.msra.mxu0 0
        %3794 = vmatprep.subr.bf16.mxu0 0
        %3795 = vmatpush1.bf16.msra.mxu0 0
        %3796 = vmatprep.subr.bf16.mxu0 0
        %3797 = vmatpush1.bf16.msra.mxu0 0
        %3798 = vmatprep.subr.bf16.mxu0 0
        %3799 = vmatpush1.bf16.msra.mxu0 0
        %3800 = vmatprep.mubr.bf16.mxu0 0
        %3801 = vmatmul.mubr.bf16.gmra.mrb[0].mxu0 %v526
        %v3802 = vpop.f32.mrb[0].mxu0
        %v3803 = vadd.f32 0.0, %v3802
        %v3804 = vpop.f32.mrb[0].mxu0
        %v3805 = vadd.f32 0.0, %v3804
        %v3806 = vpop.f32.mrb[0].mxu0
        %v3807 = vpop.f32.mrb[0].mxu0
        %3808 = vdwg.mxu0
        %v3809 = vadd.f32 %v3750, %v3803
        %v3810 = vadd.f32 %v3751, %v3805
        %v3811 = vpack.c.bf16 %v3573, %v3573
        %v3812 = vpack.c.bf16 %v3574, %v3574
        %v3814 = vsel %vm314, %v3811, 0
        %v3817 = vsel %vm314, %v3812, 0
        %3819 = vmatprep.subr.bf16.mxu0 %v3817
        %3820 = vmatpush1.bf16.msra.mxu0 %v3814
        %3821 = vmatprep.subr.bf16.mxu0 0
        %3822 = vmatpush1.bf16.msra.mxu0 0
        %3823 = vmatprep.subr.bf16.mxu0 0
        %3824 = vmatpush1.bf16.msra.mxu0 0
        %3825 = vmatprep.subr.bf16.mxu0 0
        %3826 = vmatpush1.bf16.msra.mxu0 0
        %3827 = vmatprep.subr.bf16.mxu0 0
        %3828 = vmatpush1.bf16.msra.mxu0 0
        %3829 = vmatprep.subr.bf16.mxu0 0
        %3830 = vmatpush1.bf16.msra.mxu0 0
        %3831 = vmatprep.subr.bf16.mxu0 0
        %3832 = vmatpush1.bf16.msra.mxu0 0
        %3833 = vmatprep.subr.bf16.mxu0 0
        %3834 = vmatpush1.bf16.msra.mxu0 0
        %3835 = vmatprep.subr.bf16.mxu0 0
        %3836 = vmatpush1.bf16.msra.mxu0 0
        %3837 = vmatprep.subr.bf16.mxu0 0
        %3838 = vmatpush1.bf16.msra.mxu0 0
        %3839 = vmatprep.subr.bf16.mxu0 0
        %3840 = vmatpush1.bf16.msra.mxu0 0
        %3841 = vmatprep.subr.bf16.mxu0 0
        %3842 = vmatpush1.bf16.msra.mxu0 0
        %3843 = vmatprep.subr.bf16.mxu0 0
        %3844 = vmatpush1.bf16.msra.mxu0 0
        %3845 = vmatprep.subr.bf16.mxu0 0
        %3846 = vmatpush1.bf16.msra.mxu0 0
        %3847 = vmatprep.subr.bf16.mxu0 0
        %3848 = vmatpush1.bf16.msra.mxu0 0
        %3849 = vmatprep.subr.bf16.mxu0 0
        %3850 = vmatpush1.bf16.msra.mxu0 0
        %3851 = vmatprep.mubr.bf16.mxu0 0
        %3852 = vmatmul.mubr.bf16.gmra.mrb[0].mxu0 %v580
        %v3853 = vpop.f32.mrb[0].mxu0
        %v3854 = vadd.f32 0.0, %v3853
        %v3855 = vpop.f32.mrb[0].mxu0
        %v3856 = vadd.f32 0.0, %v3855
        %v3857 = vpop.f32.mrb[0].mxu0
        %v3858 = vpop.f32.mrb[0].mxu0
        %3859 = vdwg.mxu0
        %v3860 = vadd.f32 %v3809, %v3854
        %v3861 = vadd.f32 %v3810, %v3856
        %3862 = vrot.lane.b32.xlu0 %v3573, 127
        %v3863 = vpop.permute.xlu0 %3862
        %3864 = vrot.lane.b32.xlu0 %v3574, 127
        %v3865 = vpop.permute.xlu0 %3864
        %v3866 = vsel %vm635, %v3863, %v3865
        %v3867 = vsel %vm635, %v3865, %v3863
        %v3868 = vmul.f32 %v3866, %v641
        %v3869 = vmul.f32 %v3867, %v645
        %v3870 = vpack.c.bf16 %v3868, %v3868
        %v3871 = vpack.c.bf16 %v3869, %v3869
        %v3873 = vsel %vm314, %v3870, 0
        %v3876 = vsel %vm314, %v3871, 0
        %3878 = vmatprep.subr.bf16.mxu0 %v3876
        %3879 = vmatpush1.bf16.msra.mxu0 %v3873
        %3880 = vmatprep.subr.bf16.mxu0 0
        %3881 = vmatpush1.bf16.msra.mxu0 0
        %3882 = vmatprep.subr.bf16.mxu0 0
        %3883 = vmatpush1.bf16.msra.mxu0 0
        %3884 = vmatprep.subr.bf16.mxu0 0
        %3885 = vmatpush1.bf16.msra.mxu0 0
        %3886 = vmatprep.subr.bf16.mxu0 0
        %3887 = vmatpush1.bf16.msra.mxu0 0
        %3888 = vmatprep.subr.bf16.mxu0 0
        %3889 = vmatpush1.bf16.msra.mxu0 0
        %3890 = vmatprep.subr.bf16.mxu0 0
        %3891 = vmatpush1.bf16.msra.mxu0 0
        %3892 = vmatprep.subr.bf16.mxu0 0
        %3893 = vmatpush1.bf16.msra.mxu0 0
        %3894 = vmatprep.subr.bf16.mxu0 0
        %3895 = vmatpush1.bf16.msra.mxu0 0
        %3896 = vmatprep.subr.bf16.mxu0 0
        %3897 = vmatpush1.bf16.msra.mxu0 0
        %3898 = vmatprep.subr.bf16.mxu0 0
        %3899 = vmatpush1.bf16.msra.mxu0 0
        %3900 = vmatprep.subr.bf16.mxu0 0
        %3901 = vmatpush1.bf16.msra.mxu0 0
        %3902 = vmatprep.subr.bf16.mxu0 0
        %3903 = vmatpush1.bf16.msra.mxu0 0
        %3904 = vmatprep.subr.bf16.mxu0 0
        %3905 = vmatpush1.bf16.msra.mxu0 0
        %3906 = vmatprep.subr.bf16.mxu0 0
        %3907 = vmatpush1.bf16.msra.mxu0 0
        %3908 = vmatprep.subr.bf16.mxu0 0
        %3909 = vmatpush1.bf16.msra.mxu0 0
        %3910 = vmatprep.mubr.bf16.mxu0 0
        %3911 = vmatmul.mubr.bf16.gmra.mrb[0].mxu0 %v651
        %v3912 = vpop.f32.mrb[0].mxu0
        %v3913 = vadd.f32 0.0, %v3912
        %v3914 = vpop.f32.mrb[0].mxu0
        %v3915 = vadd.f32 0.0, %v3914
        %v3916 = vpop.f32.mrb[0].mxu0
        %v3917 = vpop.f32.mrb[0].mxu0
        %3918 = vdwg.mxu0
        %v3919 = vadd.f32 %v3860, %v3913
        %v3920 = vadd.f32 %v3861, %v3915
        %3921 = vrot.lane.b32.xlu0 %v3573, 113
        %v3922 = vpop.permute.xlu0 %3921
        %3923 = vrot.lane.b32.xlu0 %v3574, 113
        %v3924 = vpop.permute.xlu0 %3923
        %v3925 = vsel %vm706, %v3922, %v3924
        %v3926 = vsel %vm706, %v3924, %v3922
        %v3927 = vmul.f32 %v3925, %v712
        %v3928 = vmul.f32 %v3926, %v716
        %v3929 = vpack.c.bf16 %v3927, %v3927
        %v3930 = vpack.c.bf16 %v3928, %v3928
        %v3932 = vsel %vm314, %v3929, 0
        %v3935 = vsel %vm314, %v3930, 0
        %3937 = vmatprep.subr.bf16.mxu0 %v3935
        %3938 = vmatpush1.bf16.msra.mxu0 %v3932
        %3939 = vmatprep.subr.bf16.mxu0 0
        %3940 = vmatpush1.bf16.msra.mxu0 0
        %3941 = vmatprep.subr.bf16.mxu0 0
        %3942 = vmatpush1.bf16.msra.mxu0 0
        %3943 = vmatprep.subr.bf16.mxu0 0
        %3944 = vmatpush1.bf16.msra.mxu0 0
        %3945 = vmatprep.subr.bf16.mxu0 0
        %3946 = vmatpush1.bf16.msra.mxu0 0
        %3947 = vmatprep.subr.bf16.mxu0 0
        %3948 = vmatpush1.bf16.msra.mxu0 0
        %3949 = vmatprep.subr.bf16.mxu0 0
        %3950 = vmatpush1.bf16.msra.mxu0 0
        %3951 = vmatprep.subr.bf16.mxu0 0
        %3952 = vmatpush1.bf16.msra.mxu0 0
        %3953 = vmatprep.subr.bf16.mxu0 0
        %3954 = vmatpush1.bf16.msra.mxu0 0
        %3955 = vmatprep.subr.bf16.mxu0 0
        %3956 = vmatpush1.bf16.msra.mxu0 0
        %3957 = vmatprep.subr.bf16.mxu0 0
        %3958 = vmatpush1.bf16.msra.mxu0 0
        %3959 = vmatprep.subr.bf16.mxu0 0
        %3960 = vmatpush1.bf16.msra.mxu0 0
        %3961 = vmatprep.subr.bf16.mxu0 0
        %3962 = vmatpush1.bf16.msra.mxu0 0
        %3963 = vmatprep.subr.bf16.mxu0 0
        %3964 = vmatpush1.bf16.msra.mxu0 0
        %3965 = vmatprep.subr.bf16.mxu0 0
        %3966 = vmatpush1.bf16.msra.mxu0 0
        %3967 = vmatprep.subr.bf16.mxu0 0
        %3968 = vmatpush1.bf16.msra.mxu0 0
        %3969 = vmatprep.mubr.bf16.mxu0 0
        %3970 = vmatmul.mubr.bf16.gmra.mrb[0].mxu0 %v722
        %v3971 = vpop.f32.mrb[0].mxu0
        %v3972 = vadd.f32 0.0, %v3971
        %v3973 = vpop.f32.mrb[0].mxu0
        %v3974 = vadd.f32 0.0, %v3973
        %v3975 = vpop.f32.mrb[0].mxu0
        %v3976 = vpop.f32.mrb[0].mxu0
        %3977 = vdwg.mxu0
        %v3978 = vadd.f32 %v3919, %v3972
        %v3979 = vadd.f32 %v3920, %v3974
        %3980 = vrot.lane.b32.xlu0 %v3573, 112
        %v3981 = vpop.permute.xlu0 %3980
        %3982 = vrot.lane.b32.xlu0 %v3574, 112
        %v3983 = vpop.permute.xlu0 %3982
        %v3984 = vsel %vm777, %v3981, %v3983
        %v3985 = vsel %vm777, %v3983, %v3981
        %v3986 = vmul.f32 %v3984, %v783
        %v3987 = vmul.f32 %v3985, %v787
        %v3988 = vpack.c.bf16 %v3986, %v3986
        %v3989 = vpack.c.bf16 %v3987, %v3987
        %v3991 = vsel %vm314, %v3988, 0
        %v3994 = vsel %vm314, %v3989, 0
        %3996 = vmatprep.subr.bf16.mxu0 %v3994
        %3997 = vmatpush1.bf16.msra.mxu0 %v3991
        %3998 = vmatprep.subr.bf16.mxu0 0
        %3999 = vmatpush1.bf16.msra.mxu0 0
        %4000 = vmatprep.subr.bf16.mxu0 0
        %4001 = vmatpush1.bf16.msra.mxu0 0
        %4002 = vmatprep.subr.bf16.mxu0 0
        %4003 = vmatpush1.bf16.msra.mxu0 0
        %4004 = vmatprep.subr.bf16.mxu0 0
        %4005 = vmatpush1.bf16.msra.mxu0 0
        %4006 = vmatprep.subr.bf16.mxu0 0
        %4007 = vmatpush1.bf16.msra.mxu0 0
        %4008 = vmatprep.subr.bf16.mxu0 0
        %4009 = vmatpush1.bf16.msra.mxu0 0
        %4010 = vmatprep.subr.bf16.mxu0 0
        %4011 = vmatpush1.bf16.msra.mxu0 0
        %4012 = vmatprep.subr.bf16.mxu0 0
        %4013 = vmatpush1.bf16.msra.mxu0 0
        %4014 = vmatprep.subr.bf16.mxu0 0
        %4015 = vmatpush1.bf16.msra.mxu0 0
        %4016 = vmatprep.subr.bf16.mxu0 0
        %4017 = vmatpush1.bf16.msra.mxu0 0
        %4018 = vmatprep.subr.bf16.mxu0 0
        %4019 = vmatpush1.bf16.msra.mxu0 0
        %4020 = vmatprep.subr.bf16.mxu0 0
        %4021 = vmatpush1.bf16.msra.mxu0 0
        %4022 = vmatprep.subr.bf16.mxu0 0
        %4023 = vmatpush1.bf16.msra.mxu0 0
        %4024 = vmatprep.subr.bf16.mxu0 0
        %4025 = vmatpush1.bf16.msra.mxu0 0
        %4026 = vmatprep.subr.bf16.mxu0 0
        %4027 = vmatpush1.bf16.msra.mxu0 0
        %4028 = vmatprep.mubr.bf16.mxu0 0
        %4029 = vmatmul.mubr.bf16.gmra.mrb[0].mxu0 %v793
        %v4030 = vpop.f32.mrb[0].mxu0
        %v4031 = vadd.f32 0.0, %v4030
        %v4032 = vpop.f32.mrb[0].mxu0
        %v4033 = vadd.f32 0.0, %v4032
        %v4034 = vpop.f32.mrb[0].mxu0
        %v4035 = vpop.f32.mrb[0].mxu0
        %4036 = vdwg.mxu0
        %v4037 = vadd.f32 %v3978, %v4031
        %v4038 = vadd.f32 %v3979, %v4033
        %4039 = vrot.lane.b32.xlu0 %v3573, 111
        %v4040 = vpop.permute.xlu0 %4039
        %4041 = vrot.lane.b32.xlu0 %v3574, 111
        %v4042 = vpop.permute.xlu0 %4041
        %v4043 = vsel %vm848, %v4040, %v4042
        %v4044 = vsel %vm848, %v4042, %v4040
        %v4045 = vmul.f32 %v4043, %v854
        %v4046 = vmul.f32 %v4044, %v858
        %v4047 = vpack.c.bf16 %v4045, %v4045
        %v4048 = vpack.c.bf16 %v4046, %v4046
        %v4050 = vsel %vm314, %v4047, 0
        %v4053 = vsel %vm314, %v4048, 0
        %4055 = vmatprep.subr.bf16.mxu0 %v4053
        %4056 = vmatpush1.bf16.msra.mxu0 %v4050
        %4057 = vmatprep.subr.bf16.mxu0 0
        %4058 = vmatpush1.bf16.msra.mxu0 0
        %4059 = vmatprep.subr.bf16.mxu0 0
        %4060 = vmatpush1.bf16.msra.mxu0 0
        %4061 = vmatprep.subr.bf16.mxu0 0
        %4062 = vmatpush1.bf16.msra.mxu0 0
        %4063 = vmatprep.subr.bf16.mxu0 0
        %4064 = vmatpush1.bf16.msra.mxu0 0
        %4065 = vmatprep.subr.bf16.mxu0 0
        %4066 = vmatpush1.bf16.msra.mxu0 0
        %4067 = vmatprep.subr.bf16.mxu0 0
        %4068 = vmatpush1.bf16.msra.mxu0 0
        %4069 = vmatprep.subr.bf16.mxu0 0
        %4070 = vmatpush1.bf16.msra.mxu0 0
        %4071 = vmatprep.subr.bf16.mxu0 0
        %4072 = vmatpush1.bf16.msra.mxu0 0
        %4073 = vmatprep.subr.bf16.mxu0 0
        %4074 = vmatpush1.bf16.msra.mxu0 0
        %4075 = vmatprep.subr.bf16.mxu0 0
        %4076 = vmatpush1.bf16.msra.mxu0 0
        %4077 = vmatprep.subr.bf16.mxu0 0
        %4078 = vmatpush1.bf16.msra.mxu0 0
        %4079 = vmatprep.subr.bf16.mxu0 0
        %4080 = vmatpush1.bf16.msra.mxu0 0
        %4081 = vmatprep.subr.bf16.mxu0 0
        %4082 = vmatpush1.bf16.msra.mxu0 0
        %4083 = vmatprep.subr.bf16.mxu0 0
        %4084 = vmatpush1.bf16.msra.mxu0 0
        %4085 = vmatprep.subr.bf16.mxu0 0
        %4086 = vmatpush1.bf16.msra.mxu0 0
        %4087 = vmatprep.mubr.bf16.mxu0 0
        %4088 = vmatmul.mubr.bf16.gmra.mrb[0].mxu0 %v864
        %v4089 = vpop.f32.mrb[0].mxu0
        %v4090 = vadd.f32 0.0, %v4089
        %v4091 = vpop.f32.mrb[0].mxu0
        %v4092 = vadd.f32 0.0, %v4091
        %v4093 = vpop.f32.mrb[0].mxu0
        %v4094 = vpop.f32.mrb[0].mxu0
        %4095 = vdwg.mxu0
        %v4096 = vadd.f32 %v4037, %v4090
        %v4097 = vadd.f32 %v4038, %v4092
        %v4098 = vmax.f32 %v4096, 0.0
        %v4099 = vmax.f32 %v4097, 0.0
        %4100 = vrot.lane.b32.xlu0 %v4098, 17
        %v4101 = vpop.permute.xlu0 %4100
        %4102 = vrot.lane.b32.xlu0 %v4099, 17
        %v4103 = vpop.permute.xlu0 %4102
        %v4104 = vsel %vm295, %v4101, %v4103
        %v4105 = vsel %vm295, %v4103, %v4101
        %v4106 = vmul.f32 %v4105, %v301
        %v4107 = vmul.f32 %v4104, %v305
        %v4108 = vpack.c.bf16 %v4106, %v4106
        %v4109 = vpack.c.bf16 %v4107, %v4107
        %v4111 = vsel %vm314, %v4108, 0
        %v4114 = vsel %vm314, %v4109, 0
        %4116 = vmatprep.subr.bf16.mxu0 %v4114
        %4117 = vmatpush1.bf16.msra.mxu0 %v4111
        %4118 = vmatprep.subr.bf16.mxu0 0
        %4119 = vmatpush1.bf16.msra.mxu0 0
        %4120 = vmatprep.subr.bf16.mxu0 0
        %4121 = vmatpush1.bf16.msra.mxu0 0
        %4122 = vmatprep.subr.bf16.mxu0 0
        %4123 = vmatpush1.bf16.msra.mxu0 0
        %4124 = vmatprep.subr.bf16.mxu0 0
        %4125 = vmatpush1.bf16.msra.mxu0 0
        %4126 = vmatprep.subr.bf16.mxu0 0
        %4127 = vmatpush1.bf16.msra.mxu0 0
        %4128 = vmatprep.subr.bf16.mxu0 0
        %4129 = vmatpush1.bf16.msra.mxu0 0
        %4130 = vmatprep.subr.bf16.mxu0 0
        %4131 = vmatpush1.bf16.msra.mxu0 0
        %4132 = vmatprep.subr.bf16.mxu0 0
        %4133 = vmatpush1.bf16.msra.mxu0 0
        %4134 = vmatprep.subr.bf16.mxu0 0
        %4135 = vmatpush1.bf16.msra.mxu0 0
        %4136 = vmatprep.subr.bf16.mxu0 0
        %4137 = vmatpush1.bf16.msra.mxu0 0
        %4138 = vmatprep.subr.bf16.mxu0 0
        %4139 = vmatpush1.bf16.msra.mxu0 0
        %4140 = vmatprep.subr.bf16.mxu0 0
        %4141 = vmatpush1.bf16.msra.mxu0 0
        %4142 = vmatprep.subr.bf16.mxu0 0
        %4143 = vmatpush1.bf16.msra.mxu0 0
        %4144 = vmatprep.subr.bf16.mxu0 0
        %4145 = vmatpush1.bf16.msra.mxu0 0
        %4146 = vmatprep.subr.bf16.mxu0 0
        %4147 = vmatpush1.bf16.msra.mxu0 0
        %4148 = vmatprep.mubr.bf16.mxu0 0
        %4149 = vmatmul.mubr.bf16.gmra.mrb[0].mxu0 %v928
        %v4150 = vpop.f32.mrb[0].mxu0
        %v4151 = vadd.f32 0.0, %v4150
        %v4152 = vpop.f32.mrb[0].mxu0
        %v4153 = vadd.f32 0.0, %v4152
        %v4154 = vpop.f32.mrb[0].mxu0
        %v4155 = vpop.f32.mrb[0].mxu0
        %4156 = vdwg.mxu0
        %v4157 = vadd.f32 %v283, %v4151
        %v4158 = vadd.f32 %v283, %v4153
        %4159 = vrot.lane.b32.xlu0 %v4098, 16
        %v4160 = vpop.permute.xlu0 %4159
        %4161 = vrot.lane.b32.xlu0 %v4099, 16
        %v4162 = vpop.permute.xlu0 %4161
        %v4163 = vsel %vm368, %v4160, %v4162
        %v4164 = vsel %vm368, %v4162, %v4160
        %v4165 = vmul.f32 %v4164, %v374
        %v4166 = vmul.f32 %v4163, %v378
        %v4167 = vpack.c.bf16 %v4165, %v4165
        %v4168 = vpack.c.bf16 %v4166, %v4166
        %v4170 = vsel %vm314, %v4167, 0
        %v4173 = vsel %vm314, %v4168, 0
        %4175 = vmatprep.subr.bf16.mxu0 %v4173
        %4176 = vmatpush1.bf16.msra.mxu0 %v4170
        %4177 = vmatprep.subr.bf16.mxu0 0
        %4178 = vmatpush1.bf16.msra.mxu0 0
        %4179 = vmatprep.subr.bf16.mxu0 0
        %4180 = vmatpush1.bf16.msra.mxu0 0
        %4181 = vmatprep.subr.bf16.mxu0 0
        %4182 = vmatpush1.bf16.msra.mxu0 0
        %4183 = vmatprep.subr.bf16.mxu0 0
        %4184 = vmatpush1.bf16.msra.mxu0 0
        %4185 = vmatprep.subr.bf16.mxu0 0
        %4186 = vmatpush1.bf16.msra.mxu0 0
        %4187 = vmatprep.subr.bf16.mxu0 0
        %4188 = vmatpush1.bf16.msra.mxu0 0
        %4189 = vmatprep.subr.bf16.mxu0 0
        %4190 = vmatpush1.bf16.msra.mxu0 0
        %4191 = vmatprep.subr.bf16.mxu0 0
        %4192 = vmatpush1.bf16.msra.mxu0 0
        %4193 = vmatprep.subr.bf16.mxu0 0
        %4194 = vmatpush1.bf16.msra.mxu0 0
        %4195 = vmatprep.subr.bf16.mxu0 0
        %4196 = vmatpush1.bf16.msra.mxu0 0
        %4197 = vmatprep.subr.bf16.mxu0 0
        %4198 = vmatpush1.bf16.msra.mxu0 0
        %4199 = vmatprep.subr.bf16.mxu0 0
        %4200 = vmatpush1.bf16.msra.mxu0 0
        %4201 = vmatprep.subr.bf16.mxu0 0
        %4202 = vmatpush1.bf16.msra.mxu0 0
        %4203 = vmatprep.subr.bf16.mxu0 0
        %4204 = vmatpush1.bf16.msra.mxu0 0
        %4205 = vmatprep.subr.bf16.mxu0 0
        %4206 = vmatpush1.bf16.msra.mxu0 0
        %4207 = vmatprep.mubr.bf16.mxu0 0
        %4208 = vmatmul.mubr.bf16.gmra.mrb[0].mxu0 %v990
        %v4209 = vpop.f32.mrb[0].mxu0
        %v4210 = vadd.f32 0.0, %v4209
        %v4211 = vpop.f32.mrb[0].mxu0
        %v4212 = vadd.f32 0.0, %v4211
        %v4213 = vpop.f32.mrb[0].mxu0
        %v4214 = vpop.f32.mrb[0].mxu0
        %4215 = vdwg.mxu0
        %v4216 = vadd.f32 %v4157, %v4210
        %v4217 = vadd.f32 %v4158, %v4212
        %4218 = vrot.lane.b32.xlu0 %v4098, 15
        %v4219 = vpop.permute.xlu0 %4218
        %4220 = vrot.lane.b32.xlu0 %v4099, 15
        %v4221 = vpop.permute.xlu0 %4220
        %v4222 = vsel %vm439, %v4219, %v4221
        %v4223 = vsel %vm439, %v4221, %v4219
        %v4224 = vmul.f32 %v4223, %v445
        %v4225 = vmul.f32 %v4222, %v449
        %v4226 = vpack.c.bf16 %v4224, %v4224
        %v4227 = vpack.c.bf16 %v4225, %v4225
        %v4229 = vsel %vm314, %v4226, 0
        %v4232 = vsel %vm314, %v4227, 0
        %4234 = vmatprep.subr.bf16.mxu0 %v4232
        %4235 = vmatpush1.bf16.msra.mxu0 %v4229
        %4236 = vmatprep.subr.bf16.mxu0 0
        %4237 = vmatpush1.bf16.msra.mxu0 0
        %4238 = vmatprep.subr.bf16.mxu0 0
        %4239 = vmatpush1.bf16.msra.mxu0 0
        %4240 = vmatprep.subr.bf16.mxu0 0
        %4241 = vmatpush1.bf16.msra.mxu0 0
        %4242 = vmatprep.subr.bf16.mxu0 0
        %4243 = vmatpush1.bf16.msra.mxu0 0
        %4244 = vmatprep.subr.bf16.mxu0 0
        %4245 = vmatpush1.bf16.msra.mxu0 0
        %4246 = vmatprep.subr.bf16.mxu0 0
        %4247 = vmatpush1.bf16.msra.mxu0 0
        %4248 = vmatprep.subr.bf16.mxu0 0
        %4249 = vmatpush1.bf16.msra.mxu0 0
        %4250 = vmatprep.subr.bf16.mxu0 0
        %4251 = vmatpush1.bf16.msra.mxu0 0
        %4252 = vmatprep.subr.bf16.mxu0 0
        %4253 = vmatpush1.bf16.msra.mxu0 0
        %4254 = vmatprep.subr.bf16.mxu0 0
        %4255 = vmatpush1.bf16.msra.mxu0 0
        %4256 = vmatprep.subr.bf16.mxu0 0
        %4257 = vmatpush1.bf16.msra.mxu0 0
        %4258 = vmatprep.subr.bf16.mxu0 0
        %4259 = vmatpush1.bf16.msra.mxu0 0
        %4260 = vmatprep.subr.bf16.mxu0 0
        %4261 = vmatpush1.bf16.msra.mxu0 0
        %4262 = vmatprep.subr.bf16.mxu0 0
        %4263 = vmatpush1.bf16.msra.mxu0 0
        %4264 = vmatprep.subr.bf16.mxu0 0
        %4265 = vmatpush1.bf16.msra.mxu0 0
        %4266 = vmatprep.mubr.bf16.mxu0 0
        %4267 = vmatmul.mubr.bf16.gmra.mrb[0].mxu0 %v1052
        %v4268 = vpop.f32.mrb[0].mxu0
        %v4269 = vadd.f32 0.0, %v4268
        %v4270 = vpop.f32.mrb[0].mxu0
        %v4271 = vadd.f32 0.0, %v4270
        %v4272 = vpop.f32.mrb[0].mxu0
        %v4273 = vpop.f32.mrb[0].mxu0
        %4274 = vdwg.mxu0
        %v4275 = vadd.f32 %v4216, %v4269
        %v4276 = vadd.f32 %v4217, %v4271
        %4277 = vrot.lane.b32.xlu0 %v4098, 1
        %v4278 = vpop.permute.xlu0 %4277
        %4279 = vrot.lane.b32.xlu0 %v4099, 1
        %v4280 = vpop.permute.xlu0 %4279
        %v4281 = vsel %vm510, %v4278, %v4280
        %v4282 = vsel %vm510, %v4280, %v4278
        %v4283 = vmul.f32 %v4282, %v516
        %v4284 = vmul.f32 %v4281, %v520
        %v4285 = vpack.c.bf16 %v4283, %v4283
        %v4286 = vpack.c.bf16 %v4284, %v4284
        %v4288 = vsel %vm314, %v4285, 0
        %v4291 = vsel %vm314, %v4286, 0
        %4293 = vmatprep.subr.bf16.mxu0 %v4291
        %4294 = vmatpush1.bf16.msra.mxu0 %v4288
        %4295 = vmatprep.subr.bf16.mxu0 0
        %4296 = vmatpush1.bf16.msra.mxu0 0
        %4297 = vmatprep.subr.bf16.mxu0 0
        %4298 = vmatpush1.bf16.msra.mxu0 0
        %4299 = vmatprep.subr.bf16.mxu0 0
        %4300 = vmatpush1.bf16.msra.mxu0 0
        %4301 = vmatprep.subr.bf16.mxu0 0
        %4302 = vmatpush1.bf16.msra.mxu0 0
        %4303 = vmatprep.subr.bf16.mxu0 0
        %4304 = vmatpush1.bf16.msra.mxu0 0
        %4305 = vmatprep.subr.bf16.mxu0 0
        %4306 = vmatpush1.bf16.msra.mxu0 0
        %4307 = vmatprep.subr.bf16.mxu0 0
        %4308 = vmatpush1.bf16.msra.mxu0 0
        %4309 = vmatprep.subr.bf16.mxu0 0
        %4310 = vmatpush1.bf16.msra.mxu0 0
        %4311 = vmatprep.subr.bf16.mxu0 0
        %4312 = vmatpush1.bf16.msra.mxu0 0
        %4313 = vmatprep.subr.bf16.mxu0 0
        %4314 = vmatpush1.bf16.msra.mxu0 0
        %4315 = vmatprep.subr.bf16.mxu0 0
        %4316 = vmatpush1.bf16.msra.mxu0 0
        %4317 = vmatprep.subr.bf16.mxu0 0
        %4318 = vmatpush1.bf16.msra.mxu0 0
        %4319 = vmatprep.subr.bf16.mxu0 0
        %4320 = vmatpush1.bf16.msra.mxu0 0
        %4321 = vmatprep.subr.bf16.mxu0 0
        %4322 = vmatpush1.bf16.msra.mxu0 0
        %4323 = vmatprep.subr.bf16.mxu0 0
        %4324 = vmatpush1.bf16.msra.mxu0 0
        %4325 = vmatprep.mubr.bf16.mxu0 0
        %4326 = vmatmul.mubr.bf16.gmra.mrb[0].mxu0 %v1114
        %v4327 = vpop.f32.mrb[0].mxu0
        %v4328 = vadd.f32 0.0, %v4327
        %v4329 = vpop.f32.mrb[0].mxu0
        %v4330 = vadd.f32 0.0, %v4329
        %v4331 = vpop.f32.mrb[0].mxu0
        %v4332 = vpop.f32.mrb[0].mxu0
        %4333 = vdwg.mxu0
        %v4334 = vadd.f32 %v4275, %v4328
        %v4335 = vadd.f32 %v4276, %v4330
        %v4336 = vpack.c.bf16 %v4098, %v4098
        %v4337 = vpack.c.bf16 %v4099, %v4099
        %v4339 = vsel %vm314, %v4336, 0
        %v4342 = vsel %vm314, %v4337, 0
        %4344 = vmatprep.subr.bf16.mxu0 %v4342
        %4345 = vmatpush1.bf16.msra.mxu0 %v4339
        %4346 = vmatprep.subr.bf16.mxu0 0
        %4347 = vmatpush1.bf16.msra.mxu0 0
        %4348 = vmatprep.subr.bf16.mxu0 0
        %4349 = vmatpush1.bf16.msra.mxu0 0
        %4350 = vmatprep.subr.bf16.mxu0 0
        %4351 = vmatpush1.bf16.msra.mxu0 0
        %4352 = vmatprep.subr.bf16.mxu0 0
        %4353 = vmatpush1.bf16.msra.mxu0 0
        %4354 = vmatprep.subr.bf16.mxu0 0
        %4355 = vmatpush1.bf16.msra.mxu0 0
        %4356 = vmatprep.subr.bf16.mxu0 0
        %4357 = vmatpush1.bf16.msra.mxu0 0
        %4358 = vmatprep.subr.bf16.mxu0 0
        %4359 = vmatpush1.bf16.msra.mxu0 0
        %4360 = vmatprep.subr.bf16.mxu0 0
        %4361 = vmatpush1.bf16.msra.mxu0 0
        %4362 = vmatprep.subr.bf16.mxu0 0
        %4363 = vmatpush1.bf16.msra.mxu0 0
        %4364 = vmatprep.subr.bf16.mxu0 0
        %4365 = vmatpush1.bf16.msra.mxu0 0
        %4366 = vmatprep.subr.bf16.mxu0 0
        %4367 = vmatpush1.bf16.msra.mxu0 0
        %4368 = vmatprep.subr.bf16.mxu0 0
        %4369 = vmatpush1.bf16.msra.mxu0 0
        %4370 = vmatprep.subr.bf16.mxu0 0
        %4371 = vmatpush1.bf16.msra.mxu0 0
        %4372 = vmatprep.subr.bf16.mxu0 0
        %4373 = vmatpush1.bf16.msra.mxu0 0
        %4374 = vmatprep.subr.bf16.mxu0 0
        %4375 = vmatpush1.bf16.msra.mxu0 0
        %4376 = vmatprep.mubr.bf16.mxu0 0
        %4377 = vmatmul.mubr.bf16.gmra.mrb[0].mxu0 %v1168
        %v4378 = vpop.f32.mrb[0].mxu0
        %v4379 = vadd.f32 0.0, %v4378
        %v4380 = vpop.f32.mrb[0].mxu0
        %v4381 = vadd.f32 0.0, %v4380
        %v4382 = vpop.f32.mrb[0].mxu0
        %v4383 = vpop.f32.mrb[0].mxu0
        %4384 = vdwg.mxu0
        %v4385 = vadd.f32 %v4334, %v4379
        %v4386 = vadd.f32 %v4335, %v4381
        %4387 = vrot.lane.b32.xlu0 %v4098, 127
        %v4388 = vpop.permute.xlu0 %4387
        %4389 = vrot.lane.b32.xlu0 %v4099, 127
        %v4390 = vpop.permute.xlu0 %4389
        %v4391 = vsel %vm635, %v4388, %v4390
        %v4392 = vsel %vm635, %v4390, %v4388
        %v4393 = vmul.f32 %v4391, %v641
        %v4394 = vmul.f32 %v4392, %v645
        %v4395 = vpack.c.bf16 %v4393, %v4393
        %v4396 = vpack.c.bf16 %v4394, %v4394
        %v4398 = vsel %vm314, %v4395, 0
        %v4401 = vsel %vm314, %v4396, 0
        %4403 = vmatprep.subr.bf16.mxu0 %v4401
        %4404 = vmatpush1.bf16.msra.mxu0 %v4398
        %4405 = vmatprep.subr.bf16.mxu0 0
        %4406 = vmatpush1.bf16.msra.mxu0 0
        %4407 = vmatprep.subr.bf16.mxu0 0
        %4408 = vmatpush1.bf16.msra.mxu0 0
        %4409 = vmatprep.subr.bf16.mxu0 0
        %4410 = vmatpush1.bf16.msra.mxu0 0
        %4411 = vmatprep.subr.bf16.mxu0 0
        %4412 = vmatpush1.bf16.msra.mxu0 0
        %4413 = vmatprep.subr.bf16.mxu0 0
        %4414 = vmatpush1.bf16.msra.mxu0 0
        %4415 = vmatprep.subr.bf16.mxu0 0
        %4416 = vmatpush1.bf16.msra.mxu0 0
        %4417 = vmatprep.subr.bf16.mxu0 0
        %4418 = vmatpush1.bf16.msra.mxu0 0
        %4419 = vmatprep.subr.bf16.mxu0 0
        %4420 = vmatpush1.bf16.msra.mxu0 0
        %4421 = vmatprep.subr.bf16.mxu0 0
        %4422 = vmatpush1.bf16.msra.mxu0 0
        %4423 = vmatprep.subr.bf16.mxu0 0
        %4424 = vmatpush1.bf16.msra.mxu0 0
        %4425 = vmatprep.subr.bf16.mxu0 0
        %4426 = vmatpush1.bf16.msra.mxu0 0
        %4427 = vmatprep.subr.bf16.mxu0 0
        %4428 = vmatpush1.bf16.msra.mxu0 0
        %4429 = vmatprep.subr.bf16.mxu0 0
        %4430 = vmatpush1.bf16.msra.mxu0 0
        %4431 = vmatprep.subr.bf16.mxu0 0
        %4432 = vmatpush1.bf16.msra.mxu0 0
        %4433 = vmatprep.subr.bf16.mxu0 0
        %4434 = vmatpush1.bf16.msra.mxu0 0
        %4435 = vmatprep.mubr.bf16.mxu0 0
        %4436 = vmatmul.mubr.bf16.gmra.mrb[0].mxu0 %v1230
        %v4437 = vpop.f32.mrb[0].mxu0
        %v4438 = vadd.f32 0.0, %v4437
        %v4439 = vpop.f32.mrb[0].mxu0
        %v4440 = vadd.f32 0.0, %v4439
        %v4441 = vpop.f32.mrb[0].mxu0
        %v4442 = vpop.f32.mrb[0].mxu0
        %4443 = vdwg.mxu0
        %v4444 = vadd.f32 %v4385, %v4438
        %v4445 = vadd.f32 %v4386, %v4440
        %4446 = vrot.lane.b32.xlu0 %v4098, 113
        %v4447 = vpop.permute.xlu0 %4446
        %4448 = vrot.lane.b32.xlu0 %v4099, 113
        %v4449 = vpop.permute.xlu0 %4448
        %v4450 = vsel %vm706, %v4447, %v4449
        %v4451 = vsel %vm706, %v4449, %v4447
        %v4452 = vmul.f32 %v4450, %v712
        %v4453 = vmul.f32 %v4451, %v716
        %v4454 = vpack.c.bf16 %v4452, %v4452
        %v4455 = vpack.c.bf16 %v4453, %v4453
        %v4457 = vsel %vm314, %v4454, 0
        %v4460 = vsel %vm314, %v4455, 0
        %4462 = vmatprep.subr.bf16.mxu0 %v4460
        %4463 = vmatpush1.bf16.msra.mxu0 %v4457
        %4464 = vmatprep.subr.bf16.mxu0 0
        %4465 = vmatpush1.bf16.msra.mxu0 0
        %4466 = vmatprep.subr.bf16.mxu0 0
        %4467 = vmatpush1.bf16.msra.mxu0 0
        %4468 = vmatprep.subr.bf16.mxu0 0
        %4469 = vmatpush1.bf16.msra.mxu0 0
        %4470 = vmatprep.subr.bf16.mxu0 0
        %4471 = vmatpush1.bf16.msra.mxu0 0
        %4472 = vmatprep.subr.bf16.mxu0 0
        %4473 = vmatpush1.bf16.msra.mxu0 0
        %4474 = vmatprep.subr.bf16.mxu0 0
        %4475 = vmatpush1.bf16.msra.mxu0 0
        %4476 = vmatprep.subr.bf16.mxu0 0
        %4477 = vmatpush1.bf16.msra.mxu0 0
        %4478 = vmatprep.subr.bf16.mxu0 0
        %4479 = vmatpush1.bf16.msra.mxu0 0
        %4480 = vmatprep.subr.bf16.mxu0 0
        %4481 = vmatpush1.bf16.msra.mxu0 0
        %4482 = vmatprep.subr.bf16.mxu0 0
        %4483 = vmatpush1.bf16.msra.mxu0 0
        %4484 = vmatprep.subr.bf16.mxu0 0
        %4485 = vmatpush1.bf16.msra.mxu0 0
        %4486 = vmatprep.subr.bf16.mxu0 0
        %4487 = vmatpush1.bf16.msra.mxu0 0
        %4488 = vmatprep.subr.bf16.mxu0 0
        %4489 = vmatpush1.bf16.msra.mxu0 0
        %4490 = vmatprep.subr.bf16.mxu0 0
        %4491 = vmatpush1.bf16.msra.mxu0 0
        %4492 = vmatprep.subr.bf16.mxu0 0
        %4493 = vmatpush1.bf16.msra.mxu0 0
        %4494 = vmatprep.mubr.bf16.mxu0 0
        %4495 = vmatmul.mubr.bf16.gmra.mrb[0].mxu0 %v1292
        %v4496 = vpop.f32.mrb[0].mxu0
        %v4497 = vadd.f32 0.0, %v4496
        %v4498 = vpop.f32.mrb[0].mxu0
        %v4499 = vadd.f32 0.0, %v4498
        %v4500 = vpop.f32.mrb[0].mxu0
        %v4501 = vpop.f32.mrb[0].mxu0
        %4502 = vdwg.mxu0
        %v4503 = vadd.f32 %v4444, %v4497
        %v4504 = vadd.f32 %v4445, %v4499
        %4505 = vrot.lane.b32.xlu0 %v4098, 112
        %v4506 = vpop.permute.xlu0 %4505
        %4507 = vrot.lane.b32.xlu0 %v4099, 112
        %v4508 = vpop.permute.xlu0 %4507
        %v4509 = vsel %vm777, %v4506, %v4508
        %v4510 = vsel %vm777, %v4508, %v4506
        %v4511 = vmul.f32 %v4509, %v783
        %v4512 = vmul.f32 %v4510, %v787
        %v4513 = vpack.c.bf16 %v4511, %v4511
        %v4514 = vpack.c.bf16 %v4512, %v4512
        %v4516 = vsel %vm314, %v4513, 0
        %v4519 = vsel %vm314, %v4514, 0
        %4521 = vmatprep.subr.bf16.mxu0 %v4519
        %4522 = vmatpush1.bf16.msra.mxu0 %v4516
        %4523 = vmatprep.subr.bf16.mxu0 0
        %4524 = vmatpush1.bf16.msra.mxu0 0
        %4525 = vmatprep.subr.bf16.mxu0 0
        %4526 = vmatpush1.bf16.msra.mxu0 0
        %4527 = vmatprep.subr.bf16.mxu0 0
        %4528 = vmatpush1.bf16.msra.mxu0 0
        %4529 = vmatprep.subr.bf16.mxu0 0
        %4530 = vmatpush1.bf16.msra.mxu0 0
        %4531 = vmatprep.subr.bf16.mxu0 0
        %4532 = vmatpush1.bf16.msra.mxu0 0
        %4533 = vmatprep.subr.bf16.mxu0 0
        %4534 = vmatpush1.bf16.msra.mxu0 0
        %4535 = vmatprep.subr.bf16.mxu0 0
        %4536 = vmatpush1.bf16.msra.mxu0 0
        %4537 = vmatprep.subr.bf16.mxu0 0
        %4538 = vmatpush1.bf16.msra.mxu0 0
        %4539 = vmatprep.subr.bf16.mxu0 0
        %4540 = vmatpush1.bf16.msra.mxu0 0
        %4541 = vmatprep.subr.bf16.mxu0 0
        %4542 = vmatpush1.bf16.msra.mxu0 0
        %4543 = vmatprep.subr.bf16.mxu0 0
        %4544 = vmatpush1.bf16.msra.mxu0 0
        %4545 = vmatprep.subr.bf16.mxu0 0
        %4546 = vmatpush1.bf16.msra.mxu0 0
        %4547 = vmatprep.subr.bf16.mxu0 0
        %4548 = vmatpush1.bf16.msra.mxu0 0
        %4549 = vmatprep.subr.bf16.mxu0 0
        %4550 = vmatpush1.bf16.msra.mxu0 0
        %4551 = vmatprep.subr.bf16.mxu0 0
        %4552 = vmatpush1.bf16.msra.mxu0 0
        %4553 = vmatprep.mubr.bf16.mxu0 0
        %4554 = vmatmul.mubr.bf16.gmra.mrb[0].mxu0 %v1354
        %v4555 = vpop.f32.mrb[0].mxu0
        %v4556 = vadd.f32 0.0, %v4555
        %v4557 = vpop.f32.mrb[0].mxu0
        %v4558 = vadd.f32 0.0, %v4557
        %v4559 = vpop.f32.mrb[0].mxu0
        %v4560 = vpop.f32.mrb[0].mxu0
        %4561 = vdwg.mxu0
        %v4562 = vadd.f32 %v4503, %v4556
        %v4563 = vadd.f32 %v4504, %v4558
        %4564 = vrot.lane.b32.xlu0 %v4098, 111
        %v4565 = vpop.permute.xlu0 %4564
        %4566 = vrot.lane.b32.xlu0 %v4099, 111
        %v4567 = vpop.permute.xlu0 %4566
        %v4568 = vsel %vm848, %v4565, %v4567
        %v4569 = vsel %vm848, %v4567, %v4565
        %v4570 = vmul.f32 %v4568, %v854
        %v4571 = vmul.f32 %v4569, %v858
        %v4572 = vpack.c.bf16 %v4570, %v4570
        %v4573 = vpack.c.bf16 %v4571, %v4571
        %v4575 = vsel %vm314, %v4572, 0
        %v4578 = vsel %vm314, %v4573, 0
        %4580 = vmatprep.subr.bf16.mxu0 %v4578
        %4581 = vmatpush1.bf16.msra.mxu0 %v4575
        %4582 = vmatprep.subr.bf16.mxu0 0
        %4583 = vmatpush1.bf16.msra.mxu0 0
        %4584 = vmatprep.subr.bf16.mxu0 0
        %4585 = vmatpush1.bf16.msra.mxu0 0
        %4586 = vmatprep.subr.bf16.mxu0 0
        %4587 = vmatpush1.bf16.msra.mxu0 0
        %4588 = vmatprep.subr.bf16.mxu0 0
        %4589 = vmatpush1.bf16.msra.mxu0 0
        %4590 = vmatprep.subr.bf16.mxu0 0
        %4591 = vmatpush1.bf16.msra.mxu0 0
        %4592 = vmatprep.subr.bf16.mxu0 0
        %4593 = vmatpush1.bf16.msra.mxu0 0
        %4594 = vmatprep.subr.bf16.mxu0 0
        %4595 = vmatpush1.bf16.msra.mxu0 0
        %4596 = vmatprep.subr.bf16.mxu0 0
        %4597 = vmatpush1.bf16.msra.mxu0 0
        %4598 = vmatprep.subr.bf16.mxu0 0
        %4599 = vmatpush1.bf16.msra.mxu0 0
        %4600 = vmatprep.subr.bf16.mxu0 0
        %4601 = vmatpush1.bf16.msra.mxu0 0
        %4602 = vmatprep.subr.bf16.mxu0 0
        %4603 = vmatpush1.bf16.msra.mxu0 0
        %4604 = vmatprep.subr.bf16.mxu0 0
        %4605 = vmatpush1.bf16.msra.mxu0 0
        %4606 = vmatprep.subr.bf16.mxu0 0
        %4607 = vmatpush1.bf16.msra.mxu0 0
        %4608 = vmatprep.subr.bf16.mxu0 0
        %4609 = vmatpush1.bf16.msra.mxu0 0
        %4610 = vmatprep.subr.bf16.mxu0 0
        %4611 = vmatpush1.bf16.msra.mxu0 0
        %4612 = vmatprep.mubr.bf16.mxu0 0
        %4613 = vmatmul.mubr.bf16.gmra.mrb[0].mxu0 %v1416
        %v4614 = vpop.f32.mrb[0].mxu0
        %v4615 = vadd.f32 0.0, %v4614
        %v4616 = vpop.f32.mrb[0].mxu0
        %v4617 = vadd.f32 0.0, %v4616
        %v4618 = vpop.f32.mrb[0].mxu0
        %v4619 = vpop.f32.mrb[0].mxu0
        %4620 = vdwg.mxu0
        %v4621 = vadd.f32 %v4562, %v4615
        %v4622 = vadd.f32 %v4563, %v4617
        %v4623 = vadd.f32 %v3571, %v4621
        %v4624 = vadd.f32 %v3572, %v4622
        %4625 = vst [vmem:[%s244] sm:$0xff] %v4623
        %4626 = vst [vmem:[%s244 + $0x8] sm:$0xff] %v4624
        %s4627 = sand.u32 %s159, 1
        %s4628 = scalar_lea.sflag [#allocation3], %s4627
        %s4629 = sand.u32 %s159, 1
        %s4630 = smul.addr %s4629, 16
        %s4631 = scalar_lea.vmem [#allocation2], %s4630
        // Predicated region
        $region45: #{tpu_custom_call.1} parent=43 // pred_check
          %p4632 = pneg %p169
        $region46: #{tpu_custom_call.1} parent=43 // pred_check_branch
          %4634 = sbr.rel (%p4632) target = $region48
        $region47: #{tpu_custom_call.1} parent=43 // pred_region
          %s4636 = ssub.s32 256, 256
          %4637 = vsyncadd %s4628, %s4636
          %s4638 = smul.addr %s20, 2
          %s4639 = smul.addr %s4638, 128
          %s4640 = scalar_lea.hbm %s6, %s4639
          %s4642 = sshll.u32 %s4631, 4
          %s4643 = int_to_ptr.vmem [resolvable:$true] %s4642
          %4645 = dma.vmem_to_hbm [thread:$0]  %s4643, 256, %s4640, %s4628
        $region48: #{tpu_custom_call.1} parent=43 // pred_fallthru
          _
      $region44: #{tpu_custom_call.1} parent=5 // pred_fallthru
        _
      %p4646 = scmp.le.s32.totalorder 2, %s15
      // Predicated region
      $region49: #{tpu_custom_call.1} parent=5 // pred_check
        %p4647 = pneg %p4646
      $region50: #{tpu_custom_call.1} parent=5 // pred_check_branch
        %4649 = sbr.rel (%p4647) target = $region52
      $region51: #{tpu_custom_call.1} parent=5 // pred_region
        %s4650 = ssub.s32 %s15, 2
        // Predicated region
        $region53: #{tpu_custom_call.1} parent=51 // pred_check
          %p4651 = pneg %p175
        $region54: #{tpu_custom_call.1} parent=51 // pred_check_branch
          %4653 = sbr.rel (%p4651) target = $region56
        $region55: #{tpu_custom_call.1} parent=51 // pred_region
          %s4654 = sand.u32 %s160, 1
          %s4655 = scalar_lea.sflag [#allocation3], %s4654
          %s4656 = sand.u32 %s160, 1
          %s4657 = smul.addr %s4656, 16
          %s4658 = scalar_lea.vmem [#allocation2], %s4657
          %4659 = dma.done %s4655, 256
        $region56: #{tpu_custom_call.1} parent=51 // pred_fallthru
          _
      $region52: #{tpu_custom_call.1} parent=5 // pred_fallthru
        _
    $region6: #{tpu_custom_call.1} parent=1 // loop_footer
      %s19 = sadd.s32 1, %s15
    $region7: #{tpu_custom_call.1} parent=1 // loop_footer_branch
      %14 = sbr.rel target = $region3
    $region8: #{tpu_custom_call.1} parent=1 // loop_exit
      _
    %4660 = vsyncpa [#allocation3], 1
    %s4661 = scalar_lea.sflag [#allocation3], 1
    %4662 = vsyncpa %s4661, 1

</llo_original>
